<compile_context>
chip_gen: v6e
topology: v6e:2x2x1
jax: 0.10.0
libtpu: 0.0.40
codegen_flags: <defaults>
</compile_context>

<pallas_src>
import functools

import numpy as np
import jax
import jax.numpy as jnp
from jax import lax
from jax.experimental import pallas as pl
from jax.experimental.pallas import tpu as pltpu


def _vmem_capacity_bytes():
    try:
        return int(pltpu.get_tpu_info().vmem_capacity_bytes)
    except Exception:
        return 128 << 20          # v5e / v6e default


def _choose_tile_t(T, per_token_bytes, budget_bytes):
    """Largest token tile whose estimated VMEM footprint fits the budget."""
    cap = max(8, budget_bytes // max(per_token_bytes, 1))
    if T <= cap:
        return T                                    # single full-extent block
    t = (cap // 8) * 8
    while t >= 8:                                   # multiple-of-8 divisor of T
        if T % t == 0:
            return t
        t -= 8
    for t in range(min(cap, T - 1), 0, -1):         # any divisor (rare fallback)
        if T % t == 0:
            return t
    return 8


def _adaptor_loss_kl_kernel(*refs, has_mask, confidence_weighting):
    if has_mask:
        f_ref, lay_ref, mask_ref, w_ref, out_ref = refs
    else:
        f_ref, lay_ref, w_ref, out_ref = refs

    D = f_ref.shape[-1]
    L = w_ref.shape[-1]

    f = f_ref[0].astype(jnp.float32)                            # (tT, D)
    if has_mask:
        mask = mask_ref[0].astype(jnp.float32)                  # (tT, D)
        f = f + mask

    # Teacher softmax / log-softmax: once per token tile, reused across L.
    f_max = jnp.max(f, axis=-1, keepdims=True)
    f_s = f - f_max
    ef = jnp.exp(f_s)
    z = jnp.sum(ef, axis=-1, keepdims=True)
    p = ef * (1.0 / z)                                          # (tT, D)
    lp = f_s - jnp.log(z)
    teacher = jnp.sum(p * lp, axis=-1, keepdims=True)           # (tT, 1) = sum_d p*log p

    w = w_ref[0].astype(jnp.float32)                            # (tT, L) fused weights

    # Offload lane sums to the otherwise-idle MXU (128-wide ones keeps the
    # matmul in a fully standard shape; column 0 is the reduction result).
    ones_red = jnp.ones((D, 128), jnp.float32)

    def lane_sum(x):                                            # (tT, D) -> (tT, 1)
        full = jnp.dot(x, ones_red, precision=lax.Precision.HIGHEST,
                       preferred_element_type=jnp.float32)
        return full[:, :1]

    acc = jnp.zeros_like(teacher)                               # (tT, 1)
    for l in range(L):                                          # L is small & static
        seg = lay_ref[0, :, pl.ds(l * D, D)].astype(jnp.float32)    # (tT, D)
        if has_mask:
            seg = seg + mask
        m_l = jnp.max(seg, axis=-1, keepdims=True)                   # (tT, 1)
        lse = jnp.log(lane_sum(jnp.exp(seg - m_l)))                  # (tT, 1)
        pdot = lane_sum(p * seg)                                     # (tT, 1)
        kl_l = teacher - pdot + m_l + lse                            # (tT, 1)
        acc = acc + kl_l * w[:, l:l + 1]

    if confidence_weighting:
        acc = acc * jnp.max(p, axis=-1, keepdims=True)

    out_ref[...] = jnp.sum(acc, keepdims=True)[None, None]          # (1, 1, 1, 1)


def adaptor_loss_kl(f_logits, layer_logits, t_valid_mask, logit_mask, weights_matrix,
                    token_valid=True, not_embd_valid=False, confidence_weighting=False):
    B, T, D = f_logits.shape
    L = layer_logits.shape[2]

    has_mask = (logit_mask is not None) and (not not_embd_valid)

    # ---- bookkeeping folded into one effective weight tensor (tiny) -----------
    tv = t_valid_mask.astype(jnp.float32)                       # (B, T)
    avail = jnp.max(jnp.sum(tv, axis=1))                        # available_token_num
    t_idx = jnp.arange(T, dtype=jnp.float32)
    eff_w = (weights_matrix.astype(jnp.float32)[None, :, :]
             * (t_idx[None, :, None] < avail).astype(jnp.float32))      # (1, T, L)
    if token_valid:
        eff_w = eff_w * tv[:, :, None]                                   # (B, T, L)
    eff_w = jnp.broadcast_to(eff_w, (B, T, L))
    # fold the mean denominator  mean(kl[:, :avail])  =  sum / (B*avail*L)
    eff_w = eff_w / (jnp.maximum(avail, 1.0) * jnp.float32(B * L))

    # Fold L into the lane axis: a free reshape of contiguous memory; removes the
    # 3->8 sublane padding on the dominant tensor.
    lay_flat = layer_logits.reshape(B, T, L * D)

    lay_item = jnp.dtype(layer_logits.dtype).itemsize
    f_item = jnp.dtype(f_logits.dtype).itemsize

    # ---- generation-aware VMEM budget & token tile -----------------------------
    cap = _vmem_capacity_bytes()                       # 64 MiB v7x, 128 MiB v5e/v6e
    vmem_limit = max(32 << 20, min(int(cap * 0.6), 96 << 20))
    per_token = (2 * L * D * lay_item                  # double-buffered layer block
                 + 2 * D * f_item                      # double-buffered f_logits block
                 + (2 * D * 2 if has_mask else 0)      # double-buffered bf16 mask block
                 + 2 * 128 * 4                         # eff_w block (lanes pad to 128)
                 + 8 * D * 4)                          # live f32 temporaries in the body
    tT = _choose_tile_t(T, per_token, int(vmem_limit * 0.7))
    nT = T // tT

    inputs = [f_logits, lay_flat]
    in_specs = [
        pl.BlockSpec((1, tT, D), lambda t, b: (b, t, 0)),            # f_logits
        pl.BlockSpec((1, tT, L * D), lambda t, b: (b, t, 0)),        # layer_logits
        # TODO(synk): if v5e profiling shows the layer DMA exposed, add
        # pipeline_mode=pl.Buffered(3) to the layer_logits spec.
    ]
    if has_mask:
        mask = jnp.maximum(logit_mask[:, :T, :].astype(jnp.float32), -1e30)
        mask = mask.astype(jnp.bfloat16).reshape(1, T, D)
        inputs.append(mask)
        # Index (0, t, 0): with the batch axis innermost this block is unchanged
        # across b, so the mask streams once per token tile, not once per batch.
        in_specs.append(pl.BlockSpec((1, tT, D), lambda t, b: (0, t, 0)))
    inputs.append(eff_w)
    in_specs.append(pl.BlockSpec((1, tT, L), lambda t, b: (b, t, 0)))

    kernel = functools.partial(_adaptor_loss_kl_kernel,
                               has_mask=has_mask,
                               confidence_weighting=confidence_weighting)

    partials = pl.pallas_call(
        kernel,
        out_shape=jax.ShapeDtypeStruct((nT, B, 1, 1), jnp.float32),
        grid_spec=pltpu.PrefetchScalarGridSpec(
            num_scalar_prefetch=0,
            grid=(nT, B),
            in_specs=in_specs,
            out_specs=pl.BlockSpec((1, 1, 1, 1), lambda t, b: (t, b, 0, 0)),
        ),
        compiler_params=pltpu.CompilerParams(
            dimension_semantics=("parallel", "parallel"),
            vmem_limit_bytes=vmem_limit,
        ),
    )(*inputs)
    return jnp.sum(partials)


def _reference(f_logits, layer_logits, t_valid_mask, logit_mask, weights,
               token_valid=True, not_embd_valid=False, confidence_weighting=False):
    """Pure-JAX mirror of the PyTorch forward (correctness check only)."""
    f = f_logits.astype(jnp.float32)
    lay = layer_logits.astype(jnp.float32)
    if logit_mask is not None and not not_embd_valid:
        m = logit_mask[:, :f.shape[1]].astype(jnp.float32)
        f = f + m
        lay = lay + m[:, :, None, :]
    avail = int(jnp.max(jnp.sum(t_valid_mask, axis=1)))
    p = jax.nn.softmax(f, axis=-1)                       # (B, T, D)
    lq = jax.nn.log_softmax(lay, axis=-1)                # (B, T, L, D)
    kl = jnp.sum(p[:, :, None, :] * (jnp.log(p)[:, :, None, :] - lq), axis=-1)  # (B,T,L)
    if token_valid:
        kl = kl * t_valid_mask[:, :, None]
    kl = kl[:, :avail] * weights[None, :avail, :]
    if confidence_weighting:
        conf = jnp.max(p, axis=-1)
        kl = kl * conf[:, :avail, None]
    return jnp.mean(kl)


if __name__ == "__main__":
    B, T, L, D = 2, 8, 3, 32

    key = jax.random.PRNGKey(0)
    k1, k2 = jax.random.split(key, 2)
    f_logits = jax.random.normal(k1, (B, T, D), jnp.float32)
    layer_logits = jax.random.normal(k2, (B, T, L, D), jnp.float32)

    # token validity: 6 valid tokens in batch 0, 5 in batch 1 -> available_token_num = 6 < T
    t_valid_mask = jnp.array([[1, 1, 1, 1, 1, 1, 0, 0],
                              [1, 1, 1, 1, 1, 0, 0, 0]], jnp.float32)

    # deterministic parameters (shapes implied by __init__)
    t_weights = 1.0 + 0.1 * jnp.arange(T, dtype=jnp.float32)    # (T,)
    l_weights = 1.0 + 0.2 * jnp.arange(L, dtype=jnp.float32)    # (L,)
    weights_matrix = l_weights[None, :] * t_weights[:, None]    # (T, L)
    weights_matrix = weights_matrix / jnp.sum(weights_matrix) * (T * L)

    # deterministic logit mask
    logit_mask = jnp.where(jnp.arange(D) % 5 == 0, -20.0, 0.0).astype(jnp.float32)
    logit_mask = jnp.broadcast_to(logit_mask[None, None, :], (1, T, D))

    # f32 path vs reference (masked, has_mask kernel variant)
    loss = adaptor_loss_kl(f_logits, layer_logits, t_valid_mask, logit_mask,
                           weights_matrix)
    loss = jax.block_until_ready(loss)
    ref = _reference(f_logits, layer_logits, t_valid_mask, logit_mask, weights_matrix)
    assert np.allclose(np.asarray(loss), np.asarray(ref), rtol=1e-4, atol=1e-5), (loss, ref)

    # confidence-weighting path
    loss_c = adaptor_loss_kl(f_logits, layer_logits, t_valid_mask, logit_mask,
                             weights_matrix, confidence_weighting=True)
    loss_c = jax.block_until_ready(loss_c)
    ref_c = _reference(f_logits, layer_logits, t_valid_mask, logit_mask, weights_matrix,
                       confidence_weighting=True)
    assert np.allclose(np.asarray(loss_c), np.asarray(ref_c), rtol=1e-4, atol=1e-5), (loss_c, ref_c)

    # no-mask path (specialized kernel without the mask input / adds)
    loss_nm = adaptor_loss_kl(f_logits, layer_logits, t_valid_mask, None, weights_matrix)
    loss_nm = jax.block_until_ready(loss_nm)
    ref_nm = _reference(f_logits, layer_logits, t_valid_mask, None, weights_matrix)
    assert np.allclose(np.asarray(loss_nm), np.asarray(ref_nm), rtol=1e-4, atol=1e-5), (loss_nm, ref_nm)

    # bf16 input path (native-dtype HBM streaming; upcast happens inside the kernel)
    loss_bf16 = adaptor_loss_kl(f_logits.astype(jnp.bfloat16),
                                layer_logits.astype(jnp.bfloat16),
                                t_valid_mask, logit_mask, weights_matrix)
    loss_bf16 = jax.block_until_ready(loss_bf16)
    assert np.isfinite(np.asarray(loss_bf16))
    assert np.allclose(np.asarray(loss_bf16), np.asarray(ref), rtol=0.1, atol=0.05), (loss_bf16, ref)

    print("KERNEL_OK")
</pallas_src>

<mosaic_0001>
module attributes {stable_mosaic.version = 11 : i64} {
  func.func @_adaptor_loss_kl_kernel(%arg0: i32, %arg1: i32, %arg2: memref<1x8x32xf32, #tpu.memory_space<vmem>>, %arg3: memref<1x8x96xf32, #tpu.memory_space<vmem>>, %arg4: memref<1x8x32xbf16, #tpu.memory_space<vmem>>, %arg5: memref<1x8x3xf32, #tpu.memory_space<vmem>>, %arg6: memref<1x1x1x1xf32, #tpu.memory_space<vmem>>) attributes {dimension_semantics = [#tpu.dimension_semantics<parallel>, #tpu.dimension_semantics<parallel>], iteration_bounds = array<i64: 1, 2>, scalar_prefetch = 0 : i64, scratch_operands = 0 : i64, tpu.core_type = #tpu.core_type<tc>, window_params = [{transform_indices = @transform_0, window_bounds = array<i64: 1, 8, 32>}, {transform_indices = @transform_1, window_bounds = array<i64: 1, 8, 96>}, {transform_indices = @transform_2, window_bounds = array<i64: 1, 8, 32>}, {transform_indices = @transform_3, window_bounds = array<i64: 1, 8, 3>}, {transform_indices = @transform_4, window_bounds = array<i64: 1, 1, 1, 1>}]} {
    %c0 = arith.constant 0 : index
    %c0_0 = arith.constant 0 : index
    %c0_1 = arith.constant 0 : index
    %0 = vector.load %arg2[%c0, %c0_0, %c0_1] : memref<1x8x32xf32, #tpu.memory_space<vmem>>, vector<1x8x32xf32>
    %1 = vector.shape_cast %0 : vector<1x8x32xf32> to vector<8x32xf32>
    %c0_2 = arith.constant 0 : index
    %c0_3 = arith.constant 0 : index
    %c0_4 = arith.constant 0 : index
    %2 = vector.load %arg4[%c0_2, %c0_3, %c0_4] : memref<1x8x32xbf16, #tpu.memory_space<vmem>>, vector<1x8x32xbf16>
    %3 = vector.shape_cast %2 : vector<1x8x32xbf16> to vector<8x32xbf16>
    %4 = arith.extf %3 : vector<8x32xbf16> to vector<8x32xf32>
    %5 = arith.addf %1, %4 : vector<8x32xf32>
    %cst = arith.constant dense<0xFF800000> : vector<8xf32>
    %6 = vector.multi_reduction <maximumf>, %5, %cst [1] : vector<8x32xf32> to vector<8xf32>
    %7 = vector.shape_cast %6 : vector<8xf32> to vector<8x1xf32>
    %8 = vector.broadcast %7 : vector<8x1xf32> to vector<8x32xf32>
    %9 = arith.subf %5, %8 : vector<8x32xf32>
    %10 = math.exp %9 : vector<8x32xf32>
    %cst_5 = arith.constant dense<0.000000e+00> : vector<8xf32>
    %11 = vector.multi_reduction <add>, %10, %cst_5 [1] : vector<8x32xf32> to vector<8xf32>
    %12 = vector.shape_cast %11 : vector<8xf32> to vector<8x1xf32>
    %cst_6 = arith.constant 1.000000e+00 : f32
    %13 = vector.broadcast %cst_6 : f32 to vector<8x1xf32>
    %14 = arith.divf %13, %12 : vector<8x1xf32>
    %15 = vector.broadcast %14 : vector<8x1xf32> to vector<8x32xf32>
    %16 = arith.mulf %10, %15 : vector<8x32xf32>
    %17 = math.log %12 : vector<8x1xf32>
    %18 = vector.broadcast %17 : vector<8x1xf32> to vector<8x32xf32>
    %19 = arith.subf %9, %18 : vector<8x32xf32>
    %20 = arith.mulf %16, %19 : vector<8x32xf32>
    %cst_7 = arith.constant dense<0.000000e+00> : vector<8xf32>
    %21 = vector.multi_reduction <add>, %20, %cst_7 [1] : vector<8x32xf32> to vector<8xf32>
    %22 = vector.shape_cast %21 : vector<8xf32> to vector<8x1xf32>
    %c0_8 = arith.constant 0 : index
    %c0_9 = arith.constant 0 : index
    %c0_10 = arith.constant 0 : index
    %23 = vector.load %arg5[%c0_8, %c0_9, %c0_10] : memref<1x8x3xf32, #tpu.memory_space<vmem>>, vector<1x8x3xf32>
    %24 = vector.shape_cast %23 : vector<1x8x3xf32> to vector<8x3xf32>
    %cst_11 = arith.constant 1.000000e+00 : f32
    %25 = vector.broadcast %cst_11 : f32 to vector<32x128xf32>
    %cst_12 = arith.constant 0.000000e+00 : f32
    %26 = vector.broadcast %cst_12 : f32 to vector<8x1xf32>
    %c0_13 = arith.constant 0 : index
    %c0_14 = arith.constant 0 : index
    %c0_15 = arith.constant 0 : index
    %27 = vector.load %arg3[%c0_13, %c0_14, %c0_15] : memref<1x8x96xf32, #tpu.memory_space<vmem>>, vector<1x8x32xf32>
    %28 = vector.shape_cast %27 : vector<1x8x32xf32> to vector<8x32xf32>
    %29 = arith.addf %28, %4 : vector<8x32xf32>
    %cst_16 = arith.constant dense<0xFF800000> : vector<8xf32>
    %30 = vector.multi_reduction <maximumf>, %29, %cst_16 [1] : vector<8x32xf32> to vector<8xf32>
    %31 = vector.shape_cast %30 : vector<8xf32> to vector<8x1xf32>
    %32 = vector.broadcast %31 : vector<8x1xf32> to vector<8x32xf32>
    %33 = arith.subf %29, %32 : vector<8x32xf32>
    %34 = math.exp %33 : vector<8x32xf32>
    %cst_17 = arith.constant dense<0.000000e+00> : vector<8x128xf32>
    %35 = tpu.matmul %34, %25, %cst_17 {dimension_numbers = #tpu.dot_dimension_numbers<[1], [0], [0], [1], [0, 0, 1, 1], [], []>, precision = #tpu.contract_precision<fp32>} : vector<8x32xf32>, vector<32x128xf32>, vector<8x128xf32> -> vector<8x128xf32>
    %36 = vector.extract_strided_slice %35 {offsets = [0, 0], sizes = [8, 1], strides = [1, 1]} : vector<8x128xf32> to vector<8x1xf32>
    %37 = math.log %36 : vector<8x1xf32>
    %38 = arith.mulf %16, %29 : vector<8x32xf32>
    %cst_18 = arith.constant dense<0.000000e+00> : vector<8x128xf32>
    %39 = tpu.matmul %38, %25, %cst_18 {dimension_numbers = #tpu.dot_dimension_numbers<[1], [0], [0], [1], [0, 0, 1, 1], [], []>, precision = #tpu.contract_precision<fp32>} : vector<8x32xf32>, vector<32x128xf32>, vector<8x128xf32> -> vector<8x128xf32>
    %40 = vector.extract_strided_slice %39 {offsets = [0, 0], sizes = [8, 1], strides = [1, 1]} : vector<8x128xf32> to vector<8x1xf32>
    %41 = arith.subf %22, %40 : vector<8x1xf32>
    %42 = arith.addf %41, %31 : vector<8x1xf32>
    %43 = arith.addf %42, %37 : vector<8x1xf32>
    %44 = vector.extract_strided_slice %24 {offsets = [0, 0], sizes = [8, 1], strides = [1, 1]} : vector<8x3xf32> to vector<8x1xf32>
    %45 = arith.mulf %43, %44 : vector<8x1xf32>
    %46 = arith.addf %26, %45 : vector<8x1xf32>
    %c0_19 = arith.constant 0 : index
    %c0_20 = arith.constant 0 : index
    %c32 = arith.constant 32 : index
    %47 = vector.load %arg3[%c0_19, %c0_20, %c32] : memref<1x8x96xf32, #tpu.memory_space<vmem>>, vector<1x8x32xf32>
    %48 = vector.shape_cast %47 : vector<1x8x32xf32> to vector<8x32xf32>
    %49 = arith.addf %48, %4 : vector<8x32xf32>
    %cst_21 = arith.constant dense<0xFF800000> : vector<8xf32>
    %50 = vector.multi_reduction <maximumf>, %49, %cst_21 [1] : vector<8x32xf32> to vector<8xf32>
    %51 = vector.shape_cast %50 : vector<8xf32> to vector<8x1xf32>
    %52 = vector.broadcast %51 : vector<8x1xf32> to vector<8x32xf32>
    %53 = arith.subf %49, %52 : vector<8x32xf32>
    %54 = math.exp %53 : vector<8x32xf32>
    %cst_22 = arith.constant dense<0.000000e+00> : vector<8x128xf32>
    %55 = tpu.matmul %54, %25, %cst_22 {dimension_numbers = #tpu.dot_dimension_numbers<[1], [0], [0], [1], [0, 0, 1, 1], [], []>, precision = #tpu.contract_precision<fp32>} : vector<8x32xf32>, vector<32x128xf32>, vector<8x128xf32> -> vector<8x128xf32>
    %56 = vector.extract_strided_slice %55 {offsets = [0, 0], sizes = [8, 1], strides = [1, 1]} : vector<8x128xf32> to vector<8x1xf32>
    %57 = math.log %56 : vector<8x1xf32>
    %58 = arith.mulf %16, %49 : vector<8x32xf32>
    %cst_23 = arith.constant dense<0.000000e+00> : vector<8x128xf32>
    %59 = tpu.matmul %58, %25, %cst_23 {dimension_numbers = #tpu.dot_dimension_numbers<[1], [0], [0], [1], [0, 0, 1, 1], [], []>, precision = #tpu.contract_precision<fp32>} : vector<8x32xf32>, vector<32x128xf32>, vector<8x128xf32> -> vector<8x128xf32>
    %60 = vector.extract_strided_slice %59 {offsets = [0, 0], sizes = [8, 1], strides = [1, 1]} : vector<8x128xf32> to vector<8x1xf32>
    %61 = arith.subf %22, %60 : vector<8x1xf32>
    %62 = arith.addf %61, %51 : vector<8x1xf32>
    %63 = arith.addf %62, %57 : vector<8x1xf32>
    %64 = vector.extract_strided_slice %24 {offsets = [0, 1], sizes = [8, 1], strides = [1, 1]} : vector<8x3xf32> to vector<8x1xf32>
    %65 = arith.mulf %63, %64 : vector<8x1xf32>
    %66 = arith.addf %46, %65 : vector<8x1xf32>
    %c0_24 = arith.constant 0 : index
    %c0_25 = arith.constant 0 : index
    %c64 = arith.constant 64 : index
    %67 = vector.load %arg3[%c0_24, %c0_25, %c64] : memref<1x8x96xf32, #tpu.memory_space<vmem>>, vector<1x8x32xf32>
    %68 = vector.shape_cast %67 : vector<1x8x32xf32> to vector<8x32xf32>
    %69 = arith.addf %68, %4 : vector<8x32xf32>
    %cst_26 = arith.constant dense<0xFF800000> : vector<8xf32>
    %70 = vector.multi_reduction <maximumf>, %69, %cst_26 [1] : vector<8x32xf32> to vector<8xf32>
    %71 = vector.shape_cast %70 : vector<8xf32> to vector<8x1xf32>
    %72 = vector.broadcast %71 : vector<8x1xf32> to vector<8x32xf32>
    %73 = arith.subf %69, %72 : vector<8x32xf32>
    %74 = math.exp %73 : vector<8x32xf32>
    %cst_27 = arith.constant dense<0.000000e+00> : vector<8x128xf32>
    %75 = tpu.matmul %74, %25, %cst_27 {dimension_numbers = #tpu.dot_dimension_numbers<[1], [0], [0], [1], [0, 0, 1, 1], [], []>, precision = #tpu.contract_precision<fp32>} : vector<8x32xf32>, vector<32x128xf32>, vector<8x128xf32> -> vector<8x128xf32>
    %76 = vector.extract_strided_slice %75 {offsets = [0, 0], sizes = [8, 1], strides = [1, 1]} : vector<8x128xf32> to vector<8x1xf32>
    %77 = math.log %76 : vector<8x1xf32>
    %78 = arith.mulf %16, %69 : vector<8x32xf32>
    %cst_28 = arith.constant dense<0.000000e+00> : vector<8x128xf32>
    %79 = tpu.matmul %78, %25, %cst_28 {dimension_numbers = #tpu.dot_dimension_numbers<[1], [0], [0], [1], [0, 0, 1, 1], [], []>, precision = #tpu.contract_precision<fp32>} : vector<8x32xf32>, vector<32x128xf32>, vector<8x128xf32> -> vector<8x128xf32>
    %80 = vector.extract_strided_slice %79 {offsets = [0, 0], sizes = [8, 1], strides = [1, 1]} : vector<8x128xf32> to vector<8x1xf32>
    %81 = arith.subf %22, %80 : vector<8x1xf32>
    %82 = arith.addf %81, %71 : vector<8x1xf32>
    %83 = arith.addf %82, %77 : vector<8x1xf32>
    %84 = vector.extract_strided_slice %24 {offsets = [0, 2], sizes = [8, 1], strides = [1, 1]} : vector<8x3xf32> to vector<8x1xf32>
    %85 = arith.mulf %83, %84 : vector<8x1xf32>
    %86 = arith.addf %66, %85 : vector<8x1xf32>
    %87 = vector.shape_cast %86 : vector<8x1xf32> to vector<1x8x1xf32>
    %cst_29 = arith.constant dense<0.000000e+00> : vector<1xf32>
    %88 = vector.multi_reduction <add>, %87, %cst_29 [1, 2] : vector<1x8x1xf32> to vector<1xf32>
    %89 = vector.shape_cast %88 : vector<1xf32> to vector<1x1x1xf32>
    %90 = vector.extract %89[0, 0, 0] : f32 from vector<1x1x1xf32>
    %91 = vector.broadcast %90 : f32 to vector<1x1xf32>
    %92 = vector.shape_cast %91 : vector<1x1xf32> to vector<1x1x1x1xf32>
    %c0_30 = arith.constant 0 : index
    %c0_31 = arith.constant 0 : index
    %c0_32 = arith.constant 0 : index
    %c0_33 = arith.constant 0 : index
    %93 = vector.load %arg6[%c0_30, %c0_31, %c0_32, %c0_33] : memref<1x1x1x1xf32, #tpu.memory_space<vmem>>, vector<1x1x1x1xf32>
    tpu.vector_store %arg6[%c0_30, %c0_31, %c0_32, %c0_33], %92 {strides = array<i32>} : memref<1x1x1x1xf32, #tpu.memory_space<vmem>>, vector<1x1x1x1xf32>,
    return
  }
  func.func @transform_0(%arg0: i32, %arg1: i32) -> (i32, i32, i32) {
    %c0_i32 = arith.constant 0 : i32
    %c0_i32_0 = arith.constant 0 : i32
    return %arg1, %arg0, %c0_i32 : i32, i32, i32
  }
  func.func @transform_1(%arg0: i32, %arg1: i32) -> (i32, i32, i32) {
    %c0_i32 = arith.constant 0 : i32
    %c0_i32_0 = arith.constant 0 : i32
    return %arg1, %arg0, %c0_i32 : i32, i32, i32
  }
  func.func @transform_2(%arg0: i32, %arg1: i32) -> (i32, i32, i32) {
    %c0_i32 = arith.constant 0 : i32
    %c0_i32_0 = arith.constant 0 : i32
    %c0_i32_1 = arith.constant 0 : i32
    return %c0_i32, %arg0, %c0_i32_0 : i32, i32, i32
  }
  func.func @transform_3(%arg0: i32, %arg1: i32) -> (i32, i32, i32) {
    %c0_i32 = arith.constant 0 : i32
    %c0_i32_0 = arith.constant 0 : i32
    return %arg1, %arg0, %c0_i32 : i32, i32, i32
  }
  func.func @transform_4(%arg0: i32, %arg1: i32) -> (i32, i32, i32, i32) {
    %c0_i32 = arith.constant 0 : i32
    %c0_i32_0 = arith.constant 0 : i32
    %c0_i32_1 = arith.constant 0 : i32
    return %arg0, %arg1, %c0_i32, %c0_i32_0 : i32, i32, i32, i32
  }
}

</mosaic_0001>

<llo_original>
// kernel: tpu_custom_call.1
$region0: #{tpu_custom_call.1}
  #allocation0 [shape = 'u32[]', space=smem, size = 0x4, offset = 0x4, fixed_abs, tag = 'smem constant byte address 0x4 - core index']
  #allocation1 [shape = 'u32[144,128]{1,0:T(1,128)}', space=vmem, size = 0x12000, scoped, tag = 'internal scratch']
  %s0 = inlined_call_operand.vmem [shape: f32[2,8,32], index: 0, kind: input, shape index: {}]
  %s1 = inlined_call_operand.hbm [shape: f32[2,8,96], index: 1, kind: input, shape index: {}]
  %s2 = inlined_call_operand.vmem [shape: bf16[1,8,32], index: 2, kind: input, shape index: {}]
  %s3 = inlined_call_operand.vmem [shape: f32[2,8,3], index: 3, kind: input, shape index: {}]
  %s4 = inlined_call_operand.vmem [shape: f32[1,2,1,1], index: 4, kind: output, shape index: {}]
  %s5 = sld [smem:[#allocation0]]
  $region53: #{tpu_custom_call.1} parent=0
    _
  %s7 = ssub.s32 1, %s5
  %s8 = scalar_select 0, %s7, %s5
  $region1: #{tpu_custom_call.1} parent=0
    #allocation2 [shape = 'u8[8192]{0}', space=vmem, size = 0x2000, scoped, tag = 'input window, operand 1']
    #allocation3 [shape = 's32[2]{0}', space=sflag, size = 0x8, scoped, tag = 'scoped memory for tpu_custom_call.1']
    %9 = vsyncpa [#allocation3], 0
    %s10 = scalar_lea.sflag [#allocation3], 1
    %11 = vsyncpa %s10, 0
    loop: start=0, step=1, limit=4
    $region2: #{tpu_custom_call.1} parent=1 // loop_pre_header
      _
    $region3: #{tpu_custom_call.1} parent=1 // loop_header
      %s13 = sphi 0, %s17
      %p14 = scmp.ge.s32.totalorder %s13, 4
      %s20 = sphi 0, %s32
      %s21 = sphi 0, %s28
      %s22 = sphi 0, %s20
      %s23 = sphi 0, %s21
      %s24 = sphi 0, %s22
      %s25 = sphi 0, %s23
      %s37 = sphi 0, %s39
      %s40 = sphi 0, %s37
      %s41 = sphi 0, %s40
      %s57 = sphi 0, %s41
      %s65 = sphi 0, %s67
      %s68 = sphi 0, %s65
      %s69 = sphi 0, %s68
      %s85 = sphi 0, %s69
      %s91 = sphi 0, %s93
      %s94 = sphi 0, %s91
      %s95 = sphi 0, %s94
      %s111 = sphi 0, %s95
      %s119 = sphi 0, %s121
      %s122 = sphi 0, %s119
      %s123 = sphi 0, %s122
      %s139 = sphi 0, %s123
      %s147 = sphi 0, %s149
      %s150 = sphi 0, %s147
      %s151 = sphi 0, %s150
      %s167 = sphi 0, %s151
    $region4: #{tpu_custom_call.1} parent=1 // loop_header_branch
      %16 = sbr.rel (%p14) target = $region8
    $region5: #{tpu_custom_call.1} parent=1 // loop_body
      %s18 = ssub.s32 %s13, 1
      %s19 = ssub.s32 %s13, 2
      %s26 = sadd.s32 1, %s21
      %p27 = scmp.ge.s32.totalorder %s26, 2
      %s28 = scalar_select %p27, 0, %s26
      %s29 = sadd.s32 1, %s20
      %s30 = scalar_select %p27, %s29, %s20
      %p31 = scmp.ge.s32.totalorder %s30, 1
      %s32 = scalar_select %p31, 0, %s30
      %s33 = ssub.s32 %s21, %s28
      %s34 = ssub.s32 %s20, %s32
      %s35 = sor.u32 %s33, %s34
      %p36 = scmp.eq.s32.totalorder %s35, 0
      %s38 = sadd.s32 %s37, 1
      %s39 = scalar_select %p36, %s37, %s38
      %p42 = pneg %p36
      %p43 = scmp.eq.s32.totalorder %s13, 1
      %p44 = por %p42, %p43
      %p45 = scmp.ne.s32.totalorder %s37, %s40
      %p46 = scmp.eq.s32.totalorder %s13, 0
      %p47 = por %p45, %p46
      %p48 = scmp.ne.s32.totalorder %s37, %s40
      %p49 = scmp.eq.s32.totalorder %s18, 1
      %p50 = por %p48, %p49
      %p51 = scmp.ne.s32.totalorder %s40, %s41
      %p52 = scmp.eq.s32.totalorder %s18, 0
      %p53 = por %p51, %p52
      %p54 = scmp.ne.s32.totalorder %s40, %s41
      %p55 = scmp.eq.s32.totalorder %s19, 1
      %p56 = por %p54, %p55
      %p58 = scmp.ne.s32.totalorder %s41, %s57
      %p59 = scmp.eq.s32.totalorder %s19, 0
      %p60 = por %p58, %p59
      %s61 = ssub.s32 %s21, %s28
      %s62 = ssub.s32 %s20, %s32
      %s63 = sor.u32 %s61, %s62
      %p64 = scmp.eq.s32.totalorder %s63, 0
      %s66 = sadd.s32 %s65, 1
      %s67 = scalar_select %p64, %s65, %s66
      %p70 = pneg %p64
      %p71 = scmp.eq.s32.totalorder %s13, 1
      %p72 = por %p70, %p71
      %p73 = scmp.ne.s32.totalorder %s65, %s68
      %p74 = scmp.eq.s32.totalorder %s13, 0
      %p75 = por %p73, %p74
      %p76 = scmp.ne.s32.totalorder %s65, %s68
      %p77 = scmp.eq.s32.totalorder %s18, 1
      %p78 = por %p76, %p77
      %p79 = scmp.ne.s32.totalorder %s68, %s69
      %p80 = scmp.eq.s32.totalorder %s18, 0
      %p81 = por %p79, %p80
      %p82 = scmp.ne.s32.totalorder %s68, %s69
      %p83 = scmp.eq.s32.totalorder %s19, 1
      %p84 = por %p82, %p83
      %p86 = scmp.ne.s32.totalorder %s69, %s85
      %p87 = scmp.eq.s32.totalorder %s19, 0
      %p88 = por %p86, %p87
      %s89 = ssub.s32 %s20, %s32
      %p90 = scmp.eq.s32.totalorder %s89, 0
      %s92 = sadd.s32 %s91, 1
      %s93 = scalar_select %p90, %s91, %s92
      %p96 = pneg %p90
      %p97 = scmp.eq.s32.totalorder %s13, 1
      %p98 = por %p96, %p97
      %p99 = scmp.ne.s32.totalorder %s91, %s94
      %p100 = scmp.eq.s32.totalorder %s13, 0
      %p101 = por %p99, %p100
      %p102 = scmp.ne.s32.totalorder %s91, %s94
      %p103 = scmp.eq.s32.totalorder %s18, 1
      %p104 = por %p102, %p103
      %p105 = scmp.ne.s32.totalorder %s94, %s95
      %p106 = scmp.eq.s32.totalorder %s18, 0
      %p107 = por %p105, %p106
      %p108 = scmp.ne.s32.totalorder %s94, %s95
      %p109 = scmp.eq.s32.totalorder %s19, 1
      %p110 = por %p108, %p109
      %p112 = scmp.ne.s32.totalorder %s95, %s111
      %p113 = scmp.eq.s32.totalorder %s19, 0
      %p114 = por %p112, %p113
      %s115 = ssub.s32 %s21, %s28
      %s116 = ssub.s32 %s20, %s32
      %s117 = sor.u32 %s115, %s116
      %p118 = scmp.eq.s32.totalorder %s117, 0
      %s120 = sadd.s32 %s119, 1
      %s121 = scalar_select %p118, %s119, %s120
      %p124 = pneg %p118
      %p125 = scmp.eq.s32.totalorder %s13, 1
      %p126 = por %p124, %p125
      %p127 = scmp.ne.s32.totalorder %s119, %s122
      %p128 = scmp.eq.s32.totalorder %s13, 0
      %p129 = por %p127, %p128
      %p130 = scmp.ne.s32.totalorder %s119, %s122
      %p131 = scmp.eq.s32.totalorder %s18, 1
      %p132 = por %p130, %p131
      %p133 = scmp.ne.s32.totalorder %s122, %s123
      %p134 = scmp.eq.s32.totalorder %s18, 0
      %p135 = por %p133, %p134
      %p136 = scmp.ne.s32.totalorder %s122, %s123
      %p137 = scmp.eq.s32.totalorder %s19, 1
      %p138 = por %p136, %p137
      %p140 = scmp.ne.s32.totalorder %s123, %s139
      %p141 = scmp.eq.s32.totalorder %s19, 0
      %p142 = por %p140, %p141
      %s143 = ssub.s32 %s20, %s32
      %s144 = ssub.s32 %s21, %s28
      %s145 = sor.u32 %s143, %s144
      %p146 = scmp.eq.s32.totalorder %s145, 0
      %s148 = sadd.s32 %s147, 1
      %s149 = scalar_select %p146, %s147, %s148
      %p152 = pneg %p146
      %p153 = scmp.eq.s32.totalorder %s13, 1
      %p154 = por %p152, %p153
      %p155 = scmp.ne.s32.totalorder %s147, %s150
      %p156 = scmp.eq.s32.totalorder %s13, 0
      %p157 = por %p155, %p156
      %p158 = scmp.ne.s32.totalorder %s147, %s150
      %p159 = scmp.eq.s32.totalorder %s18, 1
      %p160 = por %p158, %p159
      %p161 = scmp.ne.s32.totalorder %s150, %s151
      %p162 = scmp.eq.s32.totalorder %s18, 0
      %p163 = por %p161, %p162
      %p164 = scmp.ne.s32.totalorder %s150, %s151
      %p165 = scmp.eq.s32.totalorder %s19, 1
      %p166 = por %p164, %p165
      %p168 = scmp.ne.s32.totalorder %s151, %s167
      %p169 = scmp.eq.s32.totalorder %s19, 0
      %p170 = por %p168, %p169
      %p171 = scmp.le.s32.totalorder 1, %s13
      %p172 = scmp.lt.s32.totalorder %s13, 3
      %p173 = pnand %p171, %p172
      %p174 = pneg %p173
      // Predicated region
      $region9: #{tpu_custom_call.1} parent=5 // pred_check
        _
      $region10: #{tpu_custom_call.1} parent=5 // pred_check_branch
        %176 = sbr.rel (%p173) target = $region12
      $region11: #{tpu_custom_call.1} parent=5 // pred_region
        %s177 = ssub.s32 %s13, 1
        // Predicated region
        $region13: #{tpu_custom_call.1} parent=11 // pred_check
          %p178 = pneg %p107
        $region14: #{tpu_custom_call.1} parent=11 // pred_check_branch
          %180 = sbr.rel (%p178) target = $region16
        $region15: #{tpu_custom_call.1} parent=11 // pred_region
          %p181 = scmp.lt.s32.totalorder %s22, 0
          %s182 = scalar_select %p181, %s22, 0
          %s183 = smul.addr %s182, 4
          %s184 = scalar_lea.vmem %s2, %s183
        $region16: #{tpu_custom_call.1} parent=11 // pred_fallthru
          _
      $region12: #{tpu_custom_call.1} parent=5 // pred_fallthru
        _
      %p185 = scmp.lt.s32.totalorder %s13, 2
      // Predicated region
      $region17: #{tpu_custom_call.1} parent=5 // pred_check
        %p186 = pneg %p185
      $region18: #{tpu_custom_call.1} parent=5 // pred_check_branch
        %188 = sbr.rel (%p186) target = $region20
      $region19: #{tpu_custom_call.1} parent=5 // pred_region
        // Predicated region
        $region21: #{tpu_custom_call.1} parent=19 // pred_check
          %p189 = pneg %p47
        $region22: #{tpu_custom_call.1} parent=19 // pred_check_branch
          %191 = sbr.rel (%p189) target = $region24
        $region23: #{tpu_custom_call.1} parent=19 // pred_region
          %p192 = scmp.lt.s32.totalorder %s21, 1
          %s193 = scalar_select %p192, %s21, 1
          %p194 = scmp.lt.s32.totalorder %s20, 0
          %s195 = scalar_select %p194, %s20, 0
          %s196 = sadd.s32 %s195, %s193
          %s197 = smul.addr %s196, 8
          %s198 = scalar_lea.vmem %s0, %s197
        $region24: #{tpu_custom_call.1} parent=19 // pred_fallthru
          _
        // Predicated region
        $region25: #{tpu_custom_call.1} parent=19 // pred_check
          %p199 = pneg %p75
        $region26: #{tpu_custom_call.1} parent=19 // pred_check_branch
          %201 = sbr.rel (%p199) target = $region28
        $region27: #{tpu_custom_call.1} parent=19 // pred_region
          %s202 = sand.u32 %s65, 1
          %s203 = scalar_lea.sflag [#allocation3], %s202
          %s204 = sand.u32 %s65, 1
          %s205 = smul.addr %s204, 8
          %s206 = scalar_lea.vmem [#allocation2], %s205
          %s208 = ssub.s32 128, 128
          %209 = vsyncadd %s203, %s208
          %s210 = sadd.s32 %s20, %s21
          %s211 = smul.addr %s210, 128
          %s212 = scalar_lea.hbm %s1, %s211
          %s214 = sshll.u32 %s206, 4
          %s215 = int_to_ptr.vmem [resolvable:$true] %s214
          %217 = dma.hbm_to_vmem [thread:$0]  %s212, 128, %s215, %s203
        $region28: #{tpu_custom_call.1} parent=19 // pred_fallthru
          _
        // Predicated region
        $region29: #{tpu_custom_call.1} parent=19 // pred_check
          %p218 = pneg %p129
        $region30: #{tpu_custom_call.1} parent=19 // pred_check_branch
          %220 = sbr.rel (%p218) target = $region32
        $region31: #{tpu_custom_call.1} parent=19 // pred_region
          %p221 = scmp.lt.s32.totalorder %s21, 1
          %s222 = scalar_select %p221, %s21, 1
          %p223 = scmp.lt.s32.totalorder %s20, 0
          %s224 = scalar_select %p223, %s20, 0
          %s225 = sadd.s32 %s224, %s222
          %s226 = smul.addr %s225, 8
          %s227 = scalar_lea.vmem %s3, %s226
        $region32: #{tpu_custom_call.1} parent=19 // pred_fallthru
          _
      $region20: #{tpu_custom_call.1} parent=5 // pred_fallthru
        _
      %p228 = scmp.le.s32.totalorder 1, %s13
      %p229 = scmp.lt.s32.totalorder %s13, 3
      %p230 = pnand %p228, %p229
      %p231 = pneg %p230
      // Predicated region
      $region33: #{tpu_custom_call.1} parent=5 // pred_check
        _
      $region34: #{tpu_custom_call.1} parent=5 // pred_check_branch
        %233 = sbr.rel (%p230) target = $region36
      $region35: #{tpu_custom_call.1} parent=5 // pred_region
        %s234 = ssub.s32 %s13, 1
        %s235 = sand.u32 %s68, 1
        %s236 = scalar_lea.sflag [#allocation3], %s235
        %s237 = sand.u32 %s68, 1
        %s238 = smul.addr %s237, 8
        %s239 = scalar_lea.vmem [#allocation2], %s238
        // Predicated region
        $region37: #{tpu_custom_call.1} parent=35 // pred_check
          %p240 = pneg %p81
        $region38: #{tpu_custom_call.1} parent=35 // pred_check_branch
          %242 = sbr.rel (%p240) target = $region40
        $region39: #{tpu_custom_call.1} parent=35 // pred_region
          %243 = dma.done %s236, 128
        $region40: #{tpu_custom_call.1} parent=35 // pred_fallthru
          _
        %p244 = scmp.lt.s32.totalorder %s23, 1
        %s245 = scalar_select %p244, %s23, 1
        %p246 = scmp.lt.s32.totalorder %s22, 0
        %s247 = scalar_select %p246, %s22, 0
        %s248 = sadd.s32 %s247, %s245
        %s249 = smul.addr %s248, 8
        %s250 = scalar_lea.vmem %s0, %s249
        %p251 = pneg %p53
        %p252 = pneg %p50
        %s253 = sand.u32 %s68, 1
        %s254 = scalar_lea.sflag [#allocation3], %s253
        %s255 = sand.u32 %s68, 1
        %s256 = smul.addr %s255, 8
        %s257 = scalar_lea.vmem [#allocation2], %s256
        %p258 = pneg %p81
        %p259 = pneg %p78
        %p260 = scmp.lt.s32.totalorder %s22, 0
        %s261 = scalar_select %p260, %s22, 0
        %s262 = smul.addr %s261, 4
        %s263 = scalar_lea.vmem %s2, %s262
        %p264 = pneg %p107
        %p265 = pneg %p104
        %p266 = scmp.lt.s32.totalorder %s23, 1
        %s267 = scalar_select %p266, %s23, 1
        %p268 = scmp.lt.s32.totalorder %s22, 0
        %s269 = scalar_select %p268, %s22, 0
        %s270 = sadd.s32 %s269, %s267
        %s271 = smul.addr %s270, 8
        %s272 = scalar_lea.vmem %s3, %s271
        %p273 = pneg %p135
        %p274 = pneg %p132
        %p275 = pneg %p163
        %p276 = pneg %p160
        %p277 = scmp.lt.s32.totalorder %s22, 0
        %s278 = scalar_select %p277, %s22, 0
        %p279 = scmp.lt.s32.totalorder %s23, 1
        %s280 = scalar_select %p279, %s23, 1
        %s281 = smul.addr %s278, 2
        %s282 = sadd.s32 %s280, %s281
        %s283 = scalar_lea.vmem %s4, %s282
        %p284 = scmp.lt.s32.totalorder %s23, 1
        %s285 = scalar_select %p284, %s23, 1
        %p286 = scmp.lt.s32.totalorder %s22, 0
        %s287 = scalar_select %p286, %s22, 0
        %s288 = sadd.s32 %s287, %s285
        %s289 = smul.addr %s288, 8
        %s290 = scalar_lea.vmem %s0, %s289
        %p291 = scmp.lt.s32.totalorder %s22, 0
        %s292 = scalar_select %p291, %s22, 0
        %s293 = smul.addr %s292, 4
        %s294 = scalar_lea.vmem %s2, %s293
        %p295 = scmp.lt.s32.totalorder %s23, 1
        %s296 = scalar_select %p295, %s23, 1
        %p297 = scmp.lt.s32.totalorder %s22, 0
        %s298 = scalar_select %p297, %s22, 0
        %s299 = sadd.s32 %s298, %s296
        %s300 = smul.addr %s299, 8
        %s301 = scalar_lea.vmem %s3, %s300
        %p302 = scmp.lt.s32.totalorder %s22, 0
        %s303 = scalar_select %p302, %s22, 0
        %p304 = scmp.lt.s32.totalorder %s23, 1
        %s305 = scalar_select %p304, %s23, 1
        %s306 = smul.addr %s303, 2
        %s307 = sadd.s32 %s305, %s306
        %s308 = scalar_lea.vmem %s4, %s307
        %v309 = vld [vmem:[%s290] sm:$0xff]
        %v310 = vld [vmem:[%s294] sm:$0xf]
        %v311 = vunpack.c.l.bf16 %v310
        %v312 = vadd.f32 %v309, %v311
        %vm313 = vcmask 261120
        %v314 = vsel %vm313, %v312, -inf
        %315 = vmax.xlane.f32.xlu0 %v314
        %v316 = vpop.xlane.xlu0 %315
        %v317 = vsub.f32 %v312, %v316
        %v318 = vmul.f32 %v317, 1.442695
        %v319 = vpow.pop %v318
        %v320 = vsel %vm313, %v319, 0.0
        %321 = vadd.xlane.f32.xlu0 %v320
        %v322 = vpop.xlane.xlu0 %321
        %v323 = vrcp.pop %v322
        %v324 = vmul.f32 1.0, %v323
        %v325 = vmul.f32 %v319, %v324
        %v326 = vlog2.pop %v322
        %v327 = vmul.f32 %v326, 0.6931472
        %v328 = vsub.f32 %v317, %v327
        %v329 = vmul.f32 %v325, %v328
        %v330 = vsel %vm313, %v329, 0.0
        %331 = vadd.xlane.f32.xlu0 %v330
        %v332 = vpop.xlane.xlu0 %331
        %v333 = vld [vmem:[%s301] sm:$0xff]
        %v334 = vld [vmem:[%s239] sm:$0xff]
        %v335 = vadd.f32 %v334, %v311
        %v336 = vsel %vm313, %v335, -inf
        %337 = vmax.xlane.f32.xlu0 %v336
        %v338 = vpop.xlane.xlu0 %337
        %v339 = vsub.f32 %v335, %v338
        %v340 = vmul.f32 %v339, 1.442695
        %v341 = vpow.pop %v340
        %v343 = vsel %vm313, %v341, 0
        %345 = vmatprep.subr.mxu0 0.0
        %346 = vmatpush1.msra.mxu0 0.0
        %347 = vmatprep.subr.mxu0 0.0
        %348 = vmatpush1.msra.mxu0 0.0
        %349 = vmatprep.subr.mxu0 0.0
        %350 = vmatpush1.msra.mxu0 0.0
        %351 = vmatprep.subr.mxu0 0.0
        %352 = vmatpush1.msra.mxu0 0.0
        %353 = vmatprep.subr.mxu0 0.0
        %354 = vmatpush1.msra.mxu0 0.0
        %355 = vmatprep.subr.mxu0 0.0
        %356 = vmatpush1.msra.mxu0 0.0
        %357 = vmatprep.subr.mxu0 0.0
        %358 = vmatpush1.msra.mxu0 0.0
        %359 = vmatprep.subr.mxu0 0.0
        %360 = vmatpush1.msra.mxu0 0.0
        %361 = vmatprep.subr.mxu0 0.0
        %362 = vmatpush1.msra.mxu0 0.0
        %363 = vmatprep.subr.mxu0 0.0
        %364 = vmatpush1.msra.mxu0 0.0
        %365 = vmatprep.subr.mxu0 0.0
        %366 = vmatpush1.msra.mxu0 0.0
        %367 = vmatprep.subr.mxu0 0.0
        %368 = vmatpush1.msra.mxu0 0.0
        %369 = vmatprep.subr.mxu0 0.0
        %370 = vmatpush1.msra.mxu0 1.0
        %371 = vmatprep.subr.mxu0 0.0
        %372 = vmatpush1.msra.mxu0 1.0
        %373 = vmatprep.subr.mxu0 0.0
        %374 = vmatpush1.msra.mxu0 1.0
        %375 = vmatprep.subr.mxu0 0.0
        %376 = vmatpush1.msra.mxu0 1.0
        %377 = vmatprep.subr.mxu0 0.0
        %378 = vmatpush2.msra.mxu0 0.0
        %379 = vmatprep.subr.mxu0 0.0
        %380 = vmatpush2.msra.mxu0 0.0
        %381 = vmatprep.subr.mxu0 0.0
        %382 = vmatpush2.msra.mxu0 0.0
        %383 = vmatprep.subr.mxu0 0.0
        %384 = vmatpush2.msra.mxu0 0.0
        %385 = vmatprep.subr.mxu0 0.0
        %386 = vmatpush2.msra.mxu0 0.0
        %387 = vmatprep.subr.mxu0 0.0
        %388 = vmatpush2.msra.mxu0 0.0
        %389 = vmatprep.subr.mxu0 0.0
        %390 = vmatpush2.msra.mxu0 0.0
        %391 = vmatprep.subr.mxu0 0.0
        %392 = vmatpush2.msra.mxu0 0.0
        %393 = vmatprep.subr.mxu0 0.0
        %394 = vmatpush2.msra.mxu0 0.0
        %395 = vmatprep.subr.mxu0 0.0
        %396 = vmatpush2.msra.mxu0 0.0
        %397 = vmatprep.subr.mxu0 0.0
        %398 = vmatpush2.msra.mxu0 0.0
        %399 = vmatprep.subr.mxu0 0.0
        %400 = vmatpush2.msra.mxu0 0.0
        %401 = vmatprep.subr.mxu0 0.0
        %402 = vmatpush2.msra.mxu0 0.0
        %403 = vmatprep.subr.mxu0 0.0
        %404 = vmatpush2.msra.mxu0 0.0
        %405 = vmatprep.subr.mxu0 0.0
        %406 = vmatpush2.msra.mxu0 0.0
        %407 = vmatprep.subr.mxu0 0.0
        %408 = vmatpush2.msra.mxu0 0.0
        %409 = vmatprep.mubr.f32.mxu0 0.0
        %v410 = vand.u32 %v343, 4294901760
        %v411 = vsub.f32 %v343, %v410
        %v412 = vand.u32 %v411, 4294901760
        %v413 = vsub.f32 %v411, %v412
        %v414 = vand.u32 %v413, 4294901760
        %415 = vmatmul.mubr.f32.gmra.mxu0 %v414
        %v416 = vpop.f32.mrf.mxu0
        %v417 = vadd.f32 0.0, %v416
        %v418 = vpop.f32.mrf.mxu0
        %419 = vdwg.mxu0
        %420 = vmatprep.subr.mxu0 0.0
        %421 = vmatpush1.msra.mxu0 0.0
        %422 = vmatprep.subr.mxu0 0.0
        %423 = vmatpush1.msra.mxu0 0.0
        %424 = vmatprep.subr.mxu0 0.0
        %425 = vmatpush1.msra.mxu0 0.0
        %426 = vmatprep.subr.mxu0 0.0
        %427 = vmatpush1.msra.mxu0 0.0
        %428 = vmatprep.subr.mxu0 0.0
        %429 = vmatpush1.msra.mxu0 0.0
        %430 = vmatprep.subr.mxu0 0.0
        %431 = vmatpush1.msra.mxu0 0.0
        %432 = vmatprep.subr.mxu0 0.0
        %433 = vmatpush1.msra.mxu0 0.0
        %434 = vmatprep.subr.mxu0 0.0
        %435 = vmatpush1.msra.mxu0 0.0
        %436 = vmatprep.subr.mxu0 0.0
        %437 = vmatpush1.msra.mxu0 0.0
        %438 = vmatprep.subr.mxu0 0.0
        %439 = vmatpush1.msra.mxu0 0.0
        %440 = vmatprep.subr.mxu0 0.0
        %441 = vmatpush1.msra.mxu0 0.0
        %442 = vmatprep.subr.mxu0 0.0
        %443 = vmatpush1.msra.mxu0 0.0
        %444 = vmatprep.subr.mxu0 0.0
        %445 = vmatpush1.msra.mxu0 0.0
        %446 = vmatprep.subr.mxu0 0.0
        %447 = vmatpush1.msra.mxu0 0.0
        %448 = vmatprep.subr.mxu0 0.0
        %449 = vmatpush1.msra.mxu0 0.0
        %450 = vmatprep.subr.mxu0 0.0
        %451 = vmatpush1.msra.mxu0 0.0
        %452 = vmatprep.subr.mxu0 0.0
        %453 = vmatpush2.msra.mxu0 0.0
        %454 = vmatprep.subr.mxu0 0.0
        %455 = vmatpush2.msra.mxu0 0.0
        %456 = vmatprep.subr.mxu0 0.0
        %457 = vmatpush2.msra.mxu0 0.0
        %458 = vmatprep.subr.mxu0 0.0
        %459 = vmatpush2.msra.mxu0 0.0
        %460 = vmatprep.subr.mxu0 0.0
        %461 = vmatpush2.msra.mxu0 0.0
        %462 = vmatprep.subr.mxu0 0.0
        %463 = vmatpush2.msra.mxu0 0.0
        %464 = vmatprep.subr.mxu0 0.0
        %465 = vmatpush2.msra.mxu0 0.0
        %466 = vmatprep.subr.mxu0 0.0
        %467 = vmatpush2.msra.mxu0 0.0
        %468 = vmatprep.subr.mxu0 0.0
        %469 = vmatpush2.msra.mxu0 0.0
        %470 = vmatprep.subr.mxu0 0.0
        %471 = vmatpush2.msra.mxu0 0.0
        %472 = vmatprep.subr.mxu0 0.0
        %473 = vmatpush2.msra.mxu0 0.0
        %474 = vmatprep.subr.mxu0 0.0
        %475 = vmatpush2.msra.mxu0 0.0
        %476 = vmatprep.subr.mxu0 0.0
        %477 = vmatpush2.msra.mxu0 0.0
        %478 = vmatprep.subr.mxu0 0.0
        %479 = vmatpush2.msra.mxu0 0.0
        %480 = vmatprep.subr.mxu0 0.0
        %481 = vmatpush2.msra.mxu0 0.0
        %482 = vmatprep.subr.mxu0 0.0
        %483 = vmatpush2.msra.mxu0 0.0
        %484 = vmatprep.mubr.f32.mxu0 0.0
        %v485 = vand.u32 %v343, 4294901760
        %486 = vmatmul.mubr.f32.gmra.mxu0 %v485
        %v487 = vpop.f32.mrf.mxu0
        %v488 = vadd.f32 %v417, %v487
        %v489 = vpop.f32.mrf.mxu0
        %490 = vdwg.mxu0
        %491 = vmatprep.subr.mxu0 0.0
        %492 = vmatpush1.msra.mxu0 0.0
        %493 = vmatprep.subr.mxu0 0.0
        %494 = vmatpush1.msra.mxu0 0.0
        %495 = vmatprep.subr.mxu0 0.0
        %496 = vmatpush1.msra.mxu0 0.0
        %497 = vmatprep.subr.mxu0 0.0
        %498 = vmatpush1.msra.mxu0 0.0
        %499 = vmatprep.subr.mxu0 0.0
        %500 = vmatpush1.msra.mxu0 0.0
        %501 = vmatprep.subr.mxu0 0.0
        %502 = vmatpush1.msra.mxu0 0.0
        %503 = vmatprep.subr.mxu0 0.0
        %504 = vmatpush1.msra.mxu0 0.0
        %505 = vmatprep.subr.mxu0 0.0
        %506 = vmatpush1.msra.mxu0 0.0
        %507 = vmatprep.subr.mxu0 0.0
        %508 = vmatpush1.msra.mxu0 0.0
        %509 = vmatprep.subr.mxu0 0.0
        %510 = vmatpush1.msra.mxu0 0.0
        %511 = vmatprep.subr.mxu0 0.0
        %512 = vmatpush1.msra.mxu0 0.0
        %513 = vmatprep.subr.mxu0 0.0
        %514 = vmatpush1.msra.mxu0 0.0
        %515 = vmatprep.subr.mxu0 0.0
        %516 = vmatpush1.msra.mxu0 0.0
        %517 = vmatprep.subr.mxu0 0.0
        %518 = vmatpush1.msra.mxu0 0.0
        %519 = vmatprep.subr.mxu0 0.0
        %520 = vmatpush1.msra.mxu0 0.0
        %521 = vmatprep.subr.mxu0 0.0
        %522 = vmatpush1.msra.mxu0 0.0
        %523 = vmatprep.subr.mxu0 0.0
        %524 = vmatpush2.msra.mxu0 0.0
        %525 = vmatprep.subr.mxu0 0.0
        %526 = vmatpush2.msra.mxu0 0.0
        %527 = vmatprep.subr.mxu0 0.0
        %528 = vmatpush2.msra.mxu0 0.0
        %529 = vmatprep.subr.mxu0 0.0
        %530 = vmatpush2.msra.mxu0 0.0
        %531 = vmatprep.subr.mxu0 0.0
        %532 = vmatpush2.msra.mxu0 0.0
        %533 = vmatprep.subr.mxu0 0.0
        %534 = vmatpush2.msra.mxu0 0.0
        %535 = vmatprep.subr.mxu0 0.0
        %536 = vmatpush2.msra.mxu0 0.0
        %537 = vmatprep.subr.mxu0 0.0
        %538 = vmatpush2.msra.mxu0 0.0
        %539 = vmatprep.subr.mxu0 0.0
        %540 = vmatpush2.msra.mxu0 0.0
        %541 = vmatprep.subr.mxu0 0.0
        %542 = vmatpush2.msra.mxu0 0.0
        %543 = vmatprep.subr.mxu0 0.0
        %544 = vmatpush2.msra.mxu0 0.0
        %545 = vmatprep.subr.mxu0 0.0
        %546 = vmatpush2.msra.mxu0 0.0
        %547 = vmatprep.subr.mxu0 0.0
        %548 = vmatpush2.msra.mxu0 0.0
        %549 = vmatprep.subr.mxu0 0.0
        %550 = vmatpush2.msra.mxu0 0.0
        %551 = vmatprep.subr.mxu0 0.0
        %552 = vmatpush2.msra.mxu0 0.0
        %553 = vmatprep.subr.mxu0 0.0
        %554 = vmatpush2.msra.mxu0 0.0
        %555 = vmatprep.mubr.f32.mxu0 0.0
        %v556 = vand.u32 %v343, 4294901760
        %v557 = vsub.f32 %v343, %v556
        %558 = vmatmul.mubr.f32.gmra.mxu0 %v557
        %v559 = vpop.f32.mrf.mxu0
        %v560 = vadd.f32 %v488, %v559
        %v561 = vpop.f32.mrf.mxu0
        %562 = vdwg.mxu0
        %563 = vmatprep.subr.mxu0 0.0
        %564 = vmatpush1.msra.mxu0 0.0
        %565 = vmatprep.subr.mxu0 0.0
        %566 = vmatpush1.msra.mxu0 0.0
        %567 = vmatprep.subr.mxu0 0.0
        %568 = vmatpush1.msra.mxu0 0.0
        %569 = vmatprep.subr.mxu0 0.0
        %570 = vmatpush1.msra.mxu0 0.0
        %571 = vmatprep.subr.mxu0 0.0
        %572 = vmatpush1.msra.mxu0 0.0
        %573 = vmatprep.subr.mxu0 0.0
        %574 = vmatpush1.msra.mxu0 0.0
        %575 = vmatprep.subr.mxu0 0.0
        %576 = vmatpush1.msra.mxu0 0.0
        %577 = vmatprep.subr.mxu0 0.0
        %578 = vmatpush1.msra.mxu0 0.0
        %579 = vmatprep.subr.mxu0 0.0
        %580 = vmatpush1.msra.mxu0 0.0
        %581 = vmatprep.subr.mxu0 0.0
        %582 = vmatpush1.msra.mxu0 0.0
        %583 = vmatprep.subr.mxu0 0.0
        %584 = vmatpush1.msra.mxu0 0.0
        %585 = vmatprep.subr.mxu0 0.0
        %586 = vmatpush1.msra.mxu0 0.0
        %587 = vmatprep.subr.mxu0 0.0
        %588 = vmatpush1.msra.mxu0 1.0
        %589 = vmatprep.subr.mxu0 0.0
        %590 = vmatpush1.msra.mxu0 1.0
        %591 = vmatprep.subr.mxu0 0.0
        %592 = vmatpush1.msra.mxu0 1.0
        %593 = vmatprep.subr.mxu0 0.0
        %594 = vmatpush1.msra.mxu0 1.0
        %595 = vmatprep.subr.mxu0 0.0
        %596 = vmatpush2.msra.mxu0 0.0
        %597 = vmatprep.subr.mxu0 0.0
        %598 = vmatpush2.msra.mxu0 0.0
        %599 = vmatprep.subr.mxu0 0.0
        %600 = vmatpush2.msra.mxu0 0.0
        %601 = vmatprep.subr.mxu0 0.0
        %602 = vmatpush2.msra.mxu0 0.0
        %603 = vmatprep.subr.mxu0 0.0
        %604 = vmatpush2.msra.mxu0 0.0
        %605 = vmatprep.subr.mxu0 0.0
        %606 = vmatpush2.msra.mxu0 0.0
        %607 = vmatprep.subr.mxu0 0.0
        %608 = vmatpush2.msra.mxu0 0.0
        %609 = vmatprep.subr.mxu0 0.0
        %610 = vmatpush2.msra.mxu0 0.0
        %611 = vmatprep.subr.mxu0 0.0
        %612 = vmatpush2.msra.mxu0 0.0
        %613 = vmatprep.subr.mxu0 0.0
        %614 = vmatpush2.msra.mxu0 0.0
        %615 = vmatprep.subr.mxu0 0.0
        %616 = vmatpush2.msra.mxu0 0.0
        %617 = vmatprep.subr.mxu0 0.0
        %618 = vmatpush2.msra.mxu0 0.0
        %619 = vmatprep.subr.mxu0 0.0
        %620 = vmatpush2.msra.mxu0 0.0
        %621 = vmatprep.subr.mxu0 0.0
        %622 = vmatpush2.msra.mxu0 0.0
        %623 = vmatprep.subr.mxu0 0.0
        %624 = vmatpush2.msra.mxu0 0.0
        %625 = vmatprep.subr.mxu0 0.0
        %626 = vmatpush2.msra.mxu0 0.0
        %627 = vmatprep.mubr.f32.mxu0 0.0
        %v628 = vand.u32 %v343, 4294901760
        %v629 = vsub.f32 %v343, %v628
        %v630 = vand.u32 %v629, 4294901760
        %631 = vmatmul.mubr.f32.gmra.mxu0 %v630
        %v632 = vpop.f32.mrf.mxu0
        %v633 = vadd.f32 %v560, %v632
        %v634 = vpop.f32.mrf.mxu0
        %635 = vdwg.mxu0
        %636 = vmatprep.subr.mxu0 0.0
        %637 = vmatpush1.msra.mxu0 0.0
        %638 = vmatprep.subr.mxu0 0.0
        %639 = vmatpush1.msra.mxu0 0.0
        %640 = vmatprep.subr.mxu0 0.0
        %641 = vmatpush1.msra.mxu0 0.0
        %642 = vmatprep.subr.mxu0 0.0
        %643 = vmatpush1.msra.mxu0 0.0
        %644 = vmatprep.subr.mxu0 0.0
        %645 = vmatpush1.msra.mxu0 0.0
        %646 = vmatprep.subr.mxu0 0.0
        %647 = vmatpush1.msra.mxu0 0.0
        %648 = vmatprep.subr.mxu0 0.0
        %649 = vmatpush1.msra.mxu0 0.0
        %650 = vmatprep.subr.mxu0 0.0
        %651 = vmatpush1.msra.mxu0 0.0
        %652 = vmatprep.subr.mxu0 0.0
        %653 = vmatpush1.msra.mxu0 0.0
        %654 = vmatprep.subr.mxu0 0.0
        %655 = vmatpush1.msra.mxu0 0.0
        %656 = vmatprep.subr.mxu0 0.0
        %657 = vmatpush1.msra.mxu0 0.0
        %658 = vmatprep.subr.mxu0 0.0
        %659 = vmatpush1.msra.mxu0 0.0
        %660 = vmatprep.subr.mxu0 0.0
        %661 = vmatpush1.msra.mxu0 0.0
        %662 = vmatprep.subr.mxu0 0.0
        %663 = vmatpush1.msra.mxu0 0.0
        %664 = vmatprep.subr.mxu0 0.0
        %665 = vmatpush1.msra.mxu0 0.0
        %666 = vmatprep.subr.mxu0 0.0
        %667 = vmatpush1.msra.mxu0 0.0
        %668 = vmatprep.subr.mxu0 0.0
        %669 = vmatpush2.msra.mxu0 0.0
        %670 = vmatprep.subr.mxu0 0.0
        %671 = vmatpush2.msra.mxu0 0.0
        %672 = vmatprep.subr.mxu0 0.0
        %673 = vmatpush2.msra.mxu0 0.0
        %674 = vmatprep.subr.mxu0 0.0
        %675 = vmatpush2.msra.mxu0 0.0
        %676 = vmatprep.subr.mxu0 0.0
        %677 = vmatpush2.msra.mxu0 0.0
        %678 = vmatprep.subr.mxu0 0.0
        %679 = vmatpush2.msra.mxu0 0.0
        %680 = vmatprep.subr.mxu0 0.0
        %681 = vmatpush2.msra.mxu0 0.0
        %682 = vmatprep.subr.mxu0 0.0
        %683 = vmatpush2.msra.mxu0 0.0
        %684 = vmatprep.subr.mxu0 0.0
        %685 = vmatpush2.msra.mxu0 0.0
        %686 = vmatprep.subr.mxu0 0.0
        %687 = vmatpush2.msra.mxu0 0.0
        %688 = vmatprep.subr.mxu0 0.0
        %689 = vmatpush2.msra.mxu0 0.0
        %690 = vmatprep.subr.mxu0 0.0
        %691 = vmatpush2.msra.mxu0 0.0
        %692 = vmatprep.subr.mxu0 0.0
        %693 = vmatpush2.msra.mxu0 0.0
        %694 = vmatprep.subr.mxu0 0.0
        %695 = vmatpush2.msra.mxu0 0.0
        %696 = vmatprep.subr.mxu0 0.0
        %697 = vmatpush2.msra.mxu0 0.0
        %698 = vmatprep.subr.mxu0 0.0
        %699 = vmatpush2.msra.mxu0 0.0
        %700 = vmatprep.mubr.f32.mxu0 0.0
        %v701 = vand.u32 %v343, 4294901760
        %702 = vmatmul.mubr.f32.gmra.mxu0 %v701
        %v703 = vpop.f32.mrf.mxu0
        %v704 = vadd.f32 %v633, %v703
        %v705 = vpop.f32.mrf.mxu0
        %706 = vdwg.mxu0
        %707 = vmatprep.subr.mxu0 0.0
        %708 = vmatpush1.msra.mxu0 0.0
        %709 = vmatprep.subr.mxu0 0.0
        %710 = vmatpush1.msra.mxu0 0.0
        %711 = vmatprep.subr.mxu0 0.0
        %712 = vmatpush1.msra.mxu0 0.0
        %713 = vmatprep.subr.mxu0 0.0
        %714 = vmatpush1.msra.mxu0 0.0
        %715 = vmatprep.subr.mxu0 0.0
        %716 = vmatpush1.msra.mxu0 0.0
        %717 = vmatprep.subr.mxu0 0.0
        %718 = vmatpush1.msra.mxu0 0.0
        %719 = vmatprep.subr.mxu0 0.0
        %720 = vmatpush1.msra.mxu0 0.0
        %721 = vmatprep.subr.mxu0 0.0
        %722 = vmatpush1.msra.mxu0 0.0
        %723 = vmatprep.subr.mxu0 0.0
        %724 = vmatpush1.msra.mxu0 0.0
        %725 = vmatprep.subr.mxu0 0.0
        %726 = vmatpush1.msra.mxu0 0.0
        %727 = vmatprep.subr.mxu0 0.0
        %728 = vmatpush1.msra.mxu0 0.0
        %729 = vmatprep.subr.mxu0 0.0
        %730 = vmatpush1.msra.mxu0 0.0
        %731 = vmatprep.subr.mxu0 0.0
        %732 = vmatpush1.msra.mxu0 1.0
        %733 = vmatprep.subr.mxu0 0.0
        %734 = vmatpush1.msra.mxu0 1.0
        %735 = vmatprep.subr.mxu0 0.0
        %736 = vmatpush1.msra.mxu0 1.0
        %737 = vmatprep.subr.mxu0 0.0
        %738 = vmatpush1.msra.mxu0 1.0
        %739 = vmatprep.subr.mxu0 0.0
        %740 = vmatpush2.msra.mxu0 0.0
        %741 = vmatprep.subr.mxu0 0.0
        %742 = vmatpush2.msra.mxu0 0.0
        %743 = vmatprep.subr.mxu0 0.0
        %744 = vmatpush2.msra.mxu0 0.0
        %745 = vmatprep.subr.mxu0 0.0
        %746 = vmatpush2.msra.mxu0 0.0
        %747 = vmatprep.subr.mxu0 0.0
        %748 = vmatpush2.msra.mxu0 0.0
        %749 = vmatprep.subr.mxu0 0.0
        %750 = vmatpush2.msra.mxu0 0.0
        %751 = vmatprep.subr.mxu0 0.0
        %752 = vmatpush2.msra.mxu0 0.0
        %753 = vmatprep.subr.mxu0 0.0
        %754 = vmatpush2.msra.mxu0 0.0
        %755 = vmatprep.subr.mxu0 0.0
        %756 = vmatpush2.msra.mxu0 0.0
        %757 = vmatprep.subr.mxu0 0.0
        %758 = vmatpush2.msra.mxu0 0.0
        %759 = vmatprep.subr.mxu0 0.0
        %760 = vmatpush2.msra.mxu0 0.0
        %761 = vmatprep.subr.mxu0 0.0
        %762 = vmatpush2.msra.mxu0 0.0
        %763 = vmatprep.subr.mxu0 0.0
        %764 = vmatpush2.msra.mxu0 0.0
        %765 = vmatprep.subr.mxu0 0.0
        %766 = vmatpush2.msra.mxu0 0.0
        %767 = vmatprep.subr.mxu0 0.0
        %768 = vmatpush2.msra.mxu0 0.0
        %769 = vmatprep.subr.mxu0 0.0
        %770 = vmatpush2.msra.mxu0 0.0
        %771 = vmatprep.mubr.f32.mxu0 0.0
        %v772 = vand.u32 %v343, 4294901760
        %773 = vmatmul.mubr.f32.gmra.mxu0 %v772
        %v774 = vpop.f32.mrf.mxu0
        %v775 = vadd.f32 %v704, %v774
        %v776 = vpop.f32.mrf.mxu0
        %777 = vdwg.mxu0
        %v778 = vlog2.pop %v775
        %v779 = vmul.f32 %v778, 0.6931472
        %v780 = vmul.f32 %v325, %v335
        %v782 = vsel %vm313, %v780, 0
        %784 = vmatprep.subr.mxu0 0.0
        %785 = vmatpush1.msra.mxu0 0.0
        %786 = vmatprep.subr.mxu0 0.0
        %787 = vmatpush1.msra.mxu0 0.0
        %788 = vmatprep.subr.mxu0 0.0
        %789 = vmatpush1.msra.mxu0 0.0
        %790 = vmatprep.subr.mxu0 0.0
        %791 = vmatpush1.msra.mxu0 0.0
        %792 = vmatprep.subr.mxu0 0.0
        %793 = vmatpush1.msra.mxu0 0.0
        %794 = vmatprep.subr.mxu0 0.0
        %795 = vmatpush1.msra.mxu0 0.0
        %796 = vmatprep.subr.mxu0 0.0
        %797 = vmatpush1.msra.mxu0 0.0
        %798 = vmatprep.subr.mxu0 0.0
        %799 = vmatpush1.msra.mxu0 0.0
        %800 = vmatprep.subr.mxu0 0.0
        %801 = vmatpush1.msra.mxu0 0.0
        %802 = vmatprep.subr.mxu0 0.0
        %803 = vmatpush1.msra.mxu0 0.0
        %804 = vmatprep.subr.mxu0 0.0
        %805 = vmatpush1.msra.mxu0 0.0
        %806 = vmatprep.subr.mxu0 0.0
        %807 = vmatpush1.msra.mxu0 0.0
        %808 = vmatprep.subr.mxu0 0.0
        %809 = vmatpush1.msra.mxu0 1.0
        %810 = vmatprep.subr.mxu0 0.0
        %811 = vmatpush1.msra.mxu0 1.0
        %812 = vmatprep.subr.mxu0 0.0
        %813 = vmatpush1.msra.mxu0 1.0
        %814 = vmatprep.subr.mxu0 0.0
        %815 = vmatpush1.msra.mxu0 1.0
        %816 = vmatprep.subr.mxu0 0.0
        %817 = vmatpush2.msra.mxu0 0.0
        %818 = vmatprep.subr.mxu0 0.0
        %819 = vmatpush2.msra.mxu0 0.0
        %820 = vmatprep.subr.mxu0 0.0
        %821 = vmatpush2.msra.mxu0 0.0
        %822 = vmatprep.subr.mxu0 0.0
        %823 = vmatpush2.msra.mxu0 0.0
        %824 = vmatprep.subr.mxu0 0.0
        %825 = vmatpush2.msra.mxu0 0.0
        %826 = vmatprep.subr.mxu0 0.0
        %827 = vmatpush2.msra.mxu0 0.0
        %828 = vmatprep.subr.mxu0 0.0
        %829 = vmatpush2.msra.mxu0 0.0
        %830 = vmatprep.subr.mxu0 0.0
        %831 = vmatpush2.msra.mxu0 0.0
        %832 = vmatprep.subr.mxu0 0.0
        %833 = vmatpush2.msra.mxu0 0.0
        %834 = vmatprep.subr.mxu0 0.0
        %835 = vmatpush2.msra.mxu0 0.0
        %836 = vmatprep.subr.mxu0 0.0
        %837 = vmatpush2.msra.mxu0 0.0
        %838 = vmatprep.subr.mxu0 0.0
        %839 = vmatpush2.msra.mxu0 0.0
        %840 = vmatprep.subr.mxu0 0.0
        %841 = vmatpush2.msra.mxu0 0.0
        %842 = vmatprep.subr.mxu0 0.0
        %843 = vmatpush2.msra.mxu0 0.0
        %844 = vmatprep.subr.mxu0 0.0
        %845 = vmatpush2.msra.mxu0 0.0
        %846 = vmatprep.subr.mxu0 0.0
        %847 = vmatpush2.msra.mxu0 0.0
        %848 = vmatprep.mubr.f32.mxu0 0.0
        %v849 = vand.u32 %v782, 4294901760
        %v850 = vsub.f32 %v782, %v849
        %v851 = vand.u32 %v850, 4294901760
        %v852 = vsub.f32 %v850, %v851
        %v853 = vand.u32 %v852, 4294901760
        %854 = vmatmul.mubr.f32.gmra.mxu0 %v853
        %v855 = vpop.f32.mrf.mxu0
        %v856 = vadd.f32 0.0, %v855
        %v857 = vpop.f32.mrf.mxu0
        %858 = vdwg.mxu0
        %859 = vmatprep.subr.mxu0 0.0
        %860 = vmatpush1.msra.mxu0 0.0
        %861 = vmatprep.subr.mxu0 0.0
        %862 = vmatpush1.msra.mxu0 0.0
        %863 = vmatprep.subr.mxu0 0.0
        %864 = vmatpush1.msra.mxu0 0.0
        %865 = vmatprep.subr.mxu0 0.0
        %866 = vmatpush1.msra.mxu0 0.0
        %867 = vmatprep.subr.mxu0 0.0
        %868 = vmatpush1.msra.mxu0 0.0
        %869 = vmatprep.subr.mxu0 0.0
        %870 = vmatpush1.msra.mxu0 0.0
        %871 = vmatprep.subr.mxu0 0.0
        %872 = vmatpush1.msra.mxu0 0.0
        %873 = vmatprep.subr.mxu0 0.0
        %874 = vmatpush1.msra.mxu0 0.0
        %875 = vmatprep.subr.mxu0 0.0
        %876 = vmatpush1.msra.mxu0 0.0
        %877 = vmatprep.subr.mxu0 0.0
        %878 = vmatpush1.msra.mxu0 0.0
        %879 = vmatprep.subr.mxu0 0.0
        %880 = vmatpush1.msra.mxu0 0.0
        %881 = vmatprep.subr.mxu0 0.0
        %882 = vmatpush1.msra.mxu0 0.0
        %883 = vmatprep.subr.mxu0 0.0
        %884 = vmatpush1.msra.mxu0 0.0
        %885 = vmatprep.subr.mxu0 0.0
        %886 = vmatpush1.msra.mxu0 0.0
        %887 = vmatprep.subr.mxu0 0.0
        %888 = vmatpush1.msra.mxu0 0.0
        %889 = vmatprep.subr.mxu0 0.0
        %890 = vmatpush1.msra.mxu0 0.0
        %891 = vmatprep.subr.mxu0 0.0
        %892 = vmatpush2.msra.mxu0 0.0
        %893 = vmatprep.subr.mxu0 0.0
        %894 = vmatpush2.msra.mxu0 0.0
        %895 = vmatprep.subr.mxu0 0.0
        %896 = vmatpush2.msra.mxu0 0.0
        %897 = vmatprep.subr.mxu0 0.0
        %898 = vmatpush2.msra.mxu0 0.0
        %899 = vmatprep.subr.mxu0 0.0
        %900 = vmatpush2.msra.mxu0 0.0
        %901 = vmatprep.subr.mxu0 0.0
        %902 = vmatpush2.msra.mxu0 0.0
        %903 = vmatprep.subr.mxu0 0.0
        %904 = vmatpush2.msra.mxu0 0.0
        %905 = vmatprep.subr.mxu0 0.0
        %906 = vmatpush2.msra.mxu0 0.0
        %907 = vmatprep.subr.mxu0 0.0
        %908 = vmatpush2.msra.mxu0 0.0
        %909 = vmatprep.subr.mxu0 0.0
        %910 = vmatpush2.msra.mxu0 0.0
        %911 = vmatprep.subr.mxu0 0.0
        %912 = vmatpush2.msra.mxu0 0.0
        %913 = vmatprep.subr.mxu0 0.0
        %914 = vmatpush2.msra.mxu0 0.0
        %915 = vmatprep.subr.mxu0 0.0
        %916 = vmatpush2.msra.mxu0 0.0
        %917 = vmatprep.subr.mxu0 0.0
        %918 = vmatpush2.msra.mxu0 0.0
        %919 = vmatprep.subr.mxu0 0.0
        %920 = vmatpush2.msra.mxu0 0.0
        %921 = vmatprep.subr.mxu0 0.0
        %922 = vmatpush2.msra.mxu0 0.0
        %923 = vmatprep.mubr.f32.mxu0 0.0
        %v924 = vand.u32 %v782, 4294901760
        %925 = vmatmul.mubr.f32.gmra.mxu0 %v924
        %v926 = vpop.f32.mrf.mxu0
        %v927 = vadd.f32 %v856, %v926
        %v928 = vpop.f32.mrf.mxu0
        %929 = vdwg.mxu0
        %930 = vmatprep.subr.mxu0 0.0
        %931 = vmatpush1.msra.mxu0 0.0
        %932 = vmatprep.subr.mxu0 0.0
        %933 = vmatpush1.msra.mxu0 0.0
        %934 = vmatprep.subr.mxu0 0.0
        %935 = vmatpush1.msra.mxu0 0.0
        %936 = vmatprep.subr.mxu0 0.0
        %937 = vmatpush1.msra.mxu0 0.0
        %938 = vmatprep.subr.mxu0 0.0
        %939 = vmatpush1.msra.mxu0 0.0
        %940 = vmatprep.subr.mxu0 0.0
        %941 = vmatpush1.msra.mxu0 0.0
        %942 = vmatprep.subr.mxu0 0.0
        %943 = vmatpush1.msra.mxu0 0.0
        %944 = vmatprep.subr.mxu0 0.0
        %945 = vmatpush1.msra.mxu0 0.0
        %946 = vmatprep.subr.mxu0 0.0
        %947 = vmatpush1.msra.mxu0 0.0
        %948 = vmatprep.subr.mxu0 0.0
        %949 = vmatpush1.msra.mxu0 0.0
        %950 = vmatprep.subr.mxu0 0.0
        %951 = vmatpush1.msra.mxu0 0.0
        %952 = vmatprep.subr.mxu0 0.0
        %953 = vmatpush1.msra.mxu0 0.0
        %954 = vmatprep.subr.mxu0 0.0
        %955 = vmatpush1.msra.mxu0 0.0
        %956 = vmatprep.subr.mxu0 0.0
        %957 = vmatpush1.msra.mxu0 0.0
        %958 = vmatprep.subr.mxu0 0.0
        %959 = vmatpush1.msra.mxu0 0.0
        %960 = vmatprep.subr.mxu0 0.0
        %961 = vmatpush1.msra.mxu0 0.0
        %962 = vmatprep.subr.mxu0 0.0
        %963 = vmatpush2.msra.mxu0 0.0
        %964 = vmatprep.subr.mxu0 0.0
        %965 = vmatpush2.msra.mxu0 0.0
        %966 = vmatprep.subr.mxu0 0.0
        %967 = vmatpush2.msra.mxu0 0.0
        %968 = vmatprep.subr.mxu0 0.0
        %969 = vmatpush2.msra.mxu0 0.0
        %970 = vmatprep.subr.mxu0 0.0
        %971 = vmatpush2.msra.mxu0 0.0
        %972 = vmatprep.subr.mxu0 0.0
        %973 = vmatpush2.msra.mxu0 0.0
        %974 = vmatprep.subr.mxu0 0.0
        %975 = vmatpush2.msra.mxu0 0.0
        %976 = vmatprep.subr.mxu0 0.0
        %977 = vmatpush2.msra.mxu0 0.0
        %978 = vmatprep.subr.mxu0 0.0
        %979 = vmatpush2.msra.mxu0 0.0
        %980 = vmatprep.subr.mxu0 0.0
        %981 = vmatpush2.msra.mxu0 0.0
        %982 = vmatprep.subr.mxu0 0.0
        %983 = vmatpush2.msra.mxu0 0.0
        %984 = vmatprep.subr.mxu0 0.0
        %985 = vmatpush2.msra.mxu0 0.0
        %986 = vmatprep.subr.mxu0 0.0
        %987 = vmatpush2.msra.mxu0 0.0
        %988 = vmatprep.subr.mxu0 0.0
        %989 = vmatpush2.msra.mxu0 0.0
        %990 = vmatprep.subr.mxu0 0.0
        %991 = vmatpush2.msra.mxu0 0.0
        %992 = vmatprep.subr.mxu0 0.0
        %993 = vmatpush2.msra.mxu0 0.0
        %994 = vmatprep.mubr.f32.mxu0 0.0
        %v995 = vand.u32 %v782, 4294901760
        %v996 = vsub.f32 %v782, %v995
        %997 = vmatmul.mubr.f32.gmra.mxu0 %v996
        %v998 = vpop.f32.mrf.mxu0
        %v999 = vadd.f32 %v927, %v998
        %v1000 = vpop.f32.mrf.mxu0
        %1001 = vdwg.mxu0
        %1002 = vmatprep.subr.mxu0 0.0
        %1003 = vmatpush1.msra.mxu0 0.0
        %1004 = vmatprep.subr.mxu0 0.0
        %1005 = vmatpush1.msra.mxu0 0.0
        %1006 = vmatprep.subr.mxu0 0.0
        %1007 = vmatpush1.msra.mxu0 0.0
        %1008 = vmatprep.subr.mxu0 0.0
        %1009 = vmatpush1.msra.mxu0 0.0
        %1010 = vmatprep.subr.mxu0 0.0
        %1011 = vmatpush1.msra.mxu0 0.0
        %1012 = vmatprep.subr.mxu0 0.0
        %1013 = vmatpush1.msra.mxu0 0.0
        %1014 = vmatprep.subr.mxu0 0.0
        %1015 = vmatpush1.msra.mxu0 0.0
        %1016 = vmatprep.subr.mxu0 0.0
        %1017 = vmatpush1.msra.mxu0 0.0
        %1018 = vmatprep.subr.mxu0 0.0
        %1019 = vmatpush1.msra.mxu0 0.0
        %1020 = vmatprep.subr.mxu0 0.0
        %1021 = vmatpush1.msra.mxu0 0.0
        %1022 = vmatprep.subr.mxu0 0.0
        %1023 = vmatpush1.msra.mxu0 0.0
        %1024 = vmatprep.subr.mxu0 0.0
        %1025 = vmatpush1.msra.mxu0 0.0
        %1026 = vmatprep.subr.mxu0 0.0
        %1027 = vmatpush1.msra.mxu0 1.0
        %1028 = vmatprep.subr.mxu0 0.0
        %1029 = vmatpush1.msra.mxu0 1.0
        %1030 = vmatprep.subr.mxu0 0.0
        %1031 = vmatpush1.msra.mxu0 1.0
        %1032 = vmatprep.subr.mxu0 0.0
        %1033 = vmatpush1.msra.mxu0 1.0
        %1034 = vmatprep.subr.mxu0 0.0
        %1035 = vmatpush2.msra.mxu0 0.0
        %1036 = vmatprep.subr.mxu0 0.0
        %1037 = vmatpush2.msra.mxu0 0.0
        %1038 = vmatprep.subr.mxu0 0.0
        %1039 = vmatpush2.msra.mxu0 0.0
        %1040 = vmatprep.subr.mxu0 0.0
        %1041 = vmatpush2.msra.mxu0 0.0
        %1042 = vmatprep.subr.mxu0 0.0
        %1043 = vmatpush2.msra.mxu0 0.0
        %1044 = vmatprep.subr.mxu0 0.0
        %1045 = vmatpush2.msra.mxu0 0.0
        %1046 = vmatprep.subr.mxu0 0.0
        %1047 = vmatpush2.msra.mxu0 0.0
        %1048 = vmatprep.subr.mxu0 0.0
        %1049 = vmatpush2.msra.mxu0 0.0
        %1050 = vmatprep.subr.mxu0 0.0
        %1051 = vmatpush2.msra.mxu0 0.0
        %1052 = vmatprep.subr.mxu0 0.0
        %1053 = vmatpush2.msra.mxu0 0.0
        %1054 = vmatprep.subr.mxu0 0.0
        %1055 = vmatpush2.msra.mxu0 0.0
        %1056 = vmatprep.subr.mxu0 0.0
        %1057 = vmatpush2.msra.mxu0 0.0
        %1058 = vmatprep.subr.mxu0 0.0
        %1059 = vmatpush2.msra.mxu0 0.0
        %1060 = vmatprep.subr.mxu0 0.0
        %1061 = vmatpush2.msra.mxu0 0.0
        %1062 = vmatprep.subr.mxu0 0.0
        %1063 = vmatpush2.msra.mxu0 0.0
        %1064 = vmatprep.subr.mxu0 0.0
        %1065 = vmatpush2.msra.mxu0 0.0
        %1066 = vmatprep.mubr.f32.mxu0 0.0
        %v1067 = vand.u32 %v782, 4294901760
        %v1068 = vsub.f32 %v782, %v1067
        %v1069 = vand.u32 %v1068, 4294901760
        %1070 = vmatmul.mubr.f32.gmra.mxu0 %v1069
        %v1071 = vpop.f32.mrf.mxu0
        %v1072 = vadd.f32 %v999, %v1071
        %v1073 = vpop.f32.mrf.mxu0
        %1074 = vdwg.mxu0
        %1075 = vmatprep.subr.mxu0 0.0
        %1076 = vmatpush1.msra.mxu0 0.0
        %1077 = vmatprep.subr.mxu0 0.0
        %1078 = vmatpush1.msra.mxu0 0.0
        %1079 = vmatprep.subr.mxu0 0.0
        %1080 = vmatpush1.msra.mxu0 0.0
        %1081 = vmatprep.subr.mxu0 0.0
        %1082 = vmatpush1.msra.mxu0 0.0
        %1083 = vmatprep.subr.mxu0 0.0
        %1084 = vmatpush1.msra.mxu0 0.0
        %1085 = vmatprep.subr.mxu0 0.0
        %1086 = vmatpush1.msra.mxu0 0.0
        %1087 = vmatprep.subr.mxu0 0.0
        %1088 = vmatpush1.msra.mxu0 0.0
        %1089 = vmatprep.subr.mxu0 0.0
        %1090 = vmatpush1.msra.mxu0 0.0
        %1091 = vmatprep.subr.mxu0 0.0
        %1092 = vmatpush1.msra.mxu0 0.0
        %1093 = vmatprep.subr.mxu0 0.0
        %1094 = vmatpush1.msra.mxu0 0.0
        %1095 = vmatprep.subr.mxu0 0.0
        %1096 = vmatpush1.msra.mxu0 0.0
        %1097 = vmatprep.subr.mxu0 0.0
        %1098 = vmatpush1.msra.mxu0 0.0
        %1099 = vmatprep.subr.mxu0 0.0
        %1100 = vmatpush1.msra.mxu0 0.0
        %1101 = vmatprep.subr.mxu0 0.0
        %1102 = vmatpush1.msra.mxu0 0.0
        %1103 = vmatprep.subr.mxu0 0.0
        %1104 = vmatpush1.msra.mxu0 0.0
        %1105 = vmatprep.subr.mxu0 0.0
        %1106 = vmatpush1.msra.mxu0 0.0
        %1107 = vmatprep.subr.mxu0 0.0
        %1108 = vmatpush2.msra.mxu0 0.0
        %1109 = vmatprep.subr.mxu0 0.0
        %1110 = vmatpush2.msra.mxu0 0.0
        %1111 = vmatprep.subr.mxu0 0.0
        %1112 = vmatpush2.msra.mxu0 0.0
        %1113 = vmatprep.subr.mxu0 0.0
        %1114 = vmatpush2.msra.mxu0 0.0
        %1115 = vmatprep.subr.mxu0 0.0
        %1116 = vmatpush2.msra.mxu0 0.0
        %1117 = vmatprep.subr.mxu0 0.0
        %1118 = vmatpush2.msra.mxu0 0.0
        %1119 = vmatprep.subr.mxu0 0.0
        %1120 = vmatpush2.msra.mxu0 0.0
        %1121 = vmatprep.subr.mxu0 0.0
        %1122 = vmatpush2.msra.mxu0 0.0
        %1123 = vmatprep.subr.mxu0 0.0
        %1124 = vmatpush2.msra.mxu0 0.0
        %1125 = vmatprep.subr.mxu0 0.0
        %1126 = vmatpush2.msra.mxu0 0.0
        %1127 = vmatprep.subr.mxu0 0.0
        %1128 = vmatpush2.msra.mxu0 0.0
        %1129 = vmatprep.subr.mxu0 0.0
        %1130 = vmatpush2.msra.mxu0 0.0
        %1131 = vmatprep.subr.mxu0 0.0
        %1132 = vmatpush2.msra.mxu0 0.0
        %1133 = vmatprep.subr.mxu0 0.0
        %1134 = vmatpush2.msra.mxu0 0.0
        %1135 = vmatprep.subr.mxu0 0.0
        %1136 = vmatpush2.msra.mxu0 0.0
        %1137 = vmatprep.subr.mxu0 0.0
        %1138 = vmatpush2.msra.mxu0 0.0
        %1139 = vmatprep.mubr.f32.mxu0 0.0
        %v1140 = vand.u32 %v782, 4294901760
        %1141 = vmatmul.mubr.f32.gmra.mxu0 %v1140
        %v1142 = vpop.f32.mrf.mxu0
        %v1143 = vadd.f32 %v1072, %v1142
        %v1144 = vpop.f32.mrf.mxu0
        %1145 = vdwg.mxu0
        %1146 = vmatprep.subr.mxu0 0.0
        %1147 = vmatpush1.msra.mxu0 0.0
        %1148 = vmatprep.subr.mxu0 0.0
        %1149 = vmatpush1.msra.mxu0 0.0
        %1150 = vmatprep.subr.mxu0 0.0
        %1151 = vmatpush1.msra.mxu0 0.0
        %1152 = vmatprep.subr.mxu0 0.0
        %1153 = vmatpush1.msra.mxu0 0.0
        %1154 = vmatprep.subr.mxu0 0.0
        %1155 = vmatpush1.msra.mxu0 0.0
        %1156 = vmatprep.subr.mxu0 0.0
        %1157 = vmatpush1.msra.mxu0 0.0
        %1158 = vmatprep.subr.mxu0 0.0
        %1159 = vmatpush1.msra.mxu0 0.0
        %1160 = vmatprep.subr.mxu0 0.0
        %1161 = vmatpush1.msra.mxu0 0.0
        %1162 = vmatprep.subr.mxu0 0.0
        %1163 = vmatpush1.msra.mxu0 0.0
        %1164 = vmatprep.subr.mxu0 0.0
        %1165 = vmatpush1.msra.mxu0 0.0
        %1166 = vmatprep.subr.mxu0 0.0
        %1167 = vmatpush1.msra.mxu0 0.0
        %1168 = vmatprep.subr.mxu0 0.0
        %1169 = vmatpush1.msra.mxu0 0.0
        %1170 = vmatprep.subr.mxu0 0.0
        %1171 = vmatpush1.msra.mxu0 1.0
        %1172 = vmatprep.subr.mxu0 0.0
        %1173 = vmatpush1.msra.mxu0 1.0
        %1174 = vmatprep.subr.mxu0 0.0
        %1175 = vmatpush1.msra.mxu0 1.0
        %1176 = vmatprep.subr.mxu0 0.0
        %1177 = vmatpush1.msra.mxu0 1.0
        %1178 = vmatprep.subr.mxu0 0.0
        %1179 = vmatpush2.msra.mxu0 0.0
        %1180 = vmatprep.subr.mxu0 0.0
        %1181 = vmatpush2.msra.mxu0 0.0
        %1182 = vmatprep.subr.mxu0 0.0
        %1183 = vmatpush2.msra.mxu0 0.0
        %1184 = vmatprep.subr.mxu0 0.0
        %1185 = vmatpush2.msra.mxu0 0.0
        %1186 = vmatprep.subr.mxu0 0.0
        %1187 = vmatpush2.msra.mxu0 0.0
        %1188 = vmatprep.subr.mxu0 0.0
        %1189 = vmatpush2.msra.mxu0 0.0
        %1190 = vmatprep.subr.mxu0 0.0
        %1191 = vmatpush2.msra.mxu0 0.0
        %1192 = vmatprep.subr.mxu0 0.0
        %1193 = vmatpush2.msra.mxu0 0.0
        %1194 = vmatprep.subr.mxu0 0.0
        %1195 = vmatpush2.msra.mxu0 0.0
        %1196 = vmatprep.subr.mxu0 0.0
        %1197 = vmatpush2.msra.mxu0 0.0
        %1198 = vmatprep.subr.mxu0 0.0
        %1199 = vmatpush2.msra.mxu0 0.0
        %1200 = vmatprep.subr.mxu0 0.0
        %1201 = vmatpush2.msra.mxu0 0.0
        %1202 = vmatprep.subr.mxu0 0.0
        %1203 = vmatpush2.msra.mxu0 0.0
        %1204 = vmatprep.subr.mxu0 0.0
        %1205 = vmatpush2.msra.mxu0 0.0
        %1206 = vmatprep.subr.mxu0 0.0
        %1207 = vmatpush2.msra.mxu0 0.0
        %1208 = vmatprep.subr.mxu0 0.0
        %1209 = vmatpush2.msra.mxu0 0.0
        %1210 = vmatprep.mubr.f32.mxu0 0.0
        %v1211 = vand.u32 %v782, 4294901760
        %1212 = vmatmul.mubr.f32.gmra.mxu0 %v1211
        %v1213 = vpop.f32.mrf.mxu0
        %v1214 = vadd.f32 %v1143, %v1213
        %v1215 = vpop.f32.mrf.mxu0
        %1216 = vdwg.mxu0
        %v1217 = vsub.f32 %v332, %v1214
        %v1218 = vadd.f32 %v1217, %v338
        %v1219 = vadd.f32 %v1218, %v779
        %v1220 = vmul.f32 %v1219, %v333
        %v1221 = vadd.f32 %v1220, 0.0
        %1223 = vrot.lane.b32.xlu0 %v311, 32
        %v1224 = vpop.permute.xlu0 %1223
        %v1226 = vadd.f32 %v334, %v1224
        %vm1227 = vcmask 523520
        %v1228 = vsel %vm1227, %v1226, -inf
        %1229 = vmax.xlane.f32.xlu0 %v1228
        %v1230 = vpop.xlane.xlu0 %1229
        %v1231 = vsub.f32 %v1226, %v1230
        %v1232 = vmul.f32 %v1231, 1.442695
        %v1233 = vpow.pop %v1232
        %1235 = vrot.lane.b32.xlu0 %v1233, 96
        %v1236 = vpop.permute.xlu0 %1235
        %v1237 = vsel %vm313, %v1236, 0
        %1239 = vmatprep.subr.mxu0 0.0
        %1240 = vmatpush1.msra.mxu0 0.0
        %1241 = vmatprep.subr.mxu0 0.0
        %1242 = vmatpush1.msra.mxu0 0.0
        %1243 = vmatprep.subr.mxu0 0.0
        %1244 = vmatpush1.msra.mxu0 0.0
        %1245 = vmatprep.subr.mxu0 0.0
        %1246 = vmatpush1.msra.mxu0 0.0
        %1247 = vmatprep.subr.mxu0 0.0
        %1248 = vmatpush1.msra.mxu0 0.0
        %1249 = vmatprep.subr.mxu0 0.0
        %1250 = vmatpush1.msra.mxu0 0.0
        %1251 = vmatprep.subr.mxu0 0.0
        %1252 = vmatpush1.msra.mxu0 0.0
        %1253 = vmatprep.subr.mxu0 0.0
        %1254 = vmatpush1.msra.mxu0 0.0
        %1255 = vmatprep.subr.mxu0 0.0
        %1256 = vmatpush1.msra.mxu0 0.0
        %1257 = vmatprep.subr.mxu0 0.0
        %1258 = vmatpush1.msra.mxu0 0.0
        %1259 = vmatprep.subr.mxu0 0.0
        %1260 = vmatpush1.msra.mxu0 0.0
        %1261 = vmatprep.subr.mxu0 0.0
        %1262 = vmatpush1.msra.mxu0 0.0
        %1263 = vmatprep.subr.mxu0 0.0
        %1264 = vmatpush1.msra.mxu0 1.0
        %1265 = vmatprep.subr.mxu0 0.0
        %1266 = vmatpush1.msra.mxu0 1.0
        %1267 = vmatprep.subr.mxu0 0.0
        %1268 = vmatpush1.msra.mxu0 1.0
        %1269 = vmatprep.subr.mxu0 0.0
        %1270 = vmatpush1.msra.mxu0 1.0
        %1271 = vmatprep.subr.mxu0 0.0
        %1272 = vmatpush2.msra.mxu0 0.0
        %1273 = vmatprep.subr.mxu0 0.0
        %1274 = vmatpush2.msra.mxu0 0.0
        %1275 = vmatprep.subr.mxu0 0.0
        %1276 = vmatpush2.msra.mxu0 0.0
        %1277 = vmatprep.subr.mxu0 0.0
        %1278 = vmatpush2.msra.mxu0 0.0
        %1279 = vmatprep.subr.mxu0 0.0
        %1280 = vmatpush2.msra.mxu0 0.0
        %1281 = vmatprep.subr.mxu0 0.0
        %1282 = vmatpush2.msra.mxu0 0.0
        %1283 = vmatprep.subr.mxu0 0.0
        %1284 = vmatpush2.msra.mxu0 0.0
        %1285 = vmatprep.subr.mxu0 0.0
        %1286 = vmatpush2.msra.mxu0 0.0
        %1287 = vmatprep.subr.mxu0 0.0
        %1288 = vmatpush2.msra.mxu0 0.0
        %1289 = vmatprep.subr.mxu0 0.0
        %1290 = vmatpush2.msra.mxu0 0.0
        %1291 = vmatprep.subr.mxu0 0.0
        %1292 = vmatpush2.msra.mxu0 0.0
        %1293 = vmatprep.subr.mxu0 0.0
        %1294 = vmatpush2.msra.mxu0 0.0
        %1295 = vmatprep.subr.mxu0 0.0
        %1296 = vmatpush2.msra.mxu0 0.0
        %1297 = vmatprep.subr.mxu0 0.0
        %1298 = vmatpush2.msra.mxu0 0.0
        %1299 = vmatprep.subr.mxu0 0.0
        %1300 = vmatpush2.msra.mxu0 0.0
        %1301 = vmatprep.subr.mxu0 0.0
        %1302 = vmatpush2.msra.mxu0 0.0
        %1303 = vmatprep.mubr.f32.mxu0 0.0
        %v1304 = vand.u32 %v1237, 4294901760
        %v1305 = vsub.f32 %v1237, %v1304
        %v1306 = vand.u32 %v1305, 4294901760
        %v1307 = vsub.f32 %v1305, %v1306
        %v1308 = vand.u32 %v1307, 4294901760
        %1309 = vmatmul.mubr.f32.gmra.mxu0 %v1308
        %v1310 = vpop.f32.mrf.mxu0
        %v1311 = vadd.f32 0.0, %v1310
        %v1312 = vpop.f32.mrf.mxu0
        %1313 = vdwg.mxu0
        %1314 = vmatprep.subr.mxu0 0.0
        %1315 = vmatpush1.msra.mxu0 0.0
        %1316 = vmatprep.subr.mxu0 0.0
        %1317 = vmatpush1.msra.mxu0 0.0
        %1318 = vmatprep.subr.mxu0 0.0
        %1319 = vmatpush1.msra.mxu0 0.0
        %1320 = vmatprep.subr.mxu0 0.0
        %1321 = vmatpush1.msra.mxu0 0.0
        %1322 = vmatprep.subr.mxu0 0.0
        %1323 = vmatpush1.msra.mxu0 0.0
        %1324 = vmatprep.subr.mxu0 0.0
        %1325 = vmatpush1.msra.mxu0 0.0
        %1326 = vmatprep.subr.mxu0 0.0
        %1327 = vmatpush1.msra.mxu0 0.0
        %1328 = vmatprep.subr.mxu0 0.0
        %1329 = vmatpush1.msra.mxu0 0.0
        %1330 = vmatprep.subr.mxu0 0.0
        %1331 = vmatpush1.msra.mxu0 0.0
        %1332 = vmatprep.subr.mxu0 0.0
        %1333 = vmatpush1.msra.mxu0 0.0
        %1334 = vmatprep.subr.mxu0 0.0
        %1335 = vmatpush1.msra.mxu0 0.0
        %1336 = vmatprep.subr.mxu0 0.0
        %1337 = vmatpush1.msra.mxu0 0.0
        %1338 = vmatprep.subr.mxu0 0.0
        %1339 = vmatpush1.msra.mxu0 0.0
        %1340 = vmatprep.subr.mxu0 0.0
        %1341 = vmatpush1.msra.mxu0 0.0
        %1342 = vmatprep.subr.mxu0 0.0
        %1343 = vmatpush1.msra.mxu0 0.0
        %1344 = vmatprep.subr.mxu0 0.0
        %1345 = vmatpush1.msra.mxu0 0.0
        %1346 = vmatprep.subr.mxu0 0.0
        %1347 = vmatpush2.msra.mxu0 0.0
        %1348 = vmatprep.subr.mxu0 0.0
        %1349 = vmatpush2.msra.mxu0 0.0
        %1350 = vmatprep.subr.mxu0 0.0
        %1351 = vmatpush2.msra.mxu0 0.0
        %1352 = vmatprep.subr.mxu0 0.0
        %1353 = vmatpush2.msra.mxu0 0.0
        %1354 = vmatprep.subr.mxu0 0.0
        %1355 = vmatpush2.msra.mxu0 0.0
        %1356 = vmatprep.subr.mxu0 0.0
        %1357 = vmatpush2.msra.mxu0 0.0
        %1358 = vmatprep.subr.mxu0 0.0
        %1359 = vmatpush2.msra.mxu0 0.0
        %1360 = vmatprep.subr.mxu0 0.0
        %1361 = vmatpush2.msra.mxu0 0.0
        %1362 = vmatprep.subr.mxu0 0.0
        %1363 = vmatpush2.msra.mxu0 0.0
        %1364 = vmatprep.subr.mxu0 0.0
        %1365 = vmatpush2.msra.mxu0 0.0
        %1366 = vmatprep.subr.mxu0 0.0
        %1367 = vmatpush2.msra.mxu0 0.0
        %1368 = vmatprep.subr.mxu0 0.0
        %1369 = vmatpush2.msra.mxu0 0.0
        %1370 = vmatprep.subr.mxu0 0.0
        %1371 = vmatpush2.msra.mxu0 0.0
        %1372 = vmatprep.subr.mxu0 0.0
        %1373 = vmatpush2.msra.mxu0 0.0
        %1374 = vmatprep.subr.mxu0 0.0
        %1375 = vmatpush2.msra.mxu0 0.0
        %1376 = vmatprep.subr.mxu0 0.0
        %1377 = vmatpush2.msra.mxu0 0.0
        %1378 = vmatprep.mubr.f32.mxu0 0.0
        %v1379 = vand.u32 %v1237, 4294901760
        %1380 = vmatmul.mubr.f32.gmra.mxu0 %v1379
        %v1381 = vpop.f32.mrf.mxu0
        %v1382 = vadd.f32 %v1311, %v1381
        %v1383 = vpop.f32.mrf.mxu0
        %1384 = vdwg.mxu0
        %1385 = vmatprep.subr.mxu0 0.0
        %1386 = vmatpush1.msra.mxu0 0.0
        %1387 = vmatprep.subr.mxu0 0.0
        %1388 = vmatpush1.msra.mxu0 0.0
        %1389 = vmatprep.subr.mxu0 0.0
        %1390 = vmatpush1.msra.mxu0 0.0
        %1391 = vmatprep.subr.mxu0 0.0
        %1392 = vmatpush1.msra.mxu0 0.0
        %1393 = vmatprep.subr.mxu0 0.0
        %1394 = vmatpush1.msra.mxu0 0.0
        %1395 = vmatprep.subr.mxu0 0.0
        %1396 = vmatpush1.msra.mxu0 0.0
        %1397 = vmatprep.subr.mxu0 0.0
        %1398 = vmatpush1.msra.mxu0 0.0
        %1399 = vmatprep.subr.mxu0 0.0
        %1400 = vmatpush1.msra.mxu0 0.0
        %1401 = vmatprep.subr.mxu0 0.0
        %1402 = vmatpush1.msra.mxu0 0.0
        %1403 = vmatprep.subr.mxu0 0.0
        %1404 = vmatpush1.msra.mxu0 0.0
        %1405 = vmatprep.subr.mxu0 0.0
        %1406 = vmatpush1.msra.mxu0 0.0
        %1407 = vmatprep.subr.mxu0 0.0
        %1408 = vmatpush1.msra.mxu0 0.0
        %1409 = vmatprep.subr.mxu0 0.0
        %1410 = vmatpush1.msra.mxu0 0.0
        %1411 = vmatprep.subr.mxu0 0.0
        %1412 = vmatpush1.msra.mxu0 0.0
        %1413 = vmatprep.subr.mxu0 0.0
        %1414 = vmatpush1.msra.mxu0 0.0
        %1415 = vmatprep.subr.mxu0 0.0
        %1416 = vmatpush1.msra.mxu0 0.0
        %1417 = vmatprep.subr.mxu0 0.0
        %1418 = vmatpush2.msra.mxu0 0.0
        %1419 = vmatprep.subr.mxu0 0.0
        %1420 = vmatpush2.msra.mxu0 0.0
        %1421 = vmatprep.subr.mxu0 0.0
        %1422 = vmatpush2.msra.mxu0 0.0
        %1423 = vmatprep.subr.mxu0 0.0
        %1424 = vmatpush2.msra.mxu0 0.0
        %1425 = vmatprep.subr.mxu0 0.0
        %1426 = vmatpush2.msra.mxu0 0.0
        %1427 = vmatprep.subr.mxu0 0.0
        %1428 = vmatpush2.msra.mxu0 0.0
        %1429 = vmatprep.subr.mxu0 0.0
        %1430 = vmatpush2.msra.mxu0 0.0
        %1431 = vmatprep.subr.mxu0 0.0
        %1432 = vmatpush2.msra.mxu0 0.0
        %1433 = vmatprep.subr.mxu0 0.0
        %1434 = vmatpush2.msra.mxu0 0.0
        %1435 = vmatprep.subr.mxu0 0.0
        %1436 = vmatpush2.msra.mxu0 0.0
        %1437 = vmatprep.subr.mxu0 0.0
        %1438 = vmatpush2.msra.mxu0 0.0
        %1439 = vmatprep.subr.mxu0 0.0
        %1440 = vmatpush2.msra.mxu0 0.0
        %1441 = vmatprep.subr.mxu0 0.0
        %1442 = vmatpush2.msra.mxu0 0.0
        %1443 = vmatprep.subr.mxu0 0.0
        %1444 = vmatpush2.msra.mxu0 0.0
        %1445 = vmatprep.subr.mxu0 0.0
        %1446 = vmatpush2.msra.mxu0 0.0
        %1447 = vmatprep.subr.mxu0 0.0
        %1448 = vmatpush2.msra.mxu0 0.0
        %1449 = vmatprep.mubr.f32.mxu0 0.0
        %v1450 = vand.u32 %v1237, 4294901760
        %v1451 = vsub.f32 %v1237, %v1450
        %1452 = vmatmul.mubr.f32.gmra.mxu0 %v1451
        %v1453 = vpop.f32.mrf.mxu0
        %v1454 = vadd.f32 %v1382, %v1453
        %v1455 = vpop.f32.mrf.mxu0
        %1456 = vdwg.mxu0
        %1457 = vmatprep.subr.mxu0 0.0
        %1458 = vmatpush1.msra.mxu0 0.0
        %1459 = vmatprep.subr.mxu0 0.0
        %1460 = vmatpush1.msra.mxu0 0.0
        %1461 = vmatprep.subr.mxu0 0.0
        %1462 = vmatpush1.msra.mxu0 0.0
        %1463 = vmatprep.subr.mxu0 0.0
        %1464 = vmatpush1.msra.mxu0 0.0
        %1465 = vmatprep.subr.mxu0 0.0
        %1466 = vmatpush1.msra.mxu0 0.0
        %1467 = vmatprep.subr.mxu0 0.0
        %1468 = vmatpush1.msra.mxu0 0.0
        %1469 = vmatprep.subr.mxu0 0.0
        %1470 = vmatpush1.msra.mxu0 0.0
        %1471 = vmatprep.subr.mxu0 0.0
        %1472 = vmatpush1.msra.mxu0 0.0
        %1473 = vmatprep.subr.mxu0 0.0
        %1474 = vmatpush1.msra.mxu0 0.0
        %1475 = vmatprep.subr.mxu0 0.0
        %1476 = vmatpush1.msra.mxu0 0.0
        %1477 = vmatprep.subr.mxu0 0.0
        %1478 = vmatpush1.msra.mxu0 0.0
        %1479 = vmatprep.subr.mxu0 0.0
        %1480 = vmatpush1.msra.mxu0 0.0
        %1481 = vmatprep.subr.mxu0 0.0
        %1482 = vmatpush1.msra.mxu0 1.0
        %1483 = vmatprep.subr.mxu0 0.0
        %1484 = vmatpush1.msra.mxu0 1.0
        %1485 = vmatprep.subr.mxu0 0.0
        %1486 = vmatpush1.msra.mxu0 1.0
        %1487 = vmatprep.subr.mxu0 0.0
        %1488 = vmatpush1.msra.mxu0 1.0
        %1489 = vmatprep.subr.mxu0 0.0
        %1490 = vmatpush2.msra.mxu0 0.0
        %1491 = vmatprep.subr.mxu0 0.0
        %1492 = vmatpush2.msra.mxu0 0.0
        %1493 = vmatprep.subr.mxu0 0.0
        %1494 = vmatpush2.msra.mxu0 0.0
        %1495 = vmatprep.subr.mxu0 0.0
        %1496 = vmatpush2.msra.mxu0 0.0
        %1497 = vmatprep.subr.mxu0 0.0
        %1498 = vmatpush2.msra.mxu0 0.0
        %1499 = vmatprep.subr.mxu0 0.0
        %1500 = vmatpush2.msra.mxu0 0.0
        %1501 = vmatprep.subr.mxu0 0.0
        %1502 = vmatpush2.msra.mxu0 0.0
        %1503 = vmatprep.subr.mxu0 0.0
        %1504 = vmatpush2.msra.mxu0 0.0
        %1505 = vmatprep.subr.mxu0 0.0
        %1506 = vmatpush2.msra.mxu0 0.0
        %1507 = vmatprep.subr.mxu0 0.0
        %1508 = vmatpush2.msra.mxu0 0.0
        %1509 = vmatprep.subr.mxu0 0.0
        %1510 = vmatpush2.msra.mxu0 0.0
        %1511 = vmatprep.subr.mxu0 0.0
        %1512 = vmatpush2.msra.mxu0 0.0
        %1513 = vmatprep.subr.mxu0 0.0
        %1514 = vmatpush2.msra.mxu0 0.0
        %1515 = vmatprep.subr.mxu0 0.0
        %1516 = vmatpush2.msra.mxu0 0.0
        %1517 = vmatprep.subr.mxu0 0.0
        %1518 = vmatpush2.msra.mxu0 0.0
        %1519 = vmatprep.subr.mxu0 0.0
        %1520 = vmatpush2.msra.mxu0 0.0
        %1521 = vmatprep.mubr.f32.mxu0 0.0
        %v1522 = vand.u32 %v1237, 4294901760
        %v1523 = vsub.f32 %v1237, %v1522
        %v1524 = vand.u32 %v1523, 4294901760
        %1525 = vmatmul.mubr.f32.gmra.mxu0 %v1524
        %v1526 = vpop.f32.mrf.mxu0
        %v1527 = vadd.f32 %v1454, %v1526
        %v1528 = vpop.f32.mrf.mxu0
        %1529 = vdwg.mxu0
        %1530 = vmatprep.subr.mxu0 0.0
        %1531 = vmatpush1.msra.mxu0 0.0
        %1532 = vmatprep.subr.mxu0 0.0
        %1533 = vmatpush1.msra.mxu0 0.0
        %1534 = vmatprep.subr.mxu0 0.0
        %1535 = vmatpush1.msra.mxu0 0.0
        %1536 = vmatprep.subr.mxu0 0.0
        %1537 = vmatpush1.msra.mxu0 0.0
        %1538 = vmatprep.subr.mxu0 0.0
        %1539 = vmatpush1.msra.mxu0 0.0
        %1540 = vmatprep.subr.mxu0 0.0
        %1541 = vmatpush1.msra.mxu0 0.0
        %1542 = vmatprep.subr.mxu0 0.0
        %1543 = vmatpush1.msra.mxu0 0.0
        %1544 = vmatprep.subr.mxu0 0.0
        %1545 = vmatpush1.msra.mxu0 0.0
        %1546 = vmatprep.subr.mxu0 0.0
        %1547 = vmatpush1.msra.mxu0 0.0
        %1548 = vmatprep.subr.mxu0 0.0
        %1549 = vmatpush1.msra.mxu0 0.0
        %1550 = vmatprep.subr.mxu0 0.0
        %1551 = vmatpush1.msra.mxu0 0.0
        %1552 = vmatprep.subr.mxu0 0.0
        %1553 = vmatpush1.msra.mxu0 0.0
        %1554 = vmatprep.subr.mxu0 0.0
        %1555 = vmatpush1.msra.mxu0 0.0
        %1556 = vmatprep.subr.mxu0 0.0
        %1557 = vmatpush1.msra.mxu0 0.0
        %1558 = vmatprep.subr.mxu0 0.0
        %1559 = vmatpush1.msra.mxu0 0.0
        %1560 = vmatprep.subr.mxu0 0.0
        %1561 = vmatpush1.msra.mxu0 0.0
        %1562 = vmatprep.subr.mxu0 0.0
        %1563 = vmatpush2.msra.mxu0 0.0
        %1564 = vmatprep.subr.mxu0 0.0
        %1565 = vmatpush2.msra.mxu0 0.0
        %1566 = vmatprep.subr.mxu0 0.0
        %1567 = vmatpush2.msra.mxu0 0.0
        %1568 = vmatprep.subr.mxu0 0.0
        %1569 = vmatpush2.msra.mxu0 0.0
        %1570 = vmatprep.subr.mxu0 0.0
        %1571 = vmatpush2.msra.mxu0 0.0
        %1572 = vmatprep.subr.mxu0 0.0
        %1573 = vmatpush2.msra.mxu0 0.0
        %1574 = vmatprep.subr.mxu0 0.0
        %1575 = vmatpush2.msra.mxu0 0.0
        %1576 = vmatprep.subr.mxu0 0.0
        %1577 = vmatpush2.msra.mxu0 0.0
        %1578 = vmatprep.subr.mxu0 0.0
        %1579 = vmatpush2.msra.mxu0 0.0
        %1580 = vmatprep.subr.mxu0 0.0
        %1581 = vmatpush2.msra.mxu0 0.0
        %1582 = vmatprep.subr.mxu0 0.0
        %1583 = vmatpush2.msra.mxu0 0.0
        %1584 = vmatprep.subr.mxu0 0.0
        %1585 = vmatpush2.msra.mxu0 0.0
        %1586 = vmatprep.subr.mxu0 0.0
        %1587 = vmatpush2.msra.mxu0 0.0
        %1588 = vmatprep.subr.mxu0 0.0
        %1589 = vmatpush2.msra.mxu0 0.0
        %1590 = vmatprep.subr.mxu0 0.0
        %1591 = vmatpush2.msra.mxu0 0.0
        %1592 = vmatprep.subr.mxu0 0.0
        %1593 = vmatpush2.msra.mxu0 0.0
        %1594 = vmatprep.mubr.f32.mxu0 0.0
        %v1595 = vand.u32 %v1237, 4294901760
        %1596 = vmatmul.mubr.f32.gmra.mxu0 %v1595
        %v1597 = vpop.f32.mrf.mxu0
        %v1598 = vadd.f32 %v1527, %v1597
        %v1599 = vpop.f32.mrf.mxu0
        %1600 = vdwg.mxu0
        %1601 = vmatprep.subr.mxu0 0.0
        %1602 = vmatpush1.msra.mxu0 0.0
        %1603 = vmatprep.subr.mxu0 0.0
        %1604 = vmatpush1.msra.mxu0 0.0
        %1605 = vmatprep.subr.mxu0 0.0
        %1606 = vmatpush1.msra.mxu0 0.0
        %1607 = vmatprep.subr.mxu0 0.0
        %1608 = vmatpush1.msra.mxu0 0.0
        %1609 = vmatprep.subr.mxu0 0.0
        %1610 = vmatpush1.msra.mxu0 0.0
        %1611 = vmatprep.subr.mxu0 0.0
        %1612 = vmatpush1.msra.mxu0 0.0
        %1613 = vmatprep.subr.mxu0 0.0
        %1614 = vmatpush1.msra.mxu0 0.0
        %1615 = vmatprep.subr.mxu0 0.0
        %1616 = vmatpush1.msra.mxu0 0.0
        %1617 = vmatprep.subr.mxu0 0.0
        %1618 = vmatpush1.msra.mxu0 0.0
        %1619 = vmatprep.subr.mxu0 0.0
        %1620 = vmatpush1.msra.mxu0 0.0
        %1621 = vmatprep.subr.mxu0 0.0
        %1622 = vmatpush1.msra.mxu0 0.0
        %1623 = vmatprep.subr.mxu0 0.0
        %1624 = vmatpush1.msra.mxu0 0.0
        %1625 = vmatprep.subr.mxu0 0.0
        %1626 = vmatpush1.msra.mxu0 1.0
        %1627 = vmatprep.subr.mxu0 0.0
        %1628 = vmatpush1.msra.mxu0 1.0
        %1629 = vmatprep.subr.mxu0 0.0
        %1630 = vmatpush1.msra.mxu0 1.0
        %1631 = vmatprep.subr.mxu0 0.0
        %1632 = vmatpush1.msra.mxu0 1.0
        %1633 = vmatprep.subr.mxu0 0.0
        %1634 = vmatpush2.msra.mxu0 0.0
        %1635 = vmatprep.subr.mxu0 0.0
        %1636 = vmatpush2.msra.mxu0 0.0
        %1637 = vmatprep.subr.mxu0 0.0
        %1638 = vmatpush2.msra.mxu0 0.0
        %1639 = vmatprep.subr.mxu0 0.0
        %1640 = vmatpush2.msra.mxu0 0.0
        %1641 = vmatprep.subr.mxu0 0.0
        %1642 = vmatpush2.msra.mxu0 0.0
        %1643 = vmatprep.subr.mxu0 0.0
        %1644 = vmatpush2.msra.mxu0 0.0
        %1645 = vmatprep.subr.mxu0 0.0
        %1646 = vmatpush2.msra.mxu0 0.0
        %1647 = vmatprep.subr.mxu0 0.0
        %1648 = vmatpush2.msra.mxu0 0.0
        %1649 = vmatprep.subr.mxu0 0.0
        %1650 = vmatpush2.msra.mxu0 0.0
        %1651 = vmatprep.subr.mxu0 0.0
        %1652 = vmatpush2.msra.mxu0 0.0
        %1653 = vmatprep.subr.mxu0 0.0
        %1654 = vmatpush2.msra.mxu0 0.0
        %1655 = vmatprep.subr.mxu0 0.0
        %1656 = vmatpush2.msra.mxu0 0.0
        %1657 = vmatprep.subr.mxu0 0.0
        %1658 = vmatpush2.msra.mxu0 0.0
        %1659 = vmatprep.subr.mxu0 0.0
        %1660 = vmatpush2.msra.mxu0 0.0
        %1661 = vmatprep.subr.mxu0 0.0
        %1662 = vmatpush2.msra.mxu0 0.0
        %1663 = vmatprep.subr.mxu0 0.0
        %1664 = vmatpush2.msra.mxu0 0.0
        %1665 = vmatprep.mubr.f32.mxu0 0.0
        %v1666 = vand.u32 %v1237, 4294901760
        %1667 = vmatmul.mubr.f32.gmra.mxu0 %v1666
        %v1668 = vpop.f32.mrf.mxu0
        %v1669 = vadd.f32 %v1598, %v1668
        %v1670 = vpop.f32.mrf.mxu0
        %1671 = vdwg.mxu0
        %v1672 = vlog2.pop %v1669
        %v1673 = vmul.f32 %v1672, 0.6931472
        %1675 = vrot.lane.b32.xlu0 %v1226, 96
        %v1676 = vpop.permute.xlu0 %1675
        %v1678 = vmul.f32 %v325, %v1676
        %v1680 = vsel %vm313, %v1678, 0
        %1682 = vmatprep.subr.mxu0 0.0
        %1683 = vmatpush1.msra.mxu0 0.0
        %1684 = vmatprep.subr.mxu0 0.0
        %1685 = vmatpush1.msra.mxu0 0.0
        %1686 = vmatprep.subr.mxu0 0.0
        %1687 = vmatpush1.msra.mxu0 0.0
        %1688 = vmatprep.subr.mxu0 0.0
        %1689 = vmatpush1.msra.mxu0 0.0
        %1690 = vmatprep.subr.mxu0 0.0
        %1691 = vmatpush1.msra.mxu0 0.0
        %1692 = vmatprep.subr.mxu0 0.0
        %1693 = vmatpush1.msra.mxu0 0.0
        %1694 = vmatprep.subr.mxu0 0.0
        %1695 = vmatpush1.msra.mxu0 0.0
        %1696 = vmatprep.subr.mxu0 0.0
        %1697 = vmatpush1.msra.mxu0 0.0
        %1698 = vmatprep.subr.mxu0 0.0
        %1699 = vmatpush1.msra.mxu0 0.0
        %1700 = vmatprep.subr.mxu0 0.0
        %1701 = vmatpush1.msra.mxu0 0.0
        %1702 = vmatprep.subr.mxu0 0.0
        %1703 = vmatpush1.msra.mxu0 0.0
        %1704 = vmatprep.subr.mxu0 0.0
        %1705 = vmatpush1.msra.mxu0 0.0
        %1706 = vmatprep.subr.mxu0 0.0
        %1707 = vmatpush1.msra.mxu0 1.0
        %1708 = vmatprep.subr.mxu0 0.0
        %1709 = vmatpush1.msra.mxu0 1.0
        %1710 = vmatprep.subr.mxu0 0.0
        %1711 = vmatpush1.msra.mxu0 1.0
        %1712 = vmatprep.subr.mxu0 0.0
        %1713 = vmatpush1.msra.mxu0 1.0
        %1714 = vmatprep.subr.mxu0 0.0
        %1715 = vmatpush2.msra.mxu0 0.0
        %1716 = vmatprep.subr.mxu0 0.0
        %1717 = vmatpush2.msra.mxu0 0.0
        %1718 = vmatprep.subr.mxu0 0.0
        %1719 = vmatpush2.msra.mxu0 0.0
        %1720 = vmatprep.subr.mxu0 0.0
        %1721 = vmatpush2.msra.mxu0 0.0
        %1722 = vmatprep.subr.mxu0 0.0
        %1723 = vmatpush2.msra.mxu0 0.0
        %1724 = vmatprep.subr.mxu0 0.0
        %1725 = vmatpush2.msra.mxu0 0.0
        %1726 = vmatprep.subr.mxu0 0.0
        %1727 = vmatpush2.msra.mxu0 0.0
        %1728 = vmatprep.subr.mxu0 0.0
        %1729 = vmatpush2.msra.mxu0 0.0
        %1730 = vmatprep.subr.mxu0 0.0
        %1731 = vmatpush2.msra.mxu0 0.0
        %1732 = vmatprep.subr.mxu0 0.0
        %1733 = vmatpush2.msra.mxu0 0.0
        %1734 = vmatprep.subr.mxu0 0.0
        %1735 = vmatpush2.msra.mxu0 0.0
        %1736 = vmatprep.subr.mxu0 0.0
        %1737 = vmatpush2.msra.mxu0 0.0
        %1738 = vmatprep.subr.mxu0 0.0
        %1739 = vmatpush2.msra.mxu0 0.0
        %1740 = vmatprep.subr.mxu0 0.0
        %1741 = vmatpush2.msra.mxu0 0.0
        %1742 = vmatprep.subr.mxu0 0.0
        %1743 = vmatpush2.msra.mxu0 0.0
        %1744 = vmatprep.subr.mxu0 0.0
        %1745 = vmatpush2.msra.mxu0 0.0
        %1746 = vmatprep.mubr.f32.mxu0 0.0
        %v1747 = vand.u32 %v1680, 4294901760
        %v1748 = vsub.f32 %v1680, %v1747
        %v1749 = vand.u32 %v1748, 4294901760
        %v1750 = vsub.f32 %v1748, %v1749
        %v1751 = vand.u32 %v1750, 4294901760
        %1752 = vmatmul.mubr.f32.gmra.mxu0 %v1751
        %v1753 = vpop.f32.mrf.mxu0
        %v1754 = vadd.f32 0.0, %v1753
        %v1755 = vpop.f32.mrf.mxu0
        %1756 = vdwg.mxu0
        %1757 = vmatprep.subr.mxu0 0.0
        %1758 = vmatpush1.msra.mxu0 0.0
        %1759 = vmatprep.subr.mxu0 0.0
        %1760 = vmatpush1.msra.mxu0 0.0
        %1761 = vmatprep.subr.mxu0 0.0
        %1762 = vmatpush1.msra.mxu0 0.0
        %1763 = vmatprep.subr.mxu0 0.0
        %1764 = vmatpush1.msra.mxu0 0.0
        %1765 = vmatprep.subr.mxu0 0.0
        %1766 = vmatpush1.msra.mxu0 0.0
        %1767 = vmatprep.subr.mxu0 0.0
        %1768 = vmatpush1.msra.mxu0 0.0
        %1769 = vmatprep.subr.mxu0 0.0
        %1770 = vmatpush1.msra.mxu0 0.0
        %1771 = vmatprep.subr.mxu0 0.0
        %1772 = vmatpush1.msra.mxu0 0.0
        %1773 = vmatprep.subr.mxu0 0.0
        %1774 = vmatpush1.msra.mxu0 0.0
        %1775 = vmatprep.subr.mxu0 0.0
        %1776 = vmatpush1.msra.mxu0 0.0
        %1777 = vmatprep.subr.mxu0 0.0
        %1778 = vmatpush1.msra.mxu0 0.0
        %1779 = vmatprep.subr.mxu0 0.0
        %1780 = vmatpush1.msra.mxu0 0.0
        %1781 = vmatprep.subr.mxu0 0.0
        %1782 = vmatpush1.msra.mxu0 0.0
        %1783 = vmatprep.subr.mxu0 0.0
        %1784 = vmatpush1.msra.mxu0 0.0
        %1785 = vmatprep.subr.mxu0 0.0
        %1786 = vmatpush1.msra.mxu0 0.0
        %1787 = vmatprep.subr.mxu0 0.0
        %1788 = vmatpush1.msra.mxu0 0.0
        %1789 = vmatprep.subr.mxu0 0.0
        %1790 = vmatpush2.msra.mxu0 0.0
        %1791 = vmatprep.subr.mxu0 0.0
        %1792 = vmatpush2.msra.mxu0 0.0
        %1793 = vmatprep.subr.mxu0 0.0
        %1794 = vmatpush2.msra.mxu0 0.0
        %1795 = vmatprep.subr.mxu0 0.0
        %1796 = vmatpush2.msra.mxu0 0.0
        %1797 = vmatprep.subr.mxu0 0.0
        %1798 = vmatpush2.msra.mxu0 0.0
        %1799 = vmatprep.subr.mxu0 0.0
        %1800 = vmatpush2.msra.mxu0 0.0
        %1801 = vmatprep.subr.mxu0 0.0
        %1802 = vmatpush2.msra.mxu0 0.0
        %1803 = vmatprep.subr.mxu0 0.0
        %1804 = vmatpush2.msra.mxu0 0.0
        %1805 = vmatprep.subr.mxu0 0.0
        %1806 = vmatpush2.msra.mxu0 0.0
        %1807 = vmatprep.subr.mxu0 0.0
        %1808 = vmatpush2.msra.mxu0 0.0
        %1809 = vmatprep.subr.mxu0 0.0
        %1810 = vmatpush2.msra.mxu0 0.0
        %1811 = vmatprep.subr.mxu0 0.0
        %1812 = vmatpush2.msra.mxu0 0.0
        %1813 = vmatprep.subr.mxu0 0.0
        %1814 = vmatpush2.msra.mxu0 0.0
        %1815 = vmatprep.subr.mxu0 0.0
        %1816 = vmatpush2.msra.mxu0 0.0
        %1817 = vmatprep.subr.mxu0 0.0
        %1818 = vmatpush2.msra.mxu0 0.0
        %1819 = vmatprep.subr.mxu0 0.0
        %1820 = vmatpush2.msra.mxu0 0.0
        %1821 = vmatprep.mubr.f32.mxu0 0.0
        %v1822 = vand.u32 %v1680, 4294901760
        %1823 = vmatmul.mubr.f32.gmra.mxu0 %v1822
        %v1824 = vpop.f32.mrf.mxu0
        %v1825 = vadd.f32 %v1754, %v1824
        %v1826 = vpop.f32.mrf.mxu0
        %1827 = vdwg.mxu0
        %1828 = vmatprep.subr.mxu0 0.0
        %1829 = vmatpush1.msra.mxu0 0.0
        %1830 = vmatprep.subr.mxu0 0.0
        %1831 = vmatpush1.msra.mxu0 0.0
        %1832 = vmatprep.subr.mxu0 0.0
        %1833 = vmatpush1.msra.mxu0 0.0
        %1834 = vmatprep.subr.mxu0 0.0
        %1835 = vmatpush1.msra.mxu0 0.0
        %1836 = vmatprep.subr.mxu0 0.0
        %1837 = vmatpush1.msra.mxu0 0.0
        %1838 = vmatprep.subr.mxu0 0.0
        %1839 = vmatpush1.msra.mxu0 0.0
        %1840 = vmatprep.subr.mxu0 0.0
        %1841 = vmatpush1.msra.mxu0 0.0
        %1842 = vmatprep.subr.mxu0 0.0
        %1843 = vmatpush1.msra.mxu0 0.0
        %1844 = vmatprep.subr.mxu0 0.0
        %1845 = vmatpush1.msra.mxu0 0.0
        %1846 = vmatprep.subr.mxu0 0.0
        %1847 = vmatpush1.msra.mxu0 0.0
        %1848 = vmatprep.subr.mxu0 0.0
        %1849 = vmatpush1.msra.mxu0 0.0
        %1850 = vmatprep.subr.mxu0 0.0
        %1851 = vmatpush1.msra.mxu0 0.0
        %1852 = vmatprep.subr.mxu0 0.0
        %1853 = vmatpush1.msra.mxu0 0.0
        %1854 = vmatprep.subr.mxu0 0.0
        %1855 = vmatpush1.msra.mxu0 0.0
        %1856 = vmatprep.subr.mxu0 0.0
        %1857 = vmatpush1.msra.mxu0 0.0
        %1858 = vmatprep.subr.mxu0 0.0
        %1859 = vmatpush1.msra.mxu0 0.0
        %1860 = vmatprep.subr.mxu0 0.0
        %1861 = vmatpush2.msra.mxu0 0.0
        %1862 = vmatprep.subr.mxu0 0.0
        %1863 = vmatpush2.msra.mxu0 0.0
        %1864 = vmatprep.subr.mxu0 0.0
        %1865 = vmatpush2.msra.mxu0 0.0
        %1866 = vmatprep.subr.mxu0 0.0
        %1867 = vmatpush2.msra.mxu0 0.0
        %1868 = vmatprep.subr.mxu0 0.0
        %1869 = vmatpush2.msra.mxu0 0.0
        %1870 = vmatprep.subr.mxu0 0.0
        %1871 = vmatpush2.msra.mxu0 0.0
        %1872 = vmatprep.subr.mxu0 0.0
        %1873 = vmatpush2.msra.mxu0 0.0
        %1874 = vmatprep.subr.mxu0 0.0
        %1875 = vmatpush2.msra.mxu0 0.0
        %1876 = vmatprep.subr.mxu0 0.0
        %1877 = vmatpush2.msra.mxu0 0.0
        %1878 = vmatprep.subr.mxu0 0.0
        %1879 = vmatpush2.msra.mxu0 0.0
        %1880 = vmatprep.subr.mxu0 0.0
        %1881 = vmatpush2.msra.mxu0 0.0
        %1882 = vmatprep.subr.mxu0 0.0
        %1883 = vmatpush2.msra.mxu0 0.0
        %1884 = vmatprep.subr.mxu0 0.0
        %1885 = vmatpush2.msra.mxu0 0.0
        %1886 = vmatprep.subr.mxu0 0.0
        %1887 = vmatpush2.msra.mxu0 0.0
        %1888 = vmatprep.subr.mxu0 0.0
        %1889 = vmatpush2.msra.mxu0 0.0
        %1890 = vmatprep.subr.mxu0 0.0
        %1891 = vmatpush2.msra.mxu0 0.0
        %1892 = vmatprep.mubr.f32.mxu0 0.0
        %v1893 = vand.u32 %v1680, 4294901760
        %v1894 = vsub.f32 %v1680, %v1893
        %1895 = vmatmul.mubr.f32.gmra.mxu0 %v1894
        %v1896 = vpop.f32.mrf.mxu0
        %v1897 = vadd.f32 %v1825, %v1896
        %v1898 = vpop.f32.mrf.mxu0
        %1899 = vdwg.mxu0
        %1900 = vmatprep.subr.mxu0 0.0
        %1901 = vmatpush1.msra.mxu0 0.0
        %1902 = vmatprep.subr.mxu0 0.0
        %1903 = vmatpush1.msra.mxu0 0.0
        %1904 = vmatprep.subr.mxu0 0.0
        %1905 = vmatpush1.msra.mxu0 0.0
        %1906 = vmatprep.subr.mxu0 0.0
        %1907 = vmatpush1.msra.mxu0 0.0
        %1908 = vmatprep.subr.mxu0 0.0
        %1909 = vmatpush1.msra.mxu0 0.0
        %1910 = vmatprep.subr.mxu0 0.0
        %1911 = vmatpush1.msra.mxu0 0.0
        %1912 = vmatprep.subr.mxu0 0.0
        %1913 = vmatpush1.msra.mxu0 0.0
        %1914 = vmatprep.subr.mxu0 0.0
        %1915 = vmatpush1.msra.mxu0 0.0
        %1916 = vmatprep.subr.mxu0 0.0
        %1917 = vmatpush1.msra.mxu0 0.0
        %1918 = vmatprep.subr.mxu0 0.0
        %1919 = vmatpush1.msra.mxu0 0.0
        %1920 = vmatprep.subr.mxu0 0.0
        %1921 = vmatpush1.msra.mxu0 0.0
        %1922 = vmatprep.subr.mxu0 0.0
        %1923 = vmatpush1.msra.mxu0 0.0
        %1924 = vmatprep.subr.mxu0 0.0
        %1925 = vmatpush1.msra.mxu0 1.0
        %1926 = vmatprep.subr.mxu0 0.0
        %1927 = vmatpush1.msra.mxu0 1.0
        %1928 = vmatprep.subr.mxu0 0.0
        %1929 = vmatpush1.msra.mxu0 1.0
        %1930 = vmatprep.subr.mxu0 0.0
        %1931 = vmatpush1.msra.mxu0 1.0
        %1932 = vmatprep.subr.mxu0 0.0
        %1933 = vmatpush2.msra.mxu0 0.0
        %1934 = vmatprep.subr.mxu0 0.0
        %1935 = vmatpush2.msra.mxu0 0.0
        %1936 = vmatprep.subr.mxu0 0.0
        %1937 = vmatpush2.msra.mxu0 0.0
        %1938 = vmatprep.subr.mxu0 0.0
        %1939 = vmatpush2.msra.mxu0 0.0
        %1940 = vmatprep.subr.mxu0 0.0
        %1941 = vmatpush2.msra.mxu0 0.0
        %1942 = vmatprep.subr.mxu0 0.0
        %1943 = vmatpush2.msra.mxu0 0.0
        %1944 = vmatprep.subr.mxu0 0.0
        %1945 = vmatpush2.msra.mxu0 0.0
        %1946 = vmatprep.subr.mxu0 0.0
        %1947 = vmatpush2.msra.mxu0 0.0
        %1948 = vmatprep.subr.mxu0 0.0
        %1949 = vmatpush2.msra.mxu0 0.0
        %1950 = vmatprep.subr.mxu0 0.0
        %1951 = vmatpush2.msra.mxu0 0.0
        %1952 = vmatprep.subr.mxu0 0.0
        %1953 = vmatpush2.msra.mxu0 0.0
        %1954 = vmatprep.subr.mxu0 0.0
        %1955 = vmatpush2.msra.mxu0 0.0
        %1956 = vmatprep.subr.mxu0 0.0
        %1957 = vmatpush2.msra.mxu0 0.0
        %1958 = vmatprep.subr.mxu0 0.0
        %1959 = vmatpush2.msra.mxu0 0.0
        %1960 = vmatprep.subr.mxu0 0.0
        %1961 = vmatpush2.msra.mxu0 0.0
        %1962 = vmatprep.subr.mxu0 0.0
        %1963 = vmatpush2.msra.mxu0 0.0
        %1964 = vmatprep.mubr.f32.mxu0 0.0
        %v1965 = vand.u32 %v1680, 4294901760
        %v1966 = vsub.f32 %v1680, %v1965
        %v1967 = vand.u32 %v1966, 4294901760
        %1968 = vmatmul.mubr.f32.gmra.mxu0 %v1967
        %v1969 = vpop.f32.mrf.mxu0
        %v1970 = vadd.f32 %v1897, %v1969
        %v1971 = vpop.f32.mrf.mxu0
        %1972 = vdwg.mxu0
        %1973 = vmatprep.subr.mxu0 0.0
        %1974 = vmatpush1.msra.mxu0 0.0
        %1975 = vmatprep.subr.mxu0 0.0
        %1976 = vmatpush1.msra.mxu0 0.0
        %1977 = vmatprep.subr.mxu0 0.0
        %1978 = vmatpush1.msra.mxu0 0.0
        %1979 = vmatprep.subr.mxu0 0.0
        %1980 = vmatpush1.msra.mxu0 0.0
        %1981 = vmatprep.subr.mxu0 0.0
        %1982 = vmatpush1.msra.mxu0 0.0
        %1983 = vmatprep.subr.mxu0 0.0
        %1984 = vmatpush1.msra.mxu0 0.0
        %1985 = vmatprep.subr.mxu0 0.0
        %1986 = vmatpush1.msra.mxu0 0.0
        %1987 = vmatprep.subr.mxu0 0.0
        %1988 = vmatpush1.msra.mxu0 0.0
        %1989 = vmatprep.subr.mxu0 0.0
        %1990 = vmatpush1.msra.mxu0 0.0
        %1991 = vmatprep.subr.mxu0 0.0
        %1992 = vmatpush1.msra.mxu0 0.0
        %1993 = vmatprep.subr.mxu0 0.0
        %1994 = vmatpush1.msra.mxu0 0.0
        %1995 = vmatprep.subr.mxu0 0.0
        %1996 = vmatpush1.msra.mxu0 0.0
        %1997 = vmatprep.subr.mxu0 0.0
        %1998 = vmatpush1.msra.mxu0 0.0
        %1999 = vmatprep.subr.mxu0 0.0
        %2000 = vmatpush1.msra.mxu0 0.0
        %2001 = vmatprep.subr.mxu0 0.0
        %2002 = vmatpush1.msra.mxu0 0.0
        %2003 = vmatprep.subr.mxu0 0.0
        %2004 = vmatpush1.msra.mxu0 0.0
        %2005 = vmatprep.subr.mxu0 0.0
        %2006 = vmatpush2.msra.mxu0 0.0
        %2007 = vmatprep.subr.mxu0 0.0
        %2008 = vmatpush2.msra.mxu0 0.0
        %2009 = vmatprep.subr.mxu0 0.0
        %2010 = vmatpush2.msra.mxu0 0.0
        %2011 = vmatprep.subr.mxu0 0.0
        %2012 = vmatpush2.msra.mxu0 0.0
        %2013 = vmatprep.subr.mxu0 0.0
        %2014 = vmatpush2.msra.mxu0 0.0
        %2015 = vmatprep.subr.mxu0 0.0
        %2016 = vmatpush2.msra.mxu0 0.0
        %2017 = vmatprep.subr.mxu0 0.0
        %2018 = vmatpush2.msra.mxu0 0.0
        %2019 = vmatprep.subr.mxu0 0.0
        %2020 = vmatpush2.msra.mxu0 0.0
        %2021 = vmatprep.subr.mxu0 0.0
        %2022 = vmatpush2.msra.mxu0 0.0
        %2023 = vmatprep.subr.mxu0 0.0
        %2024 = vmatpush2.msra.mxu0 0.0
        %2025 = vmatprep.subr.mxu0 0.0
        %2026 = vmatpush2.msra.mxu0 0.0
        %2027 = vmatprep.subr.mxu0 0.0
        %2028 = vmatpush2.msra.mxu0 0.0
        %2029 = vmatprep.subr.mxu0 0.0
        %2030 = vmatpush2.msra.mxu0 0.0
        %2031 = vmatprep.subr.mxu0 0.0
        %2032 = vmatpush2.msra.mxu0 0.0
        %2033 = vmatprep.subr.mxu0 0.0
        %2034 = vmatpush2.msra.mxu0 0.0
        %2035 = vmatprep.subr.mxu0 0.0
        %2036 = vmatpush2.msra.mxu0 0.0
        %2037 = vmatprep.mubr.f32.mxu0 0.0
        %v2038 = vand.u32 %v1680, 4294901760
        %2039 = vmatmul.mubr.f32.gmra.mxu0 %v2038
        %v2040 = vpop.f32.mrf.mxu0
        %v2041 = vadd.f32 %v1970, %v2040
        %v2042 = vpop.f32.mrf.mxu0
        %2043 = vdwg.mxu0
        %2044 = vmatprep.subr.mxu0 0.0
        %2045 = vmatpush1.msra.mxu0 0.0
        %2046 = vmatprep.subr.mxu0 0.0
        %2047 = vmatpush1.msra.mxu0 0.0
        %2048 = vmatprep.subr.mxu0 0.0
        %2049 = vmatpush1.msra.mxu0 0.0
        %2050 = vmatprep.subr.mxu0 0.0
        %2051 = vmatpush1.msra.mxu0 0.0
        %2052 = vmatprep.subr.mxu0 0.0
        %2053 = vmatpush1.msra.mxu0 0.0
        %2054 = vmatprep.subr.mxu0 0.0
        %2055 = vmatpush1.msra.mxu0 0.0
        %2056 = vmatprep.subr.mxu0 0.0
        %2057 = vmatpush1.msra.mxu0 0.0
        %2058 = vmatprep.subr.mxu0 0.0
        %2059 = vmatpush1.msra.mxu0 0.0
        %2060 = vmatprep.subr.mxu0 0.0
        %2061 = vmatpush1.msra.mxu0 0.0
        %2062 = vmatprep.subr.mxu0 0.0
        %2063 = vmatpush1.msra.mxu0 0.0
        %2064 = vmatprep.subr.mxu0 0.0
        %2065 = vmatpush1.msra.mxu0 0.0
        %2066 = vmatprep.subr.mxu0 0.0
        %2067 = vmatpush1.msra.mxu0 0.0
        %2068 = vmatprep.subr.mxu0 0.0
        %2069 = vmatpush1.msra.mxu0 1.0
        %2070 = vmatprep.subr.mxu0 0.0
        %2071 = vmatpush1.msra.mxu0 1.0
        %2072 = vmatprep.subr.mxu0 0.0
        %2073 = vmatpush1.msra.mxu0 1.0
        %2074 = vmatprep.subr.mxu0 0.0
        %2075 = vmatpush1.msra.mxu0 1.0
        %2076 = vmatprep.subr.mxu0 0.0
        %2077 = vmatpush2.msra.mxu0 0.0
        %2078 = vmatprep.subr.mxu0 0.0
        %2079 = vmatpush2.msra.mxu0 0.0
        %2080 = vmatprep.subr.mxu0 0.0
        %2081 = vmatpush2.msra.mxu0 0.0
        %2082 = vmatprep.subr.mxu0 0.0
        %2083 = vmatpush2.msra.mxu0 0.0
        %2084 = vmatprep.subr.mxu0 0.0
        %2085 = vmatpush2.msra.mxu0 0.0
        %2086 = vmatprep.subr.mxu0 0.0
        %2087 = vmatpush2.msra.mxu0 0.0
        %2088 = vmatprep.subr.mxu0 0.0
        %2089 = vmatpush2.msra.mxu0 0.0
        %2090 = vmatprep.subr.mxu0 0.0
        %2091 = vmatpush2.msra.mxu0 0.0
        %2092 = vmatprep.subr.mxu0 0.0
        %2093 = vmatpush2.msra.mxu0 0.0
        %2094 = vmatprep.subr.mxu0 0.0
        %2095 = vmatpush2.msra.mxu0 0.0
        %2096 = vmatprep.subr.mxu0 0.0
        %2097 = vmatpush2.msra.mxu0 0.0
        %2098 = vmatprep.subr.mxu0 0.0
        %2099 = vmatpush2.msra.mxu0 0.0
        %2100 = vmatprep.subr.mxu0 0.0
        %2101 = vmatpush2.msra.mxu0 0.0
        %2102 = vmatprep.subr.mxu0 0.0
        %2103 = vmatpush2.msra.mxu0 0.0
        %2104 = vmatprep.subr.mxu0 0.0
        %2105 = vmatpush2.msra.mxu0 0.0
        %2106 = vmatprep.subr.mxu0 0.0
        %2107 = vmatpush2.msra.mxu0 0.0
        %2108 = vmatprep.mubr.f32.mxu0 0.0
        %v2109 = vand.u32 %v1680, 4294901760
        %2110 = vmatmul.mubr.f32.gmra.mxu0 %v2109
        %v2111 = vpop.f32.mrf.mxu0
        %v2112 = vadd.f32 %v2041, %v2111
        %v2113 = vpop.f32.mrf.mxu0
        %2114 = vdwg.mxu0
        %v2115 = vsub.f32 %v332, %v2112
        %v2116 = vadd.f32 %v2115, %v1230
        %v2117 = vadd.f32 %v2116, %v1673
        %2119 = vrot.lane.b32.xlu0 %v333, 127
        %v2120 = vpop.permute.xlu0 %2119
        %v2122 = vmul.f32 %v2117, %v2120
        %v2123 = vadd.f32 %v1221, %v2122
        %2124 = vrot.lane.b32.xlu0 %v311, 64
        %v2125 = vpop.permute.xlu0 %2124
        %v2127 = vadd.f32 %v334, %v2125
        %vm2128 = vcmask 785920
        %v2129 = vsel %vm2128, %v2127, -inf
        %2130 = vmax.xlane.f32.xlu0 %v2129
        %v2131 = vpop.xlane.xlu0 %2130
        %v2132 = vsub.f32 %v2127, %v2131
        %v2133 = vmul.f32 %v2132, 1.442695
        %v2134 = vpow.pop %v2133
        %2136 = vrot.lane.b32.xlu0 %v2134, 64
        %v2137 = vpop.permute.xlu0 %2136
        %v2138 = vsel %vm313, %v2137, 0
        %2140 = vmatprep.subr.mxu0 0.0
        %2141 = vmatpush1.msra.mxu0 0.0
        %2142 = vmatprep.subr.mxu0 0.0
        %2143 = vmatpush1.msra.mxu0 0.0
        %2144 = vmatprep.subr.mxu0 0.0
        %2145 = vmatpush1.msra.mxu0 0.0
        %2146 = vmatprep.subr.mxu0 0.0
        %2147 = vmatpush1.msra.mxu0 0.0
        %2148 = vmatprep.subr.mxu0 0.0
        %2149 = vmatpush1.msra.mxu0 0.0
        %2150 = vmatprep.subr.mxu0 0.0
        %2151 = vmatpush1.msra.mxu0 0.0
        %2152 = vmatprep.subr.mxu0 0.0
        %2153 = vmatpush1.msra.mxu0 0.0
        %2154 = vmatprep.subr.mxu0 0.0
        %2155 = vmatpush1.msra.mxu0 0.0
        %2156 = vmatprep.subr.mxu0 0.0
        %2157 = vmatpush1.msra.mxu0 0.0
        %2158 = vmatprep.subr.mxu0 0.0
        %2159 = vmatpush1.msra.mxu0 0.0
        %2160 = vmatprep.subr.mxu0 0.0
        %2161 = vmatpush1.msra.mxu0 0.0
        %2162 = vmatprep.subr.mxu0 0.0
        %2163 = vmatpush1.msra.mxu0 0.0
        %2164 = vmatprep.subr.mxu0 0.0
        %2165 = vmatpush1.msra.mxu0 1.0
        %2166 = vmatprep.subr.mxu0 0.0
        %2167 = vmatpush1.msra.mxu0 1.0
        %2168 = vmatprep.subr.mxu0 0.0
        %2169 = vmatpush1.msra.mxu0 1.0
        %2170 = vmatprep.subr.mxu0 0.0
        %2171 = vmatpush1.msra.mxu0 1.0
        %2172 = vmatprep.subr.mxu0 0.0
        %2173 = vmatpush2.msra.mxu0 0.0
        %2174 = vmatprep.subr.mxu0 0.0
        %2175 = vmatpush2.msra.mxu0 0.0
        %2176 = vmatprep.subr.mxu0 0.0
        %2177 = vmatpush2.msra.mxu0 0.0
        %2178 = vmatprep.subr.mxu0 0.0
        %2179 = vmatpush2.msra.mxu0 0.0
        %2180 = vmatprep.subr.mxu0 0.0
        %2181 = vmatpush2.msra.mxu0 0.0
        %2182 = vmatprep.subr.mxu0 0.0
        %2183 = vmatpush2.msra.mxu0 0.0
        %2184 = vmatprep.subr.mxu0 0.0
        %2185 = vmatpush2.msra.mxu0 0.0
        %2186 = vmatprep.subr.mxu0 0.0
        %2187 = vmatpush2.msra.mxu0 0.0
        %2188 = vmatprep.subr.mxu0 0.0
        %2189 = vmatpush2.msra.mxu0 0.0
        %2190 = vmatprep.subr.mxu0 0.0
        %2191 = vmatpush2.msra.mxu0 0.0
        %2192 = vmatprep.subr.mxu0 0.0
        %2193 = vmatpush2.msra.mxu0 0.0
        %2194 = vmatprep.subr.mxu0 0.0
        %2195 = vmatpush2.msra.mxu0 0.0
        %2196 = vmatprep.subr.mxu0 0.0
        %2197 = vmatpush2.msra.mxu0 0.0
        %2198 = vmatprep.subr.mxu0 0.0
        %2199 = vmatpush2.msra.mxu0 0.0
        %2200 = vmatprep.subr.mxu0 0.0
        %2201 = vmatpush2.msra.mxu0 0.0
        %2202 = vmatprep.subr.mxu0 0.0
        %2203 = vmatpush2.msra.mxu0 0.0
        %2204 = vmatprep.mubr.f32.mxu0 0.0
        %v2205 = vand.u32 %v2138, 4294901760
        %v2206 = vsub.f32 %v2138, %v2205
        %v2207 = vand.u32 %v2206, 4294901760
        %v2208 = vsub.f32 %v2206, %v2207
        %v2209 = vand.u32 %v2208, 4294901760
        %2210 = vmatmul.mubr.f32.gmra.mxu0 %v2209
        %v2211 = vpop.f32.mrf.mxu0
        %v2212 = vadd.f32 0.0, %v2211
        %v2213 = vpop.f32.mrf.mxu0
        %2214 = vdwg.mxu0
        %2215 = vmatprep.subr.mxu0 0.0
        %2216 = vmatpush1.msra.mxu0 0.0
        %2217 = vmatprep.subr.mxu0 0.0
        %2218 = vmatpush1.msra.mxu0 0.0
        %2219 = vmatprep.subr.mxu0 0.0
        %2220 = vmatpush1.msra.mxu0 0.0
        %2221 = vmatprep.subr.mxu0 0.0
        %2222 = vmatpush1.msra.mxu0 0.0
        %2223 = vmatprep.subr.mxu0 0.0
        %2224 = vmatpush1.msra.mxu0 0.0
        %2225 = vmatprep.subr.mxu0 0.0
        %2226 = vmatpush1.msra.mxu0 0.0
        %2227 = vmatprep.subr.mxu0 0.0
        %2228 = vmatpush1.msra.mxu0 0.0
        %2229 = vmatprep.subr.mxu0 0.0
        %2230 = vmatpush1.msra.mxu0 0.0
        %2231 = vmatprep.subr.mxu0 0.0
        %2232 = vmatpush1.msra.mxu0 0.0
        %2233 = vmatprep.subr.mxu0 0.0
        %2234 = vmatpush1.msra.mxu0 0.0
        %2235 = vmatprep.subr.mxu0 0.0
        %2236 = vmatpush1.msra.mxu0 0.0
        %2237 = vmatprep.subr.mxu0 0.0
        %2238 = vmatpush1.msra.mxu0 0.0
        %2239 = vmatprep.subr.mxu0 0.0
        %2240 = vmatpush1.msra.mxu0 0.0
        %2241 = vmatprep.subr.mxu0 0.0
        %2242 = vmatpush1.msra.mxu0 0.0
        %2243 = vmatprep.subr.mxu0 0.0
        %2244 = vmatpush1.msra.mxu0 0.0
        %2245 = vmatprep.subr.mxu0 0.0
        %2246 = vmatpush1.msra.mxu0 0.0
        %2247 = vmatprep.subr.mxu0 0.0
        %2248 = vmatpush2.msra.mxu0 0.0
        %2249 = vmatprep.subr.mxu0 0.0
        %2250 = vmatpush2.msra.mxu0 0.0
        %2251 = vmatprep.subr.mxu0 0.0
        %2252 = vmatpush2.msra.mxu0 0.0
        %2253 = vmatprep.subr.mxu0 0.0
        %2254 = vmatpush2.msra.mxu0 0.0
        %2255 = vmatprep.subr.mxu0 0.0
        %2256 = vmatpush2.msra.mxu0 0.0
        %2257 = vmatprep.subr.mxu0 0.0
        %2258 = vmatpush2.msra.mxu0 0.0
        %2259 = vmatprep.subr.mxu0 0.0
        %2260 = vmatpush2.msra.mxu0 0.0
        %2261 = vmatprep.subr.mxu0 0.0
        %2262 = vmatpush2.msra.mxu0 0.0
        %2263 = vmatprep.subr.mxu0 0.0
        %2264 = vmatpush2.msra.mxu0 0.0
        %2265 = vmatprep.subr.mxu0 0.0
        %2266 = vmatpush2.msra.mxu0 0.0
        %2267 = vmatprep.subr.mxu0 0.0
        %2268 = vmatpush2.msra.mxu0 0.0
        %2269 = vmatprep.subr.mxu0 0.0
        %2270 = vmatpush2.msra.mxu0 0.0
        %2271 = vmatprep.subr.mxu0 0.0
        %2272 = vmatpush2.msra.mxu0 0.0
        %2273 = vmatprep.subr.mxu0 0.0
        %2274 = vmatpush2.msra.mxu0 0.0
        %2275 = vmatprep.subr.mxu0 0.0
        %2276 = vmatpush2.msra.mxu0 0.0
        %2277 = vmatprep.subr.mxu0 0.0
        %2278 = vmatpush2.msra.mxu0 0.0
        %2279 = vmatprep.mubr.f32.mxu0 0.0
        %v2280 = vand.u32 %v2138, 4294901760
        %2281 = vmatmul.mubr.f32.gmra.mxu0 %v2280
        %v2282 = vpop.f32.mrf.mxu0
        %v2283 = vadd.f32 %v2212, %v2282
        %v2284 = vpop.f32.mrf.mxu0
        %2285 = vdwg.mxu0
        %2286 = vmatprep.subr.mxu0 0.0
        %2287 = vmatpush1.msra.mxu0 0.0
        %2288 = vmatprep.subr.mxu0 0.0
        %2289 = vmatpush1.msra.mxu0 0.0
        %2290 = vmatprep.subr.mxu0 0.0
        %2291 = vmatpush1.msra.mxu0 0.0
        %2292 = vmatprep.subr.mxu0 0.0
        %2293 = vmatpush1.msra.mxu0 0.0
        %2294 = vmatprep.subr.mxu0 0.0
        %2295 = vmatpush1.msra.mxu0 0.0
        %2296 = vmatprep.subr.mxu0 0.0
        %2297 = vmatpush1.msra.mxu0 0.0
        %2298 = vmatprep.subr.mxu0 0.0
        %2299 = vmatpush1.msra.mxu0 0.0
        %2300 = vmatprep.subr.mxu0 0.0
        %2301 = vmatpush1.msra.mxu0 0.0
        %2302 = vmatprep.subr.mxu0 0.0
        %2303 = vmatpush1.msra.mxu0 0.0
        %2304 = vmatprep.subr.mxu0 0.0
        %2305 = vmatpush1.msra.mxu0 0.0
        %2306 = vmatprep.subr.mxu0 0.0
        %2307 = vmatpush1.msra.mxu0 0.0
        %2308 = vmatprep.subr.mxu0 0.0
        %2309 = vmatpush1.msra.mxu0 0.0
        %2310 = vmatprep.subr.mxu0 0.0
        %2311 = vmatpush1.msra.mxu0 0.0
        %2312 = vmatprep.subr.mxu0 0.0
        %2313 = vmatpush1.msra.mxu0 0.0
        %2314 = vmatprep.subr.mxu0 0.0
        %2315 = vmatpush1.msra.mxu0 0.0
        %2316 = vmatprep.subr.mxu0 0.0
        %2317 = vmatpush1.msra.mxu0 0.0
        %2318 = vmatprep.subr.mxu0 0.0
        %2319 = vmatpush2.msra.mxu0 0.0
        %2320 = vmatprep.subr.mxu0 0.0
        %2321 = vmatpush2.msra.mxu0 0.0
        %2322 = vmatprep.subr.mxu0 0.0
        %2323 = vmatpush2.msra.mxu0 0.0
        %2324 = vmatprep.subr.mxu0 0.0
        %2325 = vmatpush2.msra.mxu0 0.0
        %2326 = vmatprep.subr.mxu0 0.0
        %2327 = vmatpush2.msra.mxu0 0.0
        %2328 = vmatprep.subr.mxu0 0.0
        %2329 = vmatpush2.msra.mxu0 0.0
        %2330 = vmatprep.subr.mxu0 0.0
        %2331 = vmatpush2.msra.mxu0 0.0
        %2332 = vmatprep.subr.mxu0 0.0
        %2333 = vmatpush2.msra.mxu0 0.0
        %2334 = vmatprep.subr.mxu0 0.0
        %2335 = vmatpush2.msra.mxu0 0.0
        %2336 = vmatprep.subr.mxu0 0.0
        %2337 = vmatpush2.msra.mxu0 0.0
        %2338 = vmatprep.subr.mxu0 0.0
        %2339 = vmatpush2.msra.mxu0 0.0
        %2340 = vmatprep.subr.mxu0 0.0
        %2341 = vmatpush2.msra.mxu0 0.0
        %2342 = vmatprep.subr.mxu0 0.0
        %2343 = vmatpush2.msra.mxu0 0.0
        %2344 = vmatprep.subr.mxu0 0.0
        %2345 = vmatpush2.msra.mxu0 0.0
        %2346 = vmatprep.subr.mxu0 0.0
        %2347 = vmatpush2.msra.mxu0 0.0
        %2348 = vmatprep.subr.mxu0 0.0
        %2349 = vmatpush2.msra.mxu0 0.0
        %2350 = vmatprep.mubr.f32.mxu0 0.0
        %v2351 = vand.u32 %v2138, 4294901760
        %v2352 = vsub.f32 %v2138, %v2351
        %2353 = vmatmul.mubr.f32.gmra.mxu0 %v2352
        %v2354 = vpop.f32.mrf.mxu0
        %v2355 = vadd.f32 %v2283, %v2354
        %v2356 = vpop.f32.mrf.mxu0
        %2357 = vdwg.mxu0
        %2358 = vmatprep.subr.mxu0 0.0
        %2359 = vmatpush1.msra.mxu0 0.0
        %2360 = vmatprep.subr.mxu0 0.0
        %2361 = vmatpush1.msra.mxu0 0.0
        %2362 = vmatprep.subr.mxu0 0.0
        %2363 = vmatpush1.msra.mxu0 0.0
        %2364 = vmatprep.subr.mxu0 0.0
        %2365 = vmatpush1.msra.mxu0 0.0
        %2366 = vmatprep.subr.mxu0 0.0
        %2367 = vmatpush1.msra.mxu0 0.0
        %2368 = vmatprep.subr.mxu0 0.0
        %2369 = vmatpush1.msra.mxu0 0.0
        %2370 = vmatprep.subr.mxu0 0.0
        %2371 = vmatpush1.msra.mxu0 0.0
        %2372 = vmatprep.subr.mxu0 0.0
        %2373 = vmatpush1.msra.mxu0 0.0
        %2374 = vmatprep.subr.mxu0 0.0
        %2375 = vmatpush1.msra.mxu0 0.0
        %2376 = vmatprep.subr.mxu0 0.0
        %2377 = vmatpush1.msra.mxu0 0.0
        %2378 = vmatprep.subr.mxu0 0.0
        %2379 = vmatpush1.msra.mxu0 0.0
        %2380 = vmatprep.subr.mxu0 0.0
        %2381 = vmatpush1.msra.mxu0 0.0
        %2382 = vmatprep.subr.mxu0 0.0
        %2383 = vmatpush1.msra.mxu0 1.0
        %2384 = vmatprep.subr.mxu0 0.0
        %2385 = vmatpush1.msra.mxu0 1.0
        %2386 = vmatprep.subr.mxu0 0.0
        %2387 = vmatpush1.msra.mxu0 1.0
        %2388 = vmatprep.subr.mxu0 0.0
        %2389 = vmatpush1.msra.mxu0 1.0
        %2390 = vmatprep.subr.mxu0 0.0
        %2391 = vmatpush2.msra.mxu0 0.0
        %2392 = vmatprep.subr.mxu0 0.0
        %2393 = vmatpush2.msra.mxu0 0.0
        %2394 = vmatprep.subr.mxu0 0.0
        %2395 = vmatpush2.msra.mxu0 0.0
        %2396 = vmatprep.subr.mxu0 0.0
        %2397 = vmatpush2.msra.mxu0 0.0
        %2398 = vmatprep.subr.mxu0 0.0
        %2399 = vmatpush2.msra.mxu0 0.0
        %2400 = vmatprep.subr.mxu0 0.0
        %2401 = vmatpush2.msra.mxu0 0.0
        %2402 = vmatprep.subr.mxu0 0.0
        %2403 = vmatpush2.msra.mxu0 0.0
        %2404 = vmatprep.subr.mxu0 0.0
        %2405 = vmatpush2.msra.mxu0 0.0
        %2406 = vmatprep.subr.mxu0 0.0
        %2407 = vmatpush2.msra.mxu0 0.0
        %2408 = vmatprep.subr.mxu0 0.0
        %2409 = vmatpush2.msra.mxu0 0.0
        %2410 = vmatprep.subr.mxu0 0.0
        %2411 = vmatpush2.msra.mxu0 0.0
        %2412 = vmatprep.subr.mxu0 0.0
        %2413 = vmatpush2.msra.mxu0 0.0
        %2414 = vmatprep.subr.mxu0 0.0
        %2415 = vmatpush2.msra.mxu0 0.0
        %2416 = vmatprep.subr.mxu0 0.0
        %2417 = vmatpush2.msra.mxu0 0.0
        %2418 = vmatprep.subr.mxu0 0.0
        %2419 = vmatpush2.msra.mxu0 0.0
        %2420 = vmatprep.subr.mxu0 0.0
        %2421 = vmatpush2.msra.mxu0 0.0
        %2422 = vmatprep.mubr.f32.mxu0 0.0
        %v2423 = vand.u32 %v2138, 4294901760
        %v2424 = vsub.f32 %v2138, %v2423
        %v2425 = vand.u32 %v2424, 4294901760
        %2426 = vmatmul.mubr.f32.gmra.mxu0 %v2425
        %v2427 = vpop.f32.mrf.mxu0
        %v2428 = vadd.f32 %v2355, %v2427
        %v2429 = vpop.f32.mrf.mxu0
        %2430 = vdwg.mxu0
        %2431 = vmatprep.subr.mxu0 0.0
        %2432 = vmatpush1.msra.mxu0 0.0
        %2433 = vmatprep.subr.mxu0 0.0
        %2434 = vmatpush1.msra.mxu0 0.0
        %2435 = vmatprep.subr.mxu0 0.0
        %2436 = vmatpush1.msra.mxu0 0.0
        %2437 = vmatprep.subr.mxu0 0.0
        %2438 = vmatpush1.msra.mxu0 0.0
        %2439 = vmatprep.subr.mxu0 0.0
        %2440 = vmatpush1.msra.mxu0 0.0
        %2441 = vmatprep.subr.mxu0 0.0
        %2442 = vmatpush1.msra.mxu0 0.0
        %2443 = vmatprep.subr.mxu0 0.0
        %2444 = vmatpush1.msra.mxu0 0.0
        %2445 = vmatprep.subr.mxu0 0.0
        %2446 = vmatpush1.msra.mxu0 0.0
        %2447 = vmatprep.subr.mxu0 0.0
        %2448 = vmatpush1.msra.mxu0 0.0
        %2449 = vmatprep.subr.mxu0 0.0
        %2450 = vmatpush1.msra.mxu0 0.0
        %2451 = vmatprep.subr.mxu0 0.0
        %2452 = vmatpush1.msra.mxu0 0.0
        %2453 = vmatprep.subr.mxu0 0.0
        %2454 = vmatpush1.msra.mxu0 0.0
        %2455 = vmatprep.subr.mxu0 0.0
        %2456 = vmatpush1.msra.mxu0 0.0
        %2457 = vmatprep.subr.mxu0 0.0
        %2458 = vmatpush1.msra.mxu0 0.0
        %2459 = vmatprep.subr.mxu0 0.0
        %2460 = vmatpush1.msra.mxu0 0.0
        %2461 = vmatprep.subr.mxu0 0.0
        %2462 = vmatpush1.msra.mxu0 0.0
        %2463 = vmatprep.subr.mxu0 0.0
        %2464 = vmatpush2.msra.mxu0 0.0
        %2465 = vmatprep.subr.mxu0 0.0
        %2466 = vmatpush2.msra.mxu0 0.0
        %2467 = vmatprep.subr.mxu0 0.0
        %2468 = vmatpush2.msra.mxu0 0.0
        %2469 = vmatprep.subr.mxu0 0.0
        %2470 = vmatpush2.msra.mxu0 0.0
        %2471 = vmatprep.subr.mxu0 0.0
        %2472 = vmatpush2.msra.mxu0 0.0
        %2473 = vmatprep.subr.mxu0 0.0
        %2474 = vmatpush2.msra.mxu0 0.0
        %2475 = vmatprep.subr.mxu0 0.0
        %2476 = vmatpush2.msra.mxu0 0.0
        %2477 = vmatprep.subr.mxu0 0.0
        %2478 = vmatpush2.msra.mxu0 0.0
        %2479 = vmatprep.subr.mxu0 0.0
        %2480 = vmatpush2.msra.mxu0 0.0
        %2481 = vmatprep.subr.mxu0 0.0
        %2482 = vmatpush2.msra.mxu0 0.0
        %2483 = vmatprep.subr.mxu0 0.0
        %2484 = vmatpush2.msra.mxu0 0.0
        %2485 = vmatprep.subr.mxu0 0.0
        %2486 = vmatpush2.msra.mxu0 0.0
        %2487 = vmatprep.subr.mxu0 0.0
        %2488 = vmatpush2.msra.mxu0 0.0
        %2489 = vmatprep.subr.mxu0 0.0
        %2490 = vmatpush2.msra.mxu0 0.0
        %2491 = vmatprep.subr.mxu0 0.0
        %2492 = vmatpush2.msra.mxu0 0.0
        %2493 = vmatprep.subr.mxu0 0.0
        %2494 = vmatpush2.msra.mxu0 0.0
        %2495 = vmatprep.mubr.f32.mxu0 0.0
        %v2496 = vand.u32 %v2138, 4294901760
        %2497 = vmatmul.mubr.f32.gmra.mxu0 %v2496
        %v2498 = vpop.f32.mrf.mxu0
        %v2499 = vadd.f32 %v2428, %v2498
        %v2500 = vpop.f32.mrf.mxu0
        %2501 = vdwg.mxu0
        %2502 = vmatprep.subr.mxu0 0.0
        %2503 = vmatpush1.msra.mxu0 0.0
        %2504 = vmatprep.subr.mxu0 0.0
        %2505 = vmatpush1.msra.mxu0 0.0
        %2506 = vmatprep.subr.mxu0 0.0
        %2507 = vmatpush1.msra.mxu0 0.0
        %2508 = vmatprep.subr.mxu0 0.0
        %2509 = vmatpush1.msra.mxu0 0.0
        %2510 = vmatprep.subr.mxu0 0.0
        %2511 = vmatpush1.msra.mxu0 0.0
        %2512 = vmatprep.subr.mxu0 0.0
        %2513 = vmatpush1.msra.mxu0 0.0
        %2514 = vmatprep.subr.mxu0 0.0
        %2515 = vmatpush1.msra.mxu0 0.0
        %2516 = vmatprep.subr.mxu0 0.0
        %2517 = vmatpush1.msra.mxu0 0.0
        %2518 = vmatprep.subr.mxu0 0.0
        %2519 = vmatpush1.msra.mxu0 0.0
        %2520 = vmatprep.subr.mxu0 0.0
        %2521 = vmatpush1.msra.mxu0 0.0
        %2522 = vmatprep.subr.mxu0 0.0
        %2523 = vmatpush1.msra.mxu0 0.0
        %2524 = vmatprep.subr.mxu0 0.0
        %2525 = vmatpush1.msra.mxu0 0.0
        %2526 = vmatprep.subr.mxu0 0.0
        %2527 = vmatpush1.msra.mxu0 1.0
        %2528 = vmatprep.subr.mxu0 0.0
        %2529 = vmatpush1.msra.mxu0 1.0
        %2530 = vmatprep.subr.mxu0 0.0
        %2531 = vmatpush1.msra.mxu0 1.0
        %2532 = vmatprep.subr.mxu0 0.0
        %2533 = vmatpush1.msra.mxu0 1.0
        %2534 = vmatprep.subr.mxu0 0.0
        %2535 = vmatpush2.msra.mxu0 0.0
        %2536 = vmatprep.subr.mxu0 0.0
        %2537 = vmatpush2.msra.mxu0 0.0
        %2538 = vmatprep.subr.mxu0 0.0
        %2539 = vmatpush2.msra.mxu0 0.0
        %2540 = vmatprep.subr.mxu0 0.0
        %2541 = vmatpush2.msra.mxu0 0.0
        %2542 = vmatprep.subr.mxu0 0.0
        %2543 = vmatpush2.msra.mxu0 0.0
        %2544 = vmatprep.subr.mxu0 0.0
        %2545 = vmatpush2.msra.mxu0 0.0
        %2546 = vmatprep.subr.mxu0 0.0
        %2547 = vmatpush2.msra.mxu0 0.0
        %2548 = vmatprep.subr.mxu0 0.0
        %2549 = vmatpush2.msra.mxu0 0.0
        %2550 = vmatprep.subr.mxu0 0.0
        %2551 = vmatpush2.msra.mxu0 0.0
        %2552 = vmatprep.subr.mxu0 0.0
        %2553 = vmatpush2.msra.mxu0 0.0
        %2554 = vmatprep.subr.mxu0 0.0
        %2555 = vmatpush2.msra.mxu0 0.0
        %2556 = vmatprep.subr.mxu0 0.0
        %2557 = vmatpush2.msra.mxu0 0.0
        %2558 = vmatprep.subr.mxu0 0.0
        %2559 = vmatpush2.msra.mxu0 0.0
        %2560 = vmatprep.subr.mxu0 0.0
        %2561 = vmatpush2.msra.mxu0 0.0
        %2562 = vmatprep.subr.mxu0 0.0
        %2563 = vmatpush2.msra.mxu0 0.0
        %2564 = vmatprep.subr.mxu0 0.0
        %2565 = vmatpush2.msra.mxu0 0.0
        %2566 = vmatprep.mubr.f32.mxu0 0.0
        %v2567 = vand.u32 %v2138, 4294901760
        %2568 = vmatmul.mubr.f32.gmra.mxu0 %v2567
        %v2569 = vpop.f32.mrf.mxu0
        %v2570 = vadd.f32 %v2499, %v2569
        %v2571 = vpop.f32.mrf.mxu0
        %2572 = vdwg.mxu0
        %v2573 = vlog2.pop %v2570
        %v2574 = vmul.f32 %v2573, 0.6931472
        %2576 = vrot.lane.b32.xlu0 %v2127, 64
        %v2577 = vpop.permute.xlu0 %2576
        %v2579 = vmul.f32 %v325, %v2577
        %v2581 = vsel %vm313, %v2579, 0
        %2583 = vmatprep.subr.mxu0 0.0
        %2584 = vmatpush1.msra.mxu0 0.0
        %2585 = vmatprep.subr.mxu0 0.0
        %2586 = vmatpush1.msra.mxu0 0.0
        %2587 = vmatprep.subr.mxu0 0.0
        %2588 = vmatpush1.msra.mxu0 0.0
        %2589 = vmatprep.subr.mxu0 0.0
        %2590 = vmatpush1.msra.mxu0 0.0
        %2591 = vmatprep.subr.mxu0 0.0
        %2592 = vmatpush1.msra.mxu0 0.0
        %2593 = vmatprep.subr.mxu0 0.0
        %2594 = vmatpush1.msra.mxu0 0.0
        %2595 = vmatprep.subr.mxu0 0.0
        %2596 = vmatpush1.msra.mxu0 0.0
        %2597 = vmatprep.subr.mxu0 0.0
        %2598 = vmatpush1.msra.mxu0 0.0
        %2599 = vmatprep.subr.mxu0 0.0
        %2600 = vmatpush1.msra.mxu0 0.0
        %2601 = vmatprep.subr.mxu0 0.0
        %2602 = vmatpush1.msra.mxu0 0.0
        %2603 = vmatprep.subr.mxu0 0.0
        %2604 = vmatpush1.msra.mxu0 0.0
        %2605 = vmatprep.subr.mxu0 0.0
        %2606 = vmatpush1.msra.mxu0 0.0
        %2607 = vmatprep.subr.mxu0 0.0
        %2608 = vmatpush1.msra.mxu0 1.0
        %2609 = vmatprep.subr.mxu0 0.0
        %2610 = vmatpush1.msra.mxu0 1.0
        %2611 = vmatprep.subr.mxu0 0.0
        %2612 = vmatpush1.msra.mxu0 1.0
        %2613 = vmatprep.subr.mxu0 0.0
        %2614 = vmatpush1.msra.mxu0 1.0
        %2615 = vmatprep.subr.mxu0 0.0
        %2616 = vmatpush2.msra.mxu0 0.0
        %2617 = vmatprep.subr.mxu0 0.0
        %2618 = vmatpush2.msra.mxu0 0.0
        %2619 = vmatprep.subr.mxu0 0.0
        %2620 = vmatpush2.msra.mxu0 0.0
        %2621 = vmatprep.subr.mxu0 0.0
        %2622 = vmatpush2.msra.mxu0 0.0
        %2623 = vmatprep.subr.mxu0 0.0
        %2624 = vmatpush2.msra.mxu0 0.0
        %2625 = vmatprep.subr.mxu0 0.0
        %2626 = vmatpush2.msra.mxu0 0.0
        %2627 = vmatprep.subr.mxu0 0.0
        %2628 = vmatpush2.msra.mxu0 0.0
        %2629 = vmatprep.subr.mxu0 0.0
        %2630 = vmatpush2.msra.mxu0 0.0
        %2631 = vmatprep.subr.mxu0 0.0
        %2632 = vmatpush2.msra.mxu0 0.0
        %2633 = vmatprep.subr.mxu0 0.0
        %2634 = vmatpush2.msra.mxu0 0.0
        %2635 = vmatprep.subr.mxu0 0.0
        %2636 = vmatpush2.msra.mxu0 0.0
        %2637 = vmatprep.subr.mxu0 0.0
        %2638 = vmatpush2.msra.mxu0 0.0
        %2639 = vmatprep.subr.mxu0 0.0
        %2640 = vmatpush2.msra.mxu0 0.0
        %2641 = vmatprep.subr.mxu0 0.0
        %2642 = vmatpush2.msra.mxu0 0.0
        %2643 = vmatprep.subr.mxu0 0.0
        %2644 = vmatpush2.msra.mxu0 0.0
        %2645 = vmatprep.subr.mxu0 0.0
        %2646 = vmatpush2.msra.mxu0 0.0
        %2647 = vmatprep.mubr.f32.mxu0 0.0
        %v2648 = vand.u32 %v2581, 4294901760
        %v2649 = vsub.f32 %v2581, %v2648
        %v2650 = vand.u32 %v2649, 4294901760
        %v2651 = vsub.f32 %v2649, %v2650
        %v2652 = vand.u32 %v2651, 4294901760
        %2653 = vmatmul.mubr.f32.gmra.mxu0 %v2652
        %v2654 = vpop.f32.mrf.mxu0
        %v2655 = vadd.f32 0.0, %v2654
        %v2656 = vpop.f32.mrf.mxu0
        %2657 = vdwg.mxu0
        %2658 = vmatprep.subr.mxu0 0.0
        %2659 = vmatpush1.msra.mxu0 0.0
        %2660 = vmatprep.subr.mxu0 0.0
        %2661 = vmatpush1.msra.mxu0 0.0
        %2662 = vmatprep.subr.mxu0 0.0
        %2663 = vmatpush1.msra.mxu0 0.0
        %2664 = vmatprep.subr.mxu0 0.0
        %2665 = vmatpush1.msra.mxu0 0.0
        %2666 = vmatprep.subr.mxu0 0.0
        %2667 = vmatpush1.msra.mxu0 0.0
        %2668 = vmatprep.subr.mxu0 0.0
        %2669 = vmatpush1.msra.mxu0 0.0
        %2670 = vmatprep.subr.mxu0 0.0
        %2671 = vmatpush1.msra.mxu0 0.0
        %2672 = vmatprep.subr.mxu0 0.0
        %2673 = vmatpush1.msra.mxu0 0.0
        %2674 = vmatprep.subr.mxu0 0.0
        %2675 = vmatpush1.msra.mxu0 0.0
        %2676 = vmatprep.subr.mxu0 0.0
        %2677 = vmatpush1.msra.mxu0 0.0
        %2678 = vmatprep.subr.mxu0 0.0
        %2679 = vmatpush1.msra.mxu0 0.0
        %2680 = vmatprep.subr.mxu0 0.0
        %2681 = vmatpush1.msra.mxu0 0.0
        %2682 = vmatprep.subr.mxu0 0.0
        %2683 = vmatpush1.msra.mxu0 0.0
        %2684 = vmatprep.subr.mxu0 0.0
        %2685 = vmatpush1.msra.mxu0 0.0
        %2686 = vmatprep.subr.mxu0 0.0
        %2687 = vmatpush1.msra.mxu0 0.0
        %2688 = vmatprep.subr.mxu0 0.0
        %2689 = vmatpush1.msra.mxu0 0.0
        %2690 = vmatprep.subr.mxu0 0.0
        %2691 = vmatpush2.msra.mxu0 0.0
        %2692 = vmatprep.subr.mxu0 0.0
        %2693 = vmatpush2.msra.mxu0 0.0
        %2694 = vmatprep.subr.mxu0 0.0
        %2695 = vmatpush2.msra.mxu0 0.0
        %2696 = vmatprep.subr.mxu0 0.0
        %2697 = vmatpush2.msra.mxu0 0.0
        %2698 = vmatprep.subr.mxu0 0.0
        %2699 = vmatpush2.msra.mxu0 0.0
        %2700 = vmatprep.subr.mxu0 0.0
        %2701 = vmatpush2.msra.mxu0 0.0
        %2702 = vmatprep.subr.mxu0 0.0
        %2703 = vmatpush2.msra.mxu0 0.0
        %2704 = vmatprep.subr.mxu0 0.0
        %2705 = vmatpush2.msra.mxu0 0.0
        %2706 = vmatprep.subr.mxu0 0.0
        %2707 = vmatpush2.msra.mxu0 0.0
        %2708 = vmatprep.subr.mxu0 0.0
        %2709 = vmatpush2.msra.mxu0 0.0
        %2710 = vmatprep.subr.mxu0 0.0
        %2711 = vmatpush2.msra.mxu0 0.0
        %2712 = vmatprep.subr.mxu0 0.0
        %2713 = vmatpush2.msra.mxu0 0.0
        %2714 = vmatprep.subr.mxu0 0.0
        %2715 = vmatpush2.msra.mxu0 0.0
        %2716 = vmatprep.subr.mxu0 0.0
        %2717 = vmatpush2.msra.mxu0 0.0
        %2718 = vmatprep.subr.mxu0 0.0
        %2719 = vmatpush2.msra.mxu0 0.0
        %2720 = vmatprep.subr.mxu0 0.0
        %2721 = vmatpush2.msra.mxu0 0.0
        %2722 = vmatprep.mubr.f32.mxu0 0.0
        %v2723 = vand.u32 %v2581, 4294901760
        %2724 = vmatmul.mubr.f32.gmra.mxu0 %v2723
        %v2725 = vpop.f32.mrf.mxu0
        %v2726 = vadd.f32 %v2655, %v2725
        %v2727 = vpop.f32.mrf.mxu0
        %2728 = vdwg.mxu0
        %2729 = vmatprep.subr.mxu0 0.0
        %2730 = vmatpush1.msra.mxu0 0.0
        %2731 = vmatprep.subr.mxu0 0.0
        %2732 = vmatpush1.msra.mxu0 0.0
        %2733 = vmatprep.subr.mxu0 0.0
        %2734 = vmatpush1.msra.mxu0 0.0
        %2735 = vmatprep.subr.mxu0 0.0
        %2736 = vmatpush1.msra.mxu0 0.0
        %2737 = vmatprep.subr.mxu0 0.0
        %2738 = vmatpush1.msra.mxu0 0.0
        %2739 = vmatprep.subr.mxu0 0.0
        %2740 = vmatpush1.msra.mxu0 0.0
        %2741 = vmatprep.subr.mxu0 0.0
        %2742 = vmatpush1.msra.mxu0 0.0
        %2743 = vmatprep.subr.mxu0 0.0
        %2744 = vmatpush1.msra.mxu0 0.0
        %2745 = vmatprep.subr.mxu0 0.0
        %2746 = vmatpush1.msra.mxu0 0.0
        %2747 = vmatprep.subr.mxu0 0.0
        %2748 = vmatpush1.msra.mxu0 0.0
        %2749 = vmatprep.subr.mxu0 0.0
        %2750 = vmatpush1.msra.mxu0 0.0
        %2751 = vmatprep.subr.mxu0 0.0
        %2752 = vmatpush1.msra.mxu0 0.0
        %2753 = vmatprep.subr.mxu0 0.0
        %2754 = vmatpush1.msra.mxu0 0.0
        %2755 = vmatprep.subr.mxu0 0.0
        %2756 = vmatpush1.msra.mxu0 0.0
        %2757 = vmatprep.subr.mxu0 0.0
        %2758 = vmatpush1.msra.mxu0 0.0
        %2759 = vmatprep.subr.mxu0 0.0
        %2760 = vmatpush1.msra.mxu0 0.0
        %2761 = vmatprep.subr.mxu0 0.0
        %2762 = vmatpush2.msra.mxu0 0.0
        %2763 = vmatprep.subr.mxu0 0.0
        %2764 = vmatpush2.msra.mxu0 0.0
        %2765 = vmatprep.subr.mxu0 0.0
        %2766 = vmatpush2.msra.mxu0 0.0
        %2767 = vmatprep.subr.mxu0 0.0
        %2768 = vmatpush2.msra.mxu0 0.0
        %2769 = vmatprep.subr.mxu0 0.0
        %2770 = vmatpush2.msra.mxu0 0.0
        %2771 = vmatprep.subr.mxu0 0.0
        %2772 = vmatpush2.msra.mxu0 0.0
        %2773 = vmatprep.subr.mxu0 0.0
        %2774 = vmatpush2.msra.mxu0 0.0
        %2775 = vmatprep.subr.mxu0 0.0
        %2776 = vmatpush2.msra.mxu0 0.0
        %2777 = vmatprep.subr.mxu0 0.0
        %2778 = vmatpush2.msra.mxu0 0.0
        %2779 = vmatprep.subr.mxu0 0.0
        %2780 = vmatpush2.msra.mxu0 0.0
        %2781 = vmatprep.subr.mxu0 0.0
        %2782 = vmatpush2.msra.mxu0 0.0
        %2783 = vmatprep.subr.mxu0 0.0
        %2784 = vmatpush2.msra.mxu0 0.0
        %2785 = vmatprep.subr.mxu0 0.0
        %2786 = vmatpush2.msra.mxu0 0.0
        %2787 = vmatprep.subr.mxu0 0.0
        %2788 = vmatpush2.msra.mxu0 0.0
        %2789 = vmatprep.subr.mxu0 0.0
        %2790 = vmatpush2.msra.mxu0 0.0
        %2791 = vmatprep.subr.mxu0 0.0
        %2792 = vmatpush2.msra.mxu0 0.0
        %2793 = vmatprep.mubr.f32.mxu0 0.0
        %v2794 = vand.u32 %v2581, 4294901760
        %v2795 = vsub.f32 %v2581, %v2794
        %2796 = vmatmul.mubr.f32.gmra.mxu0 %v2795
        %v2797 = vpop.f32.mrf.mxu0
        %v2798 = vadd.f32 %v2726, %v2797
        %v2799 = vpop.f32.mrf.mxu0
        %2800 = vdwg.mxu0
        %2801 = vmatprep.subr.mxu0 0.0
        %2802 = vmatpush1.msra.mxu0 0.0
        %2803 = vmatprep.subr.mxu0 0.0
        %2804 = vmatpush1.msra.mxu0 0.0
        %2805 = vmatprep.subr.mxu0 0.0
        %2806 = vmatpush1.msra.mxu0 0.0
        %2807 = vmatprep.subr.mxu0 0.0
        %2808 = vmatpush1.msra.mxu0 0.0
        %2809 = vmatprep.subr.mxu0 0.0
        %2810 = vmatpush1.msra.mxu0 0.0
        %2811 = vmatprep.subr.mxu0 0.0
        %2812 = vmatpush1.msra.mxu0 0.0
        %2813 = vmatprep.subr.mxu0 0.0
        %2814 = vmatpush1.msra.mxu0 0.0
        %2815 = vmatprep.subr.mxu0 0.0
        %2816 = vmatpush1.msra.mxu0 0.0
        %2817 = vmatprep.subr.mxu0 0.0
        %2818 = vmatpush1.msra.mxu0 0.0
        %2819 = vmatprep.subr.mxu0 0.0
        %2820 = vmatpush1.msra.mxu0 0.0
        %2821 = vmatprep.subr.mxu0 0.0
        %2822 = vmatpush1.msra.mxu0 0.0
        %2823 = vmatprep.subr.mxu0 0.0
        %2824 = vmatpush1.msra.mxu0 0.0
        %2825 = vmatprep.subr.mxu0 0.0
        %2826 = vmatpush1.msra.mxu0 1.0
        %2827 = vmatprep.subr.mxu0 0.0
        %2828 = vmatpush1.msra.mxu0 1.0
        %2829 = vmatprep.subr.mxu0 0.0
        %2830 = vmatpush1.msra.mxu0 1.0
        %2831 = vmatprep.subr.mxu0 0.0
        %2832 = vmatpush1.msra.mxu0 1.0
        %2833 = vmatprep.subr.mxu0 0.0
        %2834 = vmatpush2.msra.mxu0 0.0
        %2835 = vmatprep.subr.mxu0 0.0
        %2836 = vmatpush2.msra.mxu0 0.0
        %2837 = vmatprep.subr.mxu0 0.0
        %2838 = vmatpush2.msra.mxu0 0.0
        %2839 = vmatprep.subr.mxu0 0.0
        %2840 = vmatpush2.msra.mxu0 0.0
        %2841 = vmatprep.subr.mxu0 0.0
        %2842 = vmatpush2.msra.mxu0 0.0
        %2843 = vmatprep.subr.mxu0 0.0
        %2844 = vmatpush2.msra.mxu0 0.0
        %2845 = vmatprep.subr.mxu0 0.0
        %2846 = vmatpush2.msra.mxu0 0.0
        %2847 = vmatprep.subr.mxu0 0.0
        %2848 = vmatpush2.msra.mxu0 0.0
        %2849 = vmatprep.subr.mxu0 0.0
        %2850 = vmatpush2.msra.mxu0 0.0
        %2851 = vmatprep.subr.mxu0 0.0
        %2852 = vmatpush2.msra.mxu0 0.0
        %2853 = vmatprep.subr.mxu0 0.0
        %2854 = vmatpush2.msra.mxu0 0.0
        %2855 = vmatprep.subr.mxu0 0.0
        %2856 = vmatpush2.msra.mxu0 0.0
        %2857 = vmatprep.subr.mxu0 0.0
        %2858 = vmatpush2.msra.mxu0 0.0
        %2859 = vmatprep.subr.mxu0 0.0
        %2860 = vmatpush2.msra.mxu0 0.0
        %2861 = vmatprep.subr.mxu0 0.0
        %2862 = vmatpush2.msra.mxu0 0.0
        %2863 = vmatprep.subr.mxu0 0.0
        %2864 = vmatpush2.msra.mxu0 0.0
        %2865 = vmatprep.mubr.f32.mxu0 0.0
        %v2866 = vand.u32 %v2581, 4294901760
        %v2867 = vsub.f32 %v2581, %v2866
        %v2868 = vand.u32 %v2867, 4294901760
        %2869 = vmatmul.mubr.f32.gmra.mxu0 %v2868
        %v2870 = vpop.f32.mrf.mxu0
        %v2871 = vadd.f32 %v2798, %v2870
        %v2872 = vpop.f32.mrf.mxu0
        %2873 = vdwg.mxu0
        %2874 = vmatprep.subr.mxu0 0.0
        %2875 = vmatpush1.msra.mxu0 0.0
        %2876 = vmatprep.subr.mxu0 0.0
        %2877 = vmatpush1.msra.mxu0 0.0
        %2878 = vmatprep.subr.mxu0 0.0
        %2879 = vmatpush1.msra.mxu0 0.0
        %2880 = vmatprep.subr.mxu0 0.0
        %2881 = vmatpush1.msra.mxu0 0.0
        %2882 = vmatprep.subr.mxu0 0.0
        %2883 = vmatpush1.msra.mxu0 0.0
        %2884 = vmatprep.subr.mxu0 0.0
        %2885 = vmatpush1.msra.mxu0 0.0
        %2886 = vmatprep.subr.mxu0 0.0
        %2887 = vmatpush1.msra.mxu0 0.0
        %2888 = vmatprep.subr.mxu0 0.0
        %2889 = vmatpush1.msra.mxu0 0.0
        %2890 = vmatprep.subr.mxu0 0.0
        %2891 = vmatpush1.msra.mxu0 0.0
        %2892 = vmatprep.subr.mxu0 0.0
        %2893 = vmatpush1.msra.mxu0 0.0
        %2894 = vmatprep.subr.mxu0 0.0
        %2895 = vmatpush1.msra.mxu0 0.0
        %2896 = vmatprep.subr.mxu0 0.0
        %2897 = vmatpush1.msra.mxu0 0.0
        %2898 = vmatprep.subr.mxu0 0.0
        %2899 = vmatpush1.msra.mxu0 0.0
        %2900 = vmatprep.subr.mxu0 0.0
        %2901 = vmatpush1.msra.mxu0 0.0
        %2902 = vmatprep.subr.mxu0 0.0
        %2903 = vmatpush1.msra.mxu0 0.0
        %2904 = vmatprep.subr.mxu0 0.0
        %2905 = vmatpush1.msra.mxu0 0.0
        %2906 = vmatprep.subr.mxu0 0.0
        %2907 = vmatpush2.msra.mxu0 0.0
        %2908 = vmatprep.subr.mxu0 0.0
        %2909 = vmatpush2.msra.mxu0 0.0
        %2910 = vmatprep.subr.mxu0 0.0
        %2911 = vmatpush2.msra.mxu0 0.0
        %2912 = vmatprep.subr.mxu0 0.0
        %2913 = vmatpush2.msra.mxu0 0.0
        %2914 = vmatprep.subr.mxu0 0.0
        %2915 = vmatpush2.msra.mxu0 0.0
        %2916 = vmatprep.subr.mxu0 0.0
        %2917 = vmatpush2.msra.mxu0 0.0
        %2918 = vmatprep.subr.mxu0 0.0
        %2919 = vmatpush2.msra.mxu0 0.0
        %2920 = vmatprep.subr.mxu0 0.0
        %2921 = vmatpush2.msra.mxu0 0.0
        %2922 = vmatprep.subr.mxu0 0.0
        %2923 = vmatpush2.msra.mxu0 0.0
        %2924 = vmatprep.subr.mxu0 0.0
        %2925 = vmatpush2.msra.mxu0 0.0
        %2926 = vmatprep.subr.mxu0 0.0
        %2927 = vmatpush2.msra.mxu0 0.0
        %2928 = vmatprep.subr.mxu0 0.0
        %2929 = vmatpush2.msra.mxu0 0.0
        %2930 = vmatprep.subr.mxu0 0.0
        %2931 = vmatpush2.msra.mxu0 0.0
        %2932 = vmatprep.subr.mxu0 0.0
        %2933 = vmatpush2.msra.mxu0 0.0
        %2934 = vmatprep.subr.mxu0 0.0
        %2935 = vmatpush2.msra.mxu0 0.0
        %2936 = vmatprep.subr.mxu0 0.0
        %2937 = vmatpush2.msra.mxu0 0.0
        %2938 = vmatprep.mubr.f32.mxu0 0.0
        %v2939 = vand.u32 %v2581, 4294901760
        %2940 = vmatmul.mubr.f32.gmra.mxu0 %v2939
        %v2941 = vpop.f32.mrf.mxu0
        %v2942 = vadd.f32 %v2871, %v2941
        %v2943 = vpop.f32.mrf.mxu0
        %2944 = vdwg.mxu0
        %2945 = vmatprep.subr.mxu0 0.0
        %2946 = vmatpush1.msra.mxu0 0.0
        %2947 = vmatprep.subr.mxu0 0.0
        %2948 = vmatpush1.msra.mxu0 0.0
        %2949 = vmatprep.subr.mxu0 0.0
        %2950 = vmatpush1.msra.mxu0 0.0
        %2951 = vmatprep.subr.mxu0 0.0
        %2952 = vmatpush1.msra.mxu0 0.0
        %2953 = vmatprep.subr.mxu0 0.0
        %2954 = vmatpush1.msra.mxu0 0.0
        %2955 = vmatprep.subr.mxu0 0.0
        %2956 = vmatpush1.msra.mxu0 0.0
        %2957 = vmatprep.subr.mxu0 0.0
        %2958 = vmatpush1.msra.mxu0 0.0
        %2959 = vmatprep.subr.mxu0 0.0
        %2960 = vmatpush1.msra.mxu0 0.0
        %2961 = vmatprep.subr.mxu0 0.0
        %2962 = vmatpush1.msra.mxu0 0.0
        %2963 = vmatprep.subr.mxu0 0.0
        %2964 = vmatpush1.msra.mxu0 0.0
        %2965 = vmatprep.subr.mxu0 0.0
        %2966 = vmatpush1.msra.mxu0 0.0
        %2967 = vmatprep.subr.mxu0 0.0
        %2968 = vmatpush1.msra.mxu0 0.0
        %2969 = vmatprep.subr.mxu0 0.0
        %2970 = vmatpush1.msra.mxu0 1.0
        %2971 = vmatprep.subr.mxu0 0.0
        %2972 = vmatpush1.msra.mxu0 1.0
        %2973 = vmatprep.subr.mxu0 0.0
        %2974 = vmatpush1.msra.mxu0 1.0
        %2975 = vmatprep.subr.mxu0 0.0
        %2976 = vmatpush1.msra.mxu0 1.0
        %2977 = vmatprep.subr.mxu0 0.0
        %2978 = vmatpush2.msra.mxu0 0.0
        %2979 = vmatprep.subr.mxu0 0.0
        %2980 = vmatpush2.msra.mxu0 0.0
        %2981 = vmatprep.subr.mxu0 0.0
        %2982 = vmatpush2.msra.mxu0 0.0
        %2983 = vmatprep.subr.mxu0 0.0
        %2984 = vmatpush2.msra.mxu0 0.0
        %2985 = vmatprep.subr.mxu0 0.0
        %2986 = vmatpush2.msra.mxu0 0.0
        %2987 = vmatprep.subr.mxu0 0.0
        %2988 = vmatpush2.msra.mxu0 0.0
        %2989 = vmatprep.subr.mxu0 0.0
        %2990 = vmatpush2.msra.mxu0 0.0
        %2991 = vmatprep.subr.mxu0 0.0
        %2992 = vmatpush2.msra.mxu0 0.0
        %2993 = vmatprep.subr.mxu0 0.0
        %2994 = vmatpush2.msra.mxu0 0.0
        %2995 = vmatprep.subr.mxu0 0.0
        %2996 = vmatpush2.msra.mxu0 0.0
        %2997 = vmatprep.subr.mxu0 0.0
        %2998 = vmatpush2.msra.mxu0 0.0
        %2999 = vmatprep.subr.mxu0 0.0
        %3000 = vmatpush2.msra.mxu0 0.0
        %3001 = vmatprep.subr.mxu0 0.0
        %3002 = vmatpush2.msra.mxu0 0.0
        %3003 = vmatprep.subr.mxu0 0.0
        %3004 = vmatpush2.msra.mxu0 0.0
        %3005 = vmatprep.subr.mxu0 0.0
        %3006 = vmatpush2.msra.mxu0 0.0
        %3007 = vmatprep.subr.mxu0 0.0
        %3008 = vmatpush2.msra.mxu0 0.0
        %3009 = vmatprep.mubr.f32.mxu0 0.0
        %v3010 = vand.u32 %v2581, 4294901760
        %3011 = vmatmul.mubr.f32.gmra.mxu0 %v3010
        %v3012 = vpop.f32.mrf.mxu0
        %v3013 = vadd.f32 %v2942, %v3012
        %v3014 = vpop.f32.mrf.mxu0
        %3015 = vdwg.mxu0
        %v3016 = vsub.f32 %v332, %v3013
        %v3017 = vadd.f32 %v3016, %v2131
        %v3018 = vadd.f32 %v3017, %v2574
        %3019 = vrot.lane.b32.xlu0 %v333, 126
        %v3020 = vpop.permute.xlu0 %3019
        %v3022 = vmul.f32 %v3018, %v3020
        %v3023 = vadd.f32 %v2123, %v3022
        %vm3024 = vcmask 7168
        %v3025 = vsel %vm3024, %v3023, 0.0
        %3026 = vadd.xlane.f32.xlu0 %v3025
        %v3027 = vpop.xlane.xlu0 %3026
        %v3028 = vrot.slane %v3027, 4
        %v3029 = vadd.f32 %v3027, %v3028
        %v3030 = vrot.slane %v3029, 2
        %v3031 = vadd.f32 %v3029, %v3030
        %v3032 = vrot.slane %v3031, 1
        %v3033 = vadd.f32 %v3031, %v3032
        %s3034 = vtos %v3033
        %v3035 = vstv %s3034
        %vm3036 = vcmask 0
        %3037 = vst.msk [vmem:[%s308] sm:$0x1] %vm3036, %v3035
        %p3038 = scmp.lt.s32.totalorder %s22, 0
        %s3039 = scalar_select %p3038, %s22, 0
        %p3040 = scmp.lt.s32.totalorder %s23, 1
        %s3041 = scalar_select %p3040, %s23, 1
        %s3042 = smul.addr %s3039, 2
        %s3043 = sadd.s32 %s3041, %s3042
        %s3044 = scalar_lea.vmem %s4, %s3043
        // Predicated region
        $region41: #{tpu_custom_call.1} parent=35 // pred_check
          %p3045 = pneg %p160
        $region42: #{tpu_custom_call.1} parent=35 // pred_check_branch
          %3047 = sbr.rel (%p3045) target = $region44
        $region43: #{tpu_custom_call.1} parent=35 // pred_region
          _
        $region44: #{tpu_custom_call.1} parent=35 // pred_fallthru
          _
      $region36: #{tpu_custom_call.1} parent=5 // pred_fallthru
        _
      %p3048 = scmp.le.s32.totalorder 2, %s13
      // Predicated region
      $region45: #{tpu_custom_call.1} parent=5 // pred_check
        %p3049 = pneg %p3048
      $region46: #{tpu_custom_call.1} parent=5 // pred_check_branch
        %3051 = sbr.rel (%p3049) target = $region48
      $region47: #{tpu_custom_call.1} parent=5 // pred_region
        %s3052 = ssub.s32 %s13, 2
        // Predicated region
        $region49: #{tpu_custom_call.1} parent=47 // pred_check
          %p3053 = pneg %p166
        $region50: #{tpu_custom_call.1} parent=47 // pred_check_branch
          %3055 = sbr.rel (%p3053) target = $region52
        $region51: #{tpu_custom_call.1} parent=47 // pred_region
          %p3056 = scmp.lt.s32.totalorder %s24, 0
          %s3057 = scalar_select %p3056, %s24, 0
          %p3058 = scmp.lt.s32.totalorder %s25, 1
          %s3059 = scalar_select %p3058, %s25, 1
          %s3060 = smul.addr %s3057, 2
          %s3061 = sadd.s32 %s3059, %s3060
          %s3062 = scalar_lea.vmem %s4, %s3061
        $region52: #{tpu_custom_call.1} parent=47 // pred_fallthru
          _
      $region48: #{tpu_custom_call.1} parent=5 // pred_fallthru
        _
    $region6: #{tpu_custom_call.1} parent=1 // loop_footer
      %s17 = sadd.s32 1, %s13
    $region7: #{tpu_custom_call.1} parent=1 // loop_footer_branch
      %12 = sbr.rel target = $region3
    $region8: #{tpu_custom_call.1} parent=1 // loop_exit
      _
    %3063 = vsyncpa [#allocation3], 1
    %s3064 = scalar_lea.sflag [#allocation3], 1
    %3065 = vsyncpa %s3064, 1

</llo_original>
